<compile_context>
chip_gen: v7x
topology: tpu7x:2x2x1
jax: 0.10.0
libtpu: 0.0.40
codegen_flags: <defaults>
</compile_context>

<pallas_src>
import math
import functools

import jax
import jax.numpy as jnp
from jax.experimental import pallas as pl
from jax.experimental.pallas import tpu as pltpu


# ----------------------------- Pallas kernel --------------------------------

def _encoder_block_kernel(num_heads, eps, tq,
                          x_ref, mask_ref,
                          wqkv_ref, bqkv_ref,
                          wo_ref, bo_ref,
                          w1_ref, b1_ref, w2_ref, b2_ref,
                          ln_ref,          # SMEM (2, 2): [[alpha1, bias1], [alpha2, bias2]]
                          o_ref,
                          qkv_sc):         # VMEM (3, H, S, dk) bf16: cached q*scale, k, v
    f32 = jnp.float32
    bf16 = jnp.bfloat16
    S = x_ref.shape[1]
    D = x_ref.shape[2]
    H = num_heads
    dk = D // H
    scale = 1.0 / math.sqrt(dk)

    alpha1 = ln_ref[0, 0]
    bias1 = ln_ref[0, 1]
    alpha2 = ln_ref[1, 0]
    bias2 = ln_ref[1, 1]

    def layer_norm(v, alpha, bias):
        mean = jnp.mean(v, axis=-1, keepdims=True)
        diff = v - mean
        # torch.std default is unbiased (divide by N-1); module divides by (std + eps).
        var = jnp.sum(diff * diff, axis=-1, keepdims=True) * (1.0 / (D - 1))
        # Exact divide: operand is (rows, 1); approx reciprocal saved nothing here.
        return alpha * diff / (jnp.sqrt(var) + eps) + bias

    qi = pl.program_id(1)

    # ---- QKV projection + LayerNorm1 of the FULL sequence: once per batch element ----
    @pl.when(qi == 0)
    def _():
        x_full = x_ref[0].astype(f32)                    # (S, D)
        xn_full = layer_norm(x_full, alpha1, bias1)
        qkv = jnp.dot(xn_full.astype(bf16), wqkv_ref[...],
                      preferred_element_type=f32) + bqkv_ref[...]      # (S, 3D)
        q = qkv[:, :D] * scale                           # fold 1/sqrt(dk) into cached q
        k = qkv[:, D:2 * D]
        v = qkv[:, 2 * D:]
        # head-major (H, S, dk) cache, bf16 (MXU operand dtype); once per batch.
        qkv_sc[0] = jnp.stack([q[:, h * dk:(h + 1) * dk] for h in range(H)],
                              axis=0).astype(bf16)
        qkv_sc[1] = jnp.stack([k[:, h * dk:(h + 1) * dk] for h in range(H)],
                              axis=0).astype(bf16)
        qkv_sc[2] = jnp.stack([v[:, h * dk:(h + 1) * dk] for h in range(H)],
                              axis=0).astype(bf16)

    # ---- attention for this q-tile (reads cached Q/K/V) ----
    row0 = pl.multiple_of(qi * tq, tq)
    x_q = x_ref[0, pl.ds(row0, tq), :].astype(f32)       # residual rows (tq, D)

    q3 = qkv_sc[0, :, pl.ds(row0, tq), :]                # (H, tq, dk) bf16, pre-scaled
    k3 = qkv_sc[1]                                       # (H, S, dk) bf16
    v3 = qkv_sc[2]                                       # (H, S, dk) bf16

    # Additive mask bias computed once (not per head).  Equivalent to masked_fill(-1e9)
    # for ordinary score magnitudes.
    neg = jnp.where(mask_ref[0].astype(jnp.int32) == 0, -1.0e9, 0.0)   # (tq, S) f32

    scores = jnp.einsum('hqd,hkd->hqk', q3, k3,
                        preferred_element_type=f32) + neg[None, :, :]  # (H, tq, S)
    m = jnp.max(scores, axis=-1, keepdims=True)
    p = jnp.exp(scores - m)
    l = jnp.sum(p, axis=-1, keepdims=True)               # (H, tq, 1)
    ctx = jnp.einsum('hqk,hkd->hqd', p.astype(bf16), v3,
                     preferred_element_type=f32)         # (H, tq, dk)
    # Normalize AFTER the PV matmul: S/dk-fold fewer multiplies; exact reciprocal.
    ctx = ctx * (1.0 / l)
    attn = jnp.concatenate([ctx[h] for h in range(H)], axis=-1)        # (tq, D)

    attn = jnp.dot(attn.astype(bf16), wo_ref[...],
                   preferred_element_type=f32) + bo_ref[...]
    x1 = x_q + attn                                      # (tq, D)

    # ---- residual connection 2: feed-forward on LayerNorm2(x1) ----
    xn2 = layer_norm(x1, alpha2, bias2)
    hdn = jnp.dot(xn2.astype(bf16), w1_ref[...],
                  preferred_element_type=f32) + b1_ref[...]
    hdn = jnp.maximum(hdn, 0.0)
    ff = jnp.dot(hdn.astype(bf16), w2_ref[...],
                 preferred_element_type=f32) + b2_ref[...]

    o_ref[0] = (x1 + ff).astype(o_ref.dtype)


# --------------------------- setup-time packing ------------------------------

def pack_params(params):
    """One-time weight packing / bf16 cast (do NOT redo this per forward call)."""
    bf16 = jnp.bfloat16
    return dict(
        wqkv=jnp.concatenate([params["wq"], params["wk"], params["wv"]],
                             axis=1).astype(bf16),
        bqkv=jnp.concatenate([params["bq"], params["bk"], params["bv"]], axis=1),
        wo=params["wo"].astype(bf16), bo=params["bo"],
        w1=params["w1"].astype(bf16), b1=params["b1"],
        w2=params["w2"].astype(bf16), b2=params["b2"],
        ln=params["ln"],
    )


def _vmem_limit_bytes(S, D, d_ff, tq, H, weight_buffers):
    """VMEM budget derived from block sizes, capped at 85% of physical VMEM."""
    f32b, bf16b = 4, 2
    weights = weight_buffers * bf16b * (3 * D * D + D * D + D * d_ff + d_ff * D)
    biases = weight_buffers * f32b * (3 * D + D + d_ff + D)
    x_blk = 2 * S * D * f32b                       # double-buffered activation block
    mask_blk = 2 * tq * S                          # int8, double-buffered
    out_blk = 2 * tq * D * f32b
    scratch = 3 * S * D * bf16b                    # cached Q/K/V
    temps = 3 * H * tq * S * f32b + tq * d_ff * f32b + 3 * S * D * f32b
    needed = weights + biases + x_blk + mask_blk + out_blk + scratch + temps
    try:
        phys = pltpu.get_tpu_info().vmem_capacity_bytes
    except Exception:
        phys = 64 * 1024 * 1024                    # conservative (v7x-sized) fallback
    limit = max(needed + (8 << 20), 32 << 20)
    return int(min(limit, int(phys * 0.85)))


# ------------------------------- wrapper --------------------------------------

def encoder_block_pallas(x, mask, packed, *, num_heads, eps=1e-6, tq=None):
    """x: (B, S, D) f32; mask: (B, S, S) (0 => masked); packed = pack_params(...)."""
    B, S, D = x.shape
    H = num_heads
    dk = D // H
    d_ff = packed["w1"].shape[1]

    if tq is None:
        # Cap the materialized (H, tq, S) scores tensor for long sequences; keep tq
        # MXU / int8-mask aligned.  Small S keeps a single whole-sequence tile.
        tq = S
        if S > 256:
            for cand in (256, 128):
                if S % cand == 0:
                    tq = cand
                    break
    assert S % tq == 0
    nq = S // tq

    mask_i8 = mask if mask.dtype == jnp.int8 else (mask != 0).astype(jnp.int8)

    args = (x, mask_i8, packed["wqkv"], packed["bqkv"], packed["wo"], packed["bo"],
            packed["w1"], packed["b1"], packed["w2"], packed["b2"], packed["ln"])

    def build(weight_mode, weight_buffers):
        def const(shape):
            # Constant index_map over the grid -> single-buffer (no pipelining benefit).
            return pl.BlockSpec(shape, lambda b, qi: (0,) * len(shape),
                                pipeline_mode=weight_mode)

        in_specs = [
            pl.BlockSpec((1, S, D), lambda b, qi: (b, 0, 0)),    # x: resident over q-tiles
            pl.BlockSpec((1, tq, S), lambda b, qi: (b, qi, 0)),  # mask tile (int8)
            const((D, 3 * D)), const((1, 3 * D)),                # wqkv (bf16), bqkv (f32)
            const((D, D)), const((1, D)),                        # wo (bf16), bo
            const((D, d_ff)), const((1, d_ff)),                  # w1 (bf16), b1
            const((d_ff, D)), const((1, D)),                     # w2 (bf16), b2
            pl.BlockSpec(memory_space=pltpu.MemorySpace.SMEM),   # layernorm scalars
        ]
        kernel = functools.partial(_encoder_block_kernel, num_heads, eps, tq)
        return pl.pallas_call(
            kernel,
            out_shape=jax.ShapeDtypeStruct((B, S, D), x.dtype),
            grid=(B, nq),
            in_specs=in_specs,
            out_specs=pl.BlockSpec((1, tq, D), lambda b, qi: (b, qi, 0)),
            scratch_shapes=[pltpu.VMEM((3, H, S, dk), jnp.bfloat16)],
            compiler_params=pltpu.CompilerParams(
                # qi carries the per-batch Q/K/V cache in scratch -> "arbitrary".
                dimension_semantics=("parallel", "arbitrary"),
                vmem_limit_bytes=_vmem_limit_bytes(S, D, d_ff, tq, H, weight_buffers)),
        )

    try:
        return build(pl.Buffered(1), 1)(*args)
    except Exception:
        # Fallback: default double-buffering if Buffered(1) is unsupported here.
        return build(None, 2)(*args)


# ----------------------------- pure-JAX reference ----------------------------

def encoder_block_ref(x, mask, params, *, num_heads, eps=1e-6):
    B, S, D = x.shape
    d_k = D // num_heads

    def layer_norm(v, alpha, bias):
        mean = jnp.mean(v, axis=-1, keepdims=True)
        std = jnp.std(v, axis=-1, keepdims=True, ddof=1)
        return alpha * (v - mean) / (std + eps) + bias

    xn = layer_norm(x, params["ln"][0, 0], params["ln"][0, 1])
    q = xn @ params["wq"] + params["bq"]
    k = xn @ params["wk"] + params["bk"]
    v = xn @ params["wv"] + params["bv"]
    q = q.reshape(B, S, num_heads, d_k).transpose(0, 2, 1, 3)
    k = k.reshape(B, S, num_heads, d_k).transpose(0, 2, 1, 3)
    v = v.reshape(B, S, num_heads, d_k).transpose(0, 2, 1, 3)
    scores = jnp.einsum("bhqd,bhkd->bhqk", q, k) / math.sqrt(d_k)
    scores = jnp.where(mask[:, None, :, :] == 0, -1.0e9, scores)
    p = jax.nn.softmax(scores, axis=-1)
    attn = jnp.einsum("bhqk,bhkd->bhqd", p, v).transpose(0, 2, 1, 3).reshape(B, S, D)
    attn = attn @ params["wo"] + params["bo"]
    x1 = x + attn

    xn2 = layer_norm(x1, params["ln"][1, 0], params["ln"][1, 1])
    ff = jnp.maximum(xn2 @ params["w1"] + params["b1"], 0.0) @ params["w2"] + params["b2"]
    return x1 + ff


# ----------------------------------- main ------------------------------------

if __name__ == "__main__":
    # NOTE: toy shapes for the check; real runs should use S, D multiples of 128
    # (256 on v6e/v7x) so vregs / MXU tiles are fully used (lane-dense stores).
    B, S, D_MODEL, NUM_HEADS, D_FF = 2, 8, 32, 4, 64

    key = jax.random.PRNGKey(0)
    keys = jax.random.split(key, 16)

    def linear_init(kw, kb, fan_in, fan_out):
        # PyTorch nn.Linear default: U(-1/sqrt(fan_in), 1/sqrt(fan_in))
        bound = 1.0 / math.sqrt(fan_in)
        w = jax.random.uniform(kw, (fan_in, fan_out), jnp.float32, -bound, bound)
        b = jax.random.uniform(kb, (1, fan_out), jnp.float32, -bound, bound)
        return w, b

    wq, bq = linear_init(keys[0], keys[1], D_MODEL, D_MODEL)
    wk, bk = linear_init(keys[2], keys[3], D_MODEL, D_MODEL)
    wv, bv = linear_init(keys[4], keys[5], D_MODEL, D_MODEL)
    wo, bo = linear_init(keys[6], keys[7], D_MODEL, D_MODEL)
    w1, b1 = linear_init(keys[8], keys[9], D_MODEL, D_FF)
    w2, b2 = linear_init(keys[10], keys[11], D_FF, D_MODEL)
    # LayerNormalization init: alpha = 1, bias = 0 (scalars), two instances.
    ln = jnp.array([[1.0, 0.0], [1.0, 0.0]], dtype=jnp.float32)

    params = dict(wq=wq, bq=bq, wk=wk, bk=bk, wv=wv, bv=bv, wo=wo, bo=bo,
                  w1=w1, b1=b1, w2=w2, b2=b2, ln=ln)
    packed = pack_params(params)        # one-time packing / bf16 cast

    x = jax.random.normal(keys[12], (B, S, D_MODEL), jnp.float32)
    # causal-style mask (0 => masked), broadcast identically across heads
    causal = (jnp.arange(S)[:, None] >= jnp.arange(S)[None, :]).astype(jnp.float32)
    mask = jnp.broadcast_to(causal, (B, S, S))
    mask_i8 = (mask != 0).astype(jnp.int8)   # one-time int8 conversion (setup time)

    out = encoder_block_pallas(x, mask_i8, packed, num_heads=NUM_HEADS)
    out = jax.block_until_ready(out)

    ref = encoder_block_ref(x, mask, params, num_heads=NUM_HEADS)
    # Remaining tolerance comes from bf16 MXU operands (intentional); LayerNorm /
    # softmax reciprocals are now exact.
    if not jnp.allclose(out, ref, atol=5e-2, rtol=5e-2):
        err = float(jnp.max(jnp.abs(out - ref)))
        raise AssertionError(f"Pallas kernel does not match reference (max abs err {err})")

    print("KERNEL_OK")
</pallas_src>

<mosaic_0001>
module attributes {stable_mosaic.version = 11 : i64} {
  func.func @_encoder_block_kernel(%arg0: i32, %arg1: i32, %arg2: memref<1x8x32xf32, #tpu.memory_space<vmem>>, %arg3: memref<1x8x8xi8, #tpu.memory_space<vmem>>, %arg4: memref<32x96xbf16, #tpu.memory_space<vmem>>, %arg5: memref<1x96xf32, #tpu.memory_space<vmem>>, %arg6: memref<32x32xbf16, #tpu.memory_space<vmem>>, %arg7: memref<1x32xf32, #tpu.memory_space<vmem>>, %arg8: memref<32x64xbf16, #tpu.memory_space<vmem>>, %arg9: memref<1x64xf32, #tpu.memory_space<vmem>>, %arg10: memref<64x32xbf16, #tpu.memory_space<vmem>>, %arg11: memref<1x32xf32, #tpu.memory_space<vmem>>, %arg12: memref<2x2xf32, #tpu.memory_space<smem>>, %arg13: memref<1x8x32xf32, #tpu.memory_space<vmem>>, %arg14: memref<3x4x8x8xbf16, #tpu.memory_space<vmem>>) attributes {dimension_semantics = [#tpu.dimension_semantics<parallel>, #tpu.dimension_semantics<arbitrary>], iteration_bounds = array<i64: 2, 1>, scalar_prefetch = 0 : i64, scratch_operands = 1 : i64, tpu.core_type = #tpu.core_type<tc>, window_params = [{transform_indices = @transform_0, window_bounds = array<i64: 1, 8, 32>}, {transform_indices = @transform_1, window_bounds = array<i64: 1, 8, 8>}, {pipeline_mode = #tpu.pipeline_mode<synchronous>, transform_indices = @transform_2, window_bounds = array<i64: 32, 96>}, {pipeline_mode = #tpu.pipeline_mode<synchronous>, transform_indices = @transform_3, window_bounds = array<i64: 1, 96>}, {pipeline_mode = #tpu.pipeline_mode<synchronous>, transform_indices = @transform_4, window_bounds = array<i64: 32, 32>}, {pipeline_mode = #tpu.pipeline_mode<synchronous>, transform_indices = @transform_5, window_bounds = array<i64: 1, 32>}, {pipeline_mode = #tpu.pipeline_mode<synchronous>, transform_indices = @transform_6, window_bounds = array<i64: 32, 64>}, {pipeline_mode = #tpu.pipeline_mode<synchronous>, transform_indices = @transform_7, window_bounds = array<i64: 1, 64>}, {pipeline_mode = #tpu.pipeline_mode<synchronous>, transform_indices = @transform_8, window_bounds = array<i64: 64, 32>}, {pipeline_mode = #tpu.pipeline_mode<synchronous>, transform_indices = @transform_9, window_bounds = array<i64: 1, 32>}, {transform_indices = @transform_10, window_bounds = array<i64: 2, 2>}, {transform_indices = @transform_11, window_bounds = array<i64: 1, 8, 32>}]} {
    %c0 = arith.constant 0 : index
    %c0_0 = arith.constant 0 : index
    %0 = memref.load %arg12[%c0, %c0_0] : memref<2x2xf32, #tpu.memory_space<smem>>
    %c0_1 = arith.constant 0 : index
    %c1 = arith.constant 1 : index
    %1 = memref.load %arg12[%c0_1, %c1] : memref<2x2xf32, #tpu.memory_space<smem>>
    %c1_2 = arith.constant 1 : index
    %c0_3 = arith.constant 0 : index
    %2 = memref.load %arg12[%c1_2, %c0_3] : memref<2x2xf32, #tpu.memory_space<smem>>
    %c1_4 = arith.constant 1 : index
    %c1_5 = arith.constant 1 : index
    %3 = memref.load %arg12[%c1_4, %c1_5] : memref<2x2xf32, #tpu.memory_space<smem>>
    %c0_i32 = arith.constant 0 : i32
    %4 = arith.cmpi eq, %arg1, %c0_i32 : i32
    %5 = arith.extui %4 : i1 to i32
    %c0_i32_6 = arith.constant 0 : i32
    %6 = arith.cmpi ne, %5, %c0_i32_6 : i32
    scf.if %6 {
      %c0_53 = arith.constant 0 : index
      %c0_54 = arith.constant 0 : index
      %c0_55 = arith.constant 0 : index
      %98 = vector.load %arg2[%c0_53, %c0_54, %c0_55] : memref<1x8x32xf32, #tpu.memory_space<vmem>>, vector<1x8x32xf32>
      %99 = vector.shape_cast %98 : vector<1x8x32xf32> to vector<8x32xf32>
      %cst_56 = arith.constant dense<0.000000e+00> : vector<8xf32>
      %100 = vector.multi_reduction <add>, %99, %cst_56 [1] : vector<8x32xf32> to vector<8xf32>
      %101 = vector.shape_cast %100 : vector<8xf32> to vector<8x1xf32>
      %cst_57 = arith.constant 3.200000e+01 : f32
      %102 = vector.broadcast %cst_57 : f32 to vector<8x1xf32>
      %103 = arith.divf %101, %102 : vector<8x1xf32>
      %104 = vector.broadcast %103 : vector<8x1xf32> to vector<8x32xf32>
      %105 = arith.subf %99, %104 : vector<8x32xf32>
      %106 = arith.mulf %105, %105 : vector<8x32xf32>
      %cst_58 = arith.constant dense<0.000000e+00> : vector<8xf32>
      %107 = vector.multi_reduction <add>, %106, %cst_58 [1] : vector<8x32xf32> to vector<8xf32>
      %108 = vector.shape_cast %107 : vector<8xf32> to vector<8x1xf32>
      %cst_59 = arith.constant 0.0322580636 : f32
      %109 = vector.broadcast %cst_59 : f32 to vector<8x1xf32>
      %110 = arith.mulf %108, %109 : vector<8x1xf32>
      %111 = vector.broadcast %0 : f32 to vector<8x32xf32>
      %112 = arith.mulf %111, %105 : vector<8x32xf32>
      %113 = math.sqrt %110 : vector<8x1xf32>
      %cst_60 = arith.constant 9.99999997E-7 : f32
      %114 = vector.broadcast %cst_60 : f32 to vector<8x1xf32>
      %115 = arith.addf %113, %114 : vector<8x1xf32>
      %116 = vector.broadcast %115 : vector<8x1xf32> to vector<8x32xf32>
      %117 = arith.divf %112, %116 : vector<8x32xf32>
      %118 = vector.broadcast %1 : f32 to vector<8x32xf32>
      %119 = arith.addf %117, %118 : vector<8x32xf32>
      %120 = arith.truncf %119 : vector<8x32xf32> to vector<8x32xbf16>
      %c0_61 = arith.constant 0 : index
      %c0_62 = arith.constant 0 : index
      %121 = vector.load %arg4[%c0_61, %c0_62] : memref<32x96xbf16, #tpu.memory_space<vmem>>, vector<32x96xbf16>
      %cst_63 = arith.constant dense<0.000000e+00> : vector<8x96xf32>
      %122 = tpu.matmul %120, %121, %cst_63 {dimension_numbers = #tpu.dot_dimension_numbers<[1], [0], [0], [1], [0, 0, 1, 1], [], []>} : vector<8x32xbf16>, vector<32x96xbf16>, vector<8x96xf32> -> vector<8x96xf32>
      %c0_64 = arith.constant 0 : index
      %c0_65 = arith.constant 0 : index
      %123 = vector.load %arg5[%c0_64, %c0_65] : memref<1x96xf32, #tpu.memory_space<vmem>>, vector<1x96xf32>
      %124 = vector.broadcast %123 : vector<1x96xf32> to vector<8x96xf32>
      %125 = arith.addf %122, %124 : vector<8x96xf32>
      %126 = vector.extract_strided_slice %125 {offsets = [0, 0], sizes = [8, 32], strides = [1, 1]} : vector<8x96xf32> to vector<8x32xf32>
      %cst_66 = arith.constant 0.353553385 : f32
      %127 = vector.broadcast %cst_66 : f32 to vector<8x32xf32>
      %128 = arith.mulf %126, %127 : vector<8x32xf32>
      %129 = vector.extract_strided_slice %125 {offsets = [0, 32], sizes = [8, 32], strides = [1, 1]} : vector<8x96xf32> to vector<8x32xf32>
      %130 = vector.extract_strided_slice %125 {offsets = [0, 64], sizes = [8, 32], strides = [1, 1]} : vector<8x96xf32> to vector<8x32xf32>
      %131 = vector.extract_strided_slice %128 {offsets = [0, 0], sizes = [8, 8], strides = [1, 1]} : vector<8x32xf32> to vector<8x8xf32>
      %132 = vector.extract_strided_slice %128 {offsets = [0, 8], sizes = [8, 8], strides = [1, 1]} : vector<8x32xf32> to vector<8x8xf32>
      %133 = vector.extract_strided_slice %128 {offsets = [0, 16], sizes = [8, 8], strides = [1, 1]} : vector<8x32xf32> to vector<8x8xf32>
      %134 = vector.extract_strided_slice %128 {offsets = [0, 24], sizes = [8, 8], strides = [1, 1]} : vector<8x32xf32> to vector<8x8xf32>
      %135 = vector.shape_cast %131 : vector<8x8xf32> to vector<1x8x8xf32>
      %136 = vector.shape_cast %132 : vector<8x8xf32> to vector<1x8x8xf32>
      %137 = vector.shape_cast %133 : vector<8x8xf32> to vector<1x8x8xf32>
      %138 = vector.shape_cast %134 : vector<8x8xf32> to vector<1x8x8xf32>
      %139 = tpu.concatenate %135, %136, %137, %138 in 0 : vector<1x8x8xf32>, vector<1x8x8xf32>, vector<1x8x8xf32>, vector<1x8x8xf32> -> vector<4x8x8xf32>
      %140 = arith.truncf %139 : vector<4x8x8xf32> to vector<4x8x8xbf16>
      %c0_67 = arith.constant 0 : index
      %c0_68 = arith.constant 0 : index
      %c0_69 = arith.constant 0 : index
      %c0_70 = arith.constant 0 : index
      %141 = vector.load %arg14[%c0_67, %c0_68, %c0_69, %c0_70] : memref<3x4x8x8xbf16, #tpu.memory_space<vmem>>, vector<1x4x8x8xbf16>
      %142 = vector.shape_cast %141 : vector<1x4x8x8xbf16> to vector<4x8x8xbf16>
      %143 = vector.shape_cast %140 : vector<4x8x8xbf16> to vector<1x4x8x8xbf16>
      tpu.vector_store %arg14[%c0_67, %c0_68, %c0_69, %c0_70], %143 {strides = array<i32>} : memref<3x4x8x8xbf16, #tpu.memory_space<vmem>>, vector<1x4x8x8xbf16>,
      %144 = vector.extract_strided_slice %129 {offsets = [0, 0], sizes = [8, 8], strides = [1, 1]} : vector<8x32xf32> to vector<8x8xf32>
      %145 = vector.extract_strided_slice %129 {offsets = [0, 8], sizes = [8, 8], strides = [1, 1]} : vector<8x32xf32> to vector<8x8xf32>
      %146 = vector.extract_strided_slice %129 {offsets = [0, 16], sizes = [8, 8], strides = [1, 1]} : vector<8x32xf32> to vector<8x8xf32>
      %147 = vector.extract_strided_slice %129 {offsets = [0, 24], sizes = [8, 8], strides = [1, 1]} : vector<8x32xf32> to vector<8x8xf32>
      %148 = vector.shape_cast %144 : vector<8x8xf32> to vector<1x8x8xf32>
      %149 = vector.shape_cast %145 : vector<8x8xf32> to vector<1x8x8xf32>
      %150 = vector.shape_cast %146 : vector<8x8xf32> to vector<1x8x8xf32>
      %151 = vector.shape_cast %147 : vector<8x8xf32> to vector<1x8x8xf32>
      %152 = tpu.concatenate %148, %149, %150, %151 in 0 : vector<1x8x8xf32>, vector<1x8x8xf32>, vector<1x8x8xf32>, vector<1x8x8xf32> -> vector<4x8x8xf32>
      %153 = arith.truncf %152 : vector<4x8x8xf32> to vector<4x8x8xbf16>
      %c1_71 = arith.constant 1 : index
      %c0_72 = arith.constant 0 : index
      %c0_73 = arith.constant 0 : index
      %c0_74 = arith.constant 0 : index
      %154 = vector.load %arg14[%c1_71, %c0_72, %c0_73, %c0_74] : memref<3x4x8x8xbf16, #tpu.memory_space<vmem>>, vector<1x4x8x8xbf16>
      %155 = vector.shape_cast %154 : vector<1x4x8x8xbf16> to vector<4x8x8xbf16>
      %156 = vector.shape_cast %153 : vector<4x8x8xbf16> to vector<1x4x8x8xbf16>
      tpu.vector_store %arg14[%c1_71, %c0_72, %c0_73, %c0_74], %156 {strides = array<i32>} : memref<3x4x8x8xbf16, #tpu.memory_space<vmem>>, vector<1x4x8x8xbf16>,
      %157 = vector.extract_strided_slice %130 {offsets = [0, 0], sizes = [8, 8], strides = [1, 1]} : vector<8x32xf32> to vector<8x8xf32>
      %158 = vector.extract_strided_slice %130 {offsets = [0, 8], sizes = [8, 8], strides = [1, 1]} : vector<8x32xf32> to vector<8x8xf32>
      %159 = vector.extract_strided_slice %130 {offsets = [0, 16], sizes = [8, 8], strides = [1, 1]} : vector<8x32xf32> to vector<8x8xf32>
      %160 = vector.extract_strided_slice %130 {offsets = [0, 24], sizes = [8, 8], strides = [1, 1]} : vector<8x32xf32> to vector<8x8xf32>
      %161 = vector.shape_cast %157 : vector<8x8xf32> to vector<1x8x8xf32>
      %162 = vector.shape_cast %158 : vector<8x8xf32> to vector<1x8x8xf32>
      %163 = vector.shape_cast %159 : vector<8x8xf32> to vector<1x8x8xf32>
      %164 = vector.shape_cast %160 : vector<8x8xf32> to vector<1x8x8xf32>
      %165 = tpu.concatenate %161, %162, %163, %164 in 0 : vector<1x8x8xf32>, vector<1x8x8xf32>, vector<1x8x8xf32>, vector<1x8x8xf32> -> vector<4x8x8xf32>
      %166 = arith.truncf %165 : vector<4x8x8xf32> to vector<4x8x8xbf16>
      %c2_75 = arith.constant 2 : index
      %c0_76 = arith.constant 0 : index
      %c0_77 = arith.constant 0 : index
      %c0_78 = arith.constant 0 : index
      %167 = vector.load %arg14[%c2_75, %c0_76, %c0_77, %c0_78] : memref<3x4x8x8xbf16, #tpu.memory_space<vmem>>, vector<1x4x8x8xbf16>
      %168 = vector.shape_cast %167 : vector<1x4x8x8xbf16> to vector<4x8x8xbf16>
      %169 = vector.shape_cast %166 : vector<4x8x8xbf16> to vector<1x4x8x8xbf16>
      tpu.vector_store %arg14[%c2_75, %c0_76, %c0_77, %c0_78], %169 {strides = array<i32>} : memref<3x4x8x8xbf16, #tpu.memory_space<vmem>>, vector<1x4x8x8xbf16>,
    } else {
    }
    %c8_i32 = arith.constant 8 : i32
    %7 = arith.muli %arg1, %c8_i32 : i32
    %8 = tpu.assume_multiple %7, 8 : i32
    %c0_7 = arith.constant 0 : index
    %9 = arith.index_cast %8 : i32 to index
    %c0_8 = arith.constant 0 : index
    %10 = vector.load %arg2[%c0_7, %9, %c0_8] : memref<1x8x32xf32, #tpu.memory_space<vmem>>, vector<1x8x32xf32>
    %11 = vector.shape_cast %10 : vector<1x8x32xf32> to vector<8x32xf32>
    %c0_9 = arith.constant 0 : index
    %c0_10 = arith.constant 0 : index
    %12 = arith.index_cast %8 : i32 to index
    %c0_11 = arith.constant 0 : index
    %13 = vector.load %arg14[%c0_9, %c0_10, %12, %c0_11] : memref<3x4x8x8xbf16, #tpu.memory_space<vmem>>, vector<1x4x8x8xbf16>
    %14 = vector.shape_cast %13 : vector<1x4x8x8xbf16> to vector<4x8x8xbf16>
    %c1_12 = arith.constant 1 : index
    %c0_13 = arith.constant 0 : index
    %c0_14 = arith.constant 0 : index
    %c0_15 = arith.constant 0 : index
    %15 = vector.load %arg14[%c1_12, %c0_13, %c0_14, %c0_15] : memref<3x4x8x8xbf16, #tpu.memory_space<vmem>>, vector<1x4x8x8xbf16>
    %16 = vector.shape_cast %15 : vector<1x4x8x8xbf16> to vector<4x8x8xbf16>
    %c2 = arith.constant 2 : index
    %c0_16 = arith.constant 0 : index
    %c0_17 = arith.constant 0 : index
    %c0_18 = arith.constant 0 : index
    %17 = vector.load %arg14[%c2, %c0_16, %c0_17, %c0_18] : memref<3x4x8x8xbf16, #tpu.memory_space<vmem>>, vector<1x4x8x8xbf16>
    %18 = vector.shape_cast %17 : vector<1x4x8x8xbf16> to vector<4x8x8xbf16>
    %c0_19 = arith.constant 0 : index
    %c0_20 = arith.constant 0 : index
    %c0_21 = arith.constant 0 : index
    %19 = vector.load %arg3[%c0_19, %c0_20, %c0_21] : memref<1x8x8xi8, #tpu.memory_space<vmem>>, vector<1x8x8xi8>
    %20 = vector.shape_cast %19 : vector<1x8x8xi8> to vector<8x8xi8>
    %21 = arith.extsi %20 : vector<8x8xi8> to vector<8x8xi32>
    %c0_i32_22 = arith.constant 0 : i32
    %22 = vector.broadcast %c0_i32_22 : i32 to vector<8x8xi32>
    %23 = arith.cmpi eq, %21, %22 : vector<8x8xi32>
    %cst = arith.constant -1.000000e+09 : f32
    %cst_23 = arith.constant 0.000000e+00 : f32
    %24 = vector.broadcast %cst : f32 to vector<8x8xf32>
    %25 = vector.broadcast %cst_23 : f32 to vector<8x8xf32>
    %26 = arith.select %23, %24, %25 : vector<8x8xi1>, vector<8x8xf32>
    "tpu.trace_start"() <{level = 10 : i32, message = "hqd,hkd->hqk"}> : () -> ()
    %cst_24 = arith.constant dense<0.000000e+00> : vector<4x8x8xf32>
    %27 = tpu.matmul %14, %16, %cst_24 {dimension_numbers = #tpu.dot_dimension_numbers<[2], [2], [1], [1], [0, 0, 0, 1, 1, 1], [0], [0]>} : vector<4x8x8xbf16>, vector<4x8x8xbf16>, vector<4x8x8xf32> -> vector<4x8x8xf32>
    "tpu.trace_stop"() : () -> ()
    %28 = vector.shape_cast %26 : vector<8x8xf32> to vector<1x8x8xf32>
    %29 = vector.broadcast %28 : vector<1x8x8xf32> to vector<4x8x8xf32>
    %30 = arith.addf %27, %29 : vector<4x8x8xf32>
    %cst_25 = arith.constant dense<0xFF800000> : vector<4x8xf32>
    %31 = vector.multi_reduction <maximumf>, %30, %cst_25 [2] : vector<4x8x8xf32> to vector<4x8xf32>
    %32 = vector.shape_cast %31 : vector<4x8xf32> to vector<4x8x1xf32>
    %33 = vector.broadcast %32 : vector<4x8x1xf32> to vector<4x8x8xf32>
    %34 = arith.subf %30, %33 : vector<4x8x8xf32>
    %35 = math.exp %34 : vector<4x8x8xf32>
    %cst_26 = arith.constant dense<0.000000e+00> : vector<4x8xf32>
    %36 = vector.multi_reduction <add>, %35, %cst_26 [2] : vector<4x8x8xf32> to vector<4x8xf32>
    %37 = vector.shape_cast %36 : vector<4x8xf32> to vector<4x8x1xf32>
    %38 = arith.truncf %35 : vector<4x8x8xf32> to vector<4x8x8xbf16>
    "tpu.trace_start"() <{level = 10 : i32, message = "hqk,hkd->hqd"}> : () -> ()
    %cst_27 = arith.constant dense<0.000000e+00> : vector<4x8x8xf32>
    %39 = tpu.matmul %38, %18, %cst_27 {dimension_numbers = #tpu.dot_dimension_numbers<[2], [1], [1], [2], [0, 0, 0, 1, 1, 2], [0], [0]>} : vector<4x8x8xbf16>, vector<4x8x8xbf16>, vector<4x8x8xf32> -> vector<4x8x8xf32>
    "tpu.trace_stop"() : () -> ()
    %cst_28 = arith.constant 1.000000e+00 : f32
    %40 = vector.broadcast %cst_28 : f32 to vector<4x8x1xf32>
    %41 = arith.divf %40, %37 : vector<4x8x1xf32>
    %42 = vector.broadcast %41 : vector<4x8x1xf32> to vector<4x8x8xf32>
    %43 = arith.mulf %39, %42 : vector<4x8x8xf32>
    %44 = vector.extract_strided_slice %43 {offsets = [0, 0, 0], sizes = [1, 8, 8], strides = [1, 1, 1]} : vector<4x8x8xf32> to vector<1x8x8xf32>
    %45 = vector.shape_cast %44 : vector<1x8x8xf32> to vector<8x8xf32>
    %46 = vector.extract_strided_slice %43 {offsets = [1, 0, 0], sizes = [1, 8, 8], strides = [1, 1, 1]} : vector<4x8x8xf32> to vector<1x8x8xf32>
    %47 = vector.shape_cast %46 : vector<1x8x8xf32> to vector<8x8xf32>
    %48 = vector.extract_strided_slice %43 {offsets = [2, 0, 0], sizes = [1, 8, 8], strides = [1, 1, 1]} : vector<4x8x8xf32> to vector<1x8x8xf32>
    %49 = vector.shape_cast %48 : vector<1x8x8xf32> to vector<8x8xf32>
    %50 = vector.extract_strided_slice %43 {offsets = [3, 0, 0], sizes = [1, 8, 8], strides = [1, 1, 1]} : vector<4x8x8xf32> to vector<1x8x8xf32>
    %51 = vector.shape_cast %50 : vector<1x8x8xf32> to vector<8x8xf32>
    %52 = tpu.concatenate %45, %47, %49, %51 in 1 : vector<8x8xf32>, vector<8x8xf32>, vector<8x8xf32>, vector<8x8xf32> -> vector<8x32xf32>
    %53 = arith.truncf %52 : vector<8x32xf32> to vector<8x32xbf16>
    %c0_29 = arith.constant 0 : index
    %c0_30 = arith.constant 0 : index
    %54 = vector.load %arg6[%c0_29, %c0_30] : memref<32x32xbf16, #tpu.memory_space<vmem>>, vector<32x32xbf16>
    %cst_31 = arith.constant dense<0.000000e+00> : vector<8x32xf32>
    %55 = tpu.matmul %53, %54, %cst_31 {dimension_numbers = #tpu.dot_dimension_numbers<[1], [0], [0], [1], [0, 0, 1, 1], [], []>} : vector<8x32xbf16>, vector<32x32xbf16>, vector<8x32xf32> -> vector<8x32xf32>
    %c0_32 = arith.constant 0 : index
    %c0_33 = arith.constant 0 : index
    %56 = vector.load %arg7[%c0_32, %c0_33] : memref<1x32xf32, #tpu.memory_space<vmem>>, vector<1x32xf32>
    %57 = vector.broadcast %56 : vector<1x32xf32> to vector<8x32xf32>
    %58 = arith.addf %55, %57 : vector<8x32xf32>
    %59 = arith.addf %11, %58 : vector<8x32xf32>
    %cst_34 = arith.constant dense<0.000000e+00> : vector<8xf32>
    %60 = vector.multi_reduction <add>, %59, %cst_34 [1] : vector<8x32xf32> to vector<8xf32>
    %61 = vector.shape_cast %60 : vector<8xf32> to vector<8x1xf32>
    %cst_35 = arith.constant 3.200000e+01 : f32
    %62 = vector.broadcast %cst_35 : f32 to vector<8x1xf32>
    %63 = arith.divf %61, %62 : vector<8x1xf32>
    %64 = vector.broadcast %63 : vector<8x1xf32> to vector<8x32xf32>
    %65 = arith.subf %59, %64 : vector<8x32xf32>
    %66 = arith.mulf %65, %65 : vector<8x32xf32>
    %cst_36 = arith.constant dense<0.000000e+00> : vector<8xf32>
    %67 = vector.multi_reduction <add>, %66, %cst_36 [1] : vector<8x32xf32> to vector<8xf32>
    %68 = vector.shape_cast %67 : vector<8xf32> to vector<8x1xf32>
    %cst_37 = arith.constant 0.0322580636 : f32
    %69 = vector.broadcast %cst_37 : f32 to vector<8x1xf32>
    %70 = arith.mulf %68, %69 : vector<8x1xf32>
    %71 = vector.broadcast %2 : f32 to vector<8x32xf32>
    %72 = arith.mulf %71, %65 : vector<8x32xf32>
    %73 = math.sqrt %70 : vector<8x1xf32>
    %cst_38 = arith.constant 9.99999997E-7 : f32
    %74 = vector.broadcast %cst_38 : f32 to vector<8x1xf32>
    %75 = arith.addf %73, %74 : vector<8x1xf32>
    %76 = vector.broadcast %75 : vector<8x1xf32> to vector<8x32xf32>
    %77 = arith.divf %72, %76 : vector<8x32xf32>
    %78 = vector.broadcast %3 : f32 to vector<8x32xf32>
    %79 = arith.addf %77, %78 : vector<8x32xf32>
    %80 = arith.truncf %79 : vector<8x32xf32> to vector<8x32xbf16>
    %c0_39 = arith.constant 0 : index
    %c0_40 = arith.constant 0 : index
    %81 = vector.load %arg8[%c0_39, %c0_40] : memref<32x64xbf16, #tpu.memory_space<vmem>>, vector<32x64xbf16>
    %cst_41 = arith.constant dense<0.000000e+00> : vector<8x64xf32>
    %82 = tpu.matmul %80, %81, %cst_41 {dimension_numbers = #tpu.dot_dimension_numbers<[1], [0], [0], [1], [0, 0, 1, 1], [], []>} : vector<8x32xbf16>, vector<32x64xbf16>, vector<8x64xf32> -> vector<8x64xf32>
    %c0_42 = arith.constant 0 : index
    %c0_43 = arith.constant 0 : index
    %83 = vector.load %arg9[%c0_42, %c0_43] : memref<1x64xf32, #tpu.memory_space<vmem>>, vector<1x64xf32>
    %84 = vector.broadcast %83 : vector<1x64xf32> to vector<8x64xf32>
    %85 = arith.addf %82, %84 : vector<8x64xf32>
    %cst_44 = arith.constant 0.000000e+00 : f32
    %86 = vector.broadcast %cst_44 : f32 to vector<8x64xf32>
    %87 = arith.maximumf %85, %86 : vector<8x64xf32>
    %88 = arith.truncf %87 : vector<8x64xf32> to vector<8x64xbf16>
    %c0_45 = arith.constant 0 : index
    %c0_46 = arith.constant 0 : index
    %89 = vector.load %arg10[%c0_45, %c0_46] : memref<64x32xbf16, #tpu.memory_space<vmem>>, vector<64x32xbf16>
    %cst_47 = arith.constant dense<0.000000e+00> : vector<8x32xf32>
    %90 = tpu.matmul %88, %89, %cst_47 {dimension_numbers = #tpu.dot_dimension_numbers<[1], [0], [0], [1], [0, 0, 1, 1], [], []>} : vector<8x64xbf16>, vector<64x32xbf16>, vector<8x32xf32> -> vector<8x32xf32>
    %c0_48 = arith.constant 0 : index
    %c0_49 = arith.constant 0 : index
    %91 = vector.load %arg11[%c0_48, %c0_49] : memref<1x32xf32, #tpu.memory_space<vmem>>, vector<1x32xf32>
    %92 = vector.broadcast %91 : vector<1x32xf32> to vector<8x32xf32>
    %93 = arith.addf %90, %92 : vector<8x32xf32>
    %94 = arith.addf %59, %93 : vector<8x32xf32>
    %c0_50 = arith.constant 0 : index
    %c0_51 = arith.constant 0 : index
    %c0_52 = arith.constant 0 : index
    %95 = vector.load %arg13[%c0_50, %c0_51, %c0_52] : memref<1x8x32xf32, #tpu.memory_space<vmem>>, vector<1x8x32xf32>
    %96 = vector.shape_cast %95 : vector<1x8x32xf32> to vector<8x32xf32>
    %97 = vector.shape_cast %94 : vector<8x32xf32> to vector<1x8x32xf32>
    tpu.vector_store %arg13[%c0_50, %c0_51, %c0_52], %97 {strides = array<i32>} : memref<1x8x32xf32, #tpu.memory_space<vmem>>, vector<1x8x32xf32>,
    return
  }
  func.func @transform_0(%arg0: i32, %arg1: i32) -> (i32, i32, i32) {
    %c0_i32 = arith.constant 0 : i32
    %c0_i32_0 = arith.constant 0 : i32
    %c0_i32_1 = arith.constant 0 : i32
    return %arg0, %c0_i32, %c0_i32_0 : i32, i32, i32
  }
  func.func @transform_1(%arg0: i32, %arg1: i32) -> (i32, i32, i32) {
    %c0_i32 = arith.constant 0 : i32
    %c0_i32_0 = arith.constant 0 : i32
    return %arg0, %arg1, %c0_i32 : i32, i32, i32
  }
  func.func @transform_2(%arg0: i32, %arg1: i32) -> (i32, i32) {
    %c0_i32 = arith.constant 0 : i32
    %c0_i32_0 = arith.constant 0 : i32
    %c0_i32_1 = arith.constant 0 : i32
    return %c0_i32, %c0_i32_0 : i32, i32
  }
  func.func @transform_3(%arg0: i32, %arg1: i32) -> (i32, i32) {
    %c0_i32 = arith.constant 0 : i32
    %c0_i32_0 = arith.constant 0 : i32
    %c0_i32_1 = arith.constant 0 : i32
    return %c0_i32, %c0_i32_0 : i32, i32
  }
  func.func @transform_4(%arg0: i32, %arg1: i32) -> (i32, i32) {
    %c0_i32 = arith.constant 0 : i32
    %c0_i32_0 = arith.constant 0 : i32
    %c0_i32_1 = arith.constant 0 : i32
    return %c0_i32, %c0_i32_0 : i32, i32
  }
  func.func @transform_5(%arg0: i32, %arg1: i32) -> (i32, i32) {
    %c0_i32 = arith.constant 0 : i32
    %c0_i32_0 = arith.constant 0 : i32
    %c0_i32_1 = arith.constant 0 : i32
    return %c0_i32, %c0_i32_0 : i32, i32
  }
  func.func @transform_6(%arg0: i32, %arg1: i32) -> (i32, i32) {
    %c0_i32 = arith.constant 0 : i32
    %c0_i32_0 = arith.constant 0 : i32
    %c0_i32_1 = arith.constant 0 : i32
    return %c0_i32, %c0_i32_0 : i32, i32
  }
  func.func @transform_7(%arg0: i32, %arg1: i32) -> (i32, i32) {
    %c0_i32 = arith.constant 0 : i32
    %c0_i32_0 = arith.constant 0 : i32
    %c0_i32_1 = arith.constant 0 : i32
    return %c0_i32, %c0_i32_0 : i32, i32
  }
  func.func @transform_8(%arg0: i32, %arg1: i32) -> (i32, i32) {
    %c0_i32 = arith.constant 0 : i32
    %c0_i32_0 = arith.constant 0 : i32
    %c0_i32_1 = arith.constant 0 : i32
    return %c0_i32, %c0_i32_0 : i32, i32
  }
  func.func @transform_9(%arg0: i32, %arg1: i32) -> (i32, i32) {
    %c0_i32 = arith.constant 0 : i32
    %c0_i32_0 = arith.constant 0 : i32
    %c0_i32_1 = arith.constant 0 : i32
    return %c0_i32, %c0_i32_0 : i32, i32
  }
  func.func @transform_10(%arg0: i32, %arg1: i32) -> (i32, i32) {
    %c0_i32 = arith.constant 0 : i32
    %c0_i32_0 = arith.constant 0 : i32
    %c0_i32_1 = arith.constant 0 : i32
    return %c0_i32, %c0_i32_0 : i32, i32
  }
  func.func @transform_11(%arg0: i32, %arg1: i32) -> (i32, i32, i32) {
    %c0_i32 = arith.constant 0 : i32
    %c0_i32_0 = arith.constant 0 : i32
    return %arg0, %arg1, %c0_i32 : i32, i32, i32
  }
}

module attributes {stable_mosaic.version = 11 : i64} {
  func.func @_encoder_block_kernel(%arg0: i32, %arg1: i32, %arg2: memref<1x8x32xf32, #tpu.memory_space<vmem>>, %arg3: memref<1x8x8xi8, #tpu.memory_space<vmem>>, %arg4: memref<32x96xbf16, #tpu.memory_space<vmem>>, %arg5: memref<1x96xf32, #tpu.memory_space<vmem>>, %arg6: memref<32x32xbf16, #tpu.memory_space<vmem>>, %arg7: memref<1x32xf32, #tpu.memory_space<vmem>>, %arg8: memref<32x64xbf16, #tpu.memory_space<vmem>>, %arg9: memref<1x64xf32, #tpu.memory_space<vmem>>, %arg10: memref<64x32xbf16, #tpu.memory_space<vmem>>, %arg11: memref<1x32xf32, #tpu.memory_space<vmem>>, %arg12: memref<2x2xf32, #tpu.memory_space<smem>>, %arg13: memref<1x8x32xf32, #tpu.memory_space<vmem>>, %arg14: memref<3x4x8x8xbf16, #tpu.memory_space<vmem>>) attributes {dimension_semantics = [#tpu.dimension_semantics<parallel>, #tpu.dimension_semantics<arbitrary>], iteration_bounds = array<i64: 2, 1>, scalar_prefetch = 0 : i64, scratch_operands = 1 : i64, tpu.core_type = #tpu.core_type<tc>, window_params = [{transform_indices = @transform_0, window_bounds = array<i64: 1, 8, 32>}, {transform_indices = @transform_1, window_bounds = array<i64: 1, 8, 8>}, {pipeline_mode = #tpu.pipeline_mode<synchronous>, transform_indices = @transform_2, window_bounds = array<i64: 32, 96>}, {pipeline_mode = #tpu.pipeline_mode<synchronous>, transform_indices = @transform_3, window_bounds = array<i64: 1, 96>}, {pipeline_mode = #tpu.pipeline_mode<synchronous>, transform_indices = @transform_4, window_bounds = array<i64: 32, 32>}, {pipeline_mode = #tpu.pipeline_mode<synchronous>, transform_indices = @transform_5, window_bounds = array<i64: 1, 32>}, {pipeline_mode = #tpu.pipeline_mode<synchronous>, transform_indices = @transform_6, window_bounds = array<i64: 32, 64>}, {pipeline_mode = #tpu.pipeline_mode<synchronous>, transform_indices = @transform_7, window_bounds = array<i64: 1, 64>}, {pipeline_mode = #tpu.pipeline_mode<synchronous>, transform_indices = @transform_8, window_bounds = array<i64: 64, 32>}, {pipeline_mode = #tpu.pipeline_mode<synchronous>, transform_indices = @transform_9, window_bounds = array<i64: 1, 32>}, {transform_indices = @transform_10, window_bounds = array<i64: 2, 2>}, {transform_indices = @transform_11, window_bounds = array<i64: 1, 8, 32>}]} {
    %c0 = arith.constant 0 : index
    %c0_0 = arith.constant 0 : index
    %0 = memref.load %arg12[%c0, %c0_0] : memref<2x2xf32, #tpu.memory_space<smem>>
    %c0_1 = arith.constant 0 : index
    %c1 = arith.constant 1 : index
    %1 = memref.load %arg12[%c0_1, %c1] : memref<2x2xf32, #tpu.memory_space<smem>>
    %c1_2 = arith.constant 1 : index
    %c0_3 = arith.constant 0 : index
    %2 = memref.load %arg12[%c1_2, %c0_3] : memref<2x2xf32, #tpu.memory_space<smem>>
    %c1_4 = arith.constant 1 : index
    %c1_5 = arith.constant 1 : index
    %3 = memref.load %arg12[%c1_4, %c1_5] : memref<2x2xf32, #tpu.memory_space<smem>>
    %c0_i32 = arith.constant 0 : i32
    %4 = arith.cmpi eq, %arg1, %c0_i32 : i32
    %5 = arith.extui %4 : i1 to i32
    %c0_i32_6 = arith.constant 0 : i32
    %6 = arith.cmpi ne, %5, %c0_i32_6 : i32
    scf.if %6 {
      %c0_53 = arith.constant 0 : index
      %c0_54 = arith.constant 0 : index
      %c0_55 = arith.constant 0 : index
      %98 = vector.load %arg2[%c0_53, %c0_54, %c0_55] : memref<1x8x32xf32, #tpu.memory_space<vmem>>, vector<1x8x32xf32>
      %99 = vector.shape_cast %98 : vector<1x8x32xf32> to vector<8x32xf32>
      %cst_56 = arith.constant dense<0.000000e+00> : vector<8xf32>
      %100 = vector.multi_reduction <add>, %99, %cst_56 [1] : vector<8x32xf32> to vector<8xf32>
      %101 = vector.shape_cast %100 : vector<8xf32> to vector<8x1xf32>
      %cst_57 = arith.constant 3.200000e+01 : f32
      %102 = vector.broadcast %cst_57 : f32 to vector<8x1xf32>
      %103 = arith.divf %101, %102 : vector<8x1xf32>
      %104 = vector.broadcast %103 : vector<8x1xf32> to vector<8x32xf32>
      %105 = arith.subf %99, %104 : vector<8x32xf32>
      %106 = arith.mulf %105, %105 : vector<8x32xf32>
      %cst_58 = arith.constant dense<0.000000e+00> : vector<8xf32>
      %107 = vector.multi_reduction <add>, %106, %cst_58 [1] : vector<8x32xf32> to vector<8xf32>
      %108 = vector.shape_cast %107 : vector<8xf32> to vector<8x1xf32>
      %cst_59 = arith.constant 0.0322580636 : f32
      %109 = vector.broadcast %cst_59 : f32 to vector<8x1xf32>
      %110 = arith.mulf %108, %109 : vector<8x1xf32>
      %111 = vector.broadcast %0 : f32 to vector<8x32xf32>
      %112 = arith.mulf %111, %105 : vector<8x32xf32>
      %113 = math.sqrt %110 : vector<8x1xf32>
      %cst_60 = arith.constant 9.99999997E-7 : f32
      %114 = vector.broadcast %cst_60 : f32 to vector<8x1xf32>
      %115 = arith.addf %113, %114 : vector<8x1xf32>
      %116 = vector.broadcast %115 : vector<8x1xf32> to vector<8x32xf32>
      %117 = arith.divf %112, %116 : vector<8x32xf32>
      %118 = vector.broadcast %1 : f32 to vector<8x32xf32>
      %119 = arith.addf %117, %118 : vector<8x32xf32>
      %120 = arith.truncf %119 : vector<8x32xf32> to vector<8x32xbf16>
      %c0_61 = arith.constant 0 : index
      %c0_62 = arith.constant 0 : index
      %121 = vector.load %arg4[%c0_61, %c0_62] : memref<32x96xbf16, #tpu.memory_space<vmem>>, vector<32x96xbf16>
      %cst_63 = arith.constant dense<0.000000e+00> : vector<8x96xf32>
      %122 = tpu.matmul %120, %121, %cst_63 {dimension_numbers = #tpu.dot_dimension_numbers<[1], [0], [0], [1], [0, 0, 1, 1], [], []>} : vector<8x32xbf16>, vector<32x96xbf16>, vector<8x96xf32> -> vector<8x96xf32>
      %c0_64 = arith.constant 0 : index
      %c0_65 = arith.constant 0 : index
      %123 = vector.load %arg5[%c0_64, %c0_65] : memref<1x96xf32, #tpu.memory_space<vmem>>, vector<1x96xf32>
      %124 = vector.broadcast %123 : vector<1x96xf32> to vector<8x96xf32>
      %125 = arith.addf %122, %124 : vector<8x96xf32>
      %126 = vector.extract_strided_slice %125 {offsets = [0, 0], sizes = [8, 32], strides = [1, 1]} : vector<8x96xf32> to vector<8x32xf32>
      %cst_66 = arith.constant 0.353553385 : f32
      %127 = vector.broadcast %cst_66 : f32 to vector<8x32xf32>
      %128 = arith.mulf %126, %127 : vector<8x32xf32>
      %129 = vector.extract_strided_slice %125 {offsets = [0, 32], sizes = [8, 32], strides = [1, 1]} : vector<8x96xf32> to vector<8x32xf32>
      %130 = vector.extract_strided_slice %125 {offsets = [0, 64], sizes = [8, 32], strides = [1, 1]} : vector<8x96xf32> to vector<8x32xf32>
      %131 = vector.extract_strided_slice %128 {offsets = [0, 0], sizes = [8, 8], strides = [1, 1]} : vector<8x32xf32> to vector<8x8xf32>
      %132 = vector.extract_strided_slice %128 {offsets = [0, 8], sizes = [8, 8], strides = [1, 1]} : vector<8x32xf32> to vector<8x8xf32>
      %133 = vector.extract_strided_slice %128 {offsets = [0, 16], sizes = [8, 8], strides = [1, 1]} : vector<8x32xf32> to vector<8x8xf32>
      %134 = vector.extract_strided_slice %128 {offsets = [0, 24], sizes = [8, 8], strides = [1, 1]} : vector<8x32xf32> to vector<8x8xf32>
      %135 = vector.shape_cast %131 : vector<8x8xf32> to vector<1x8x8xf32>
      %136 = vector.shape_cast %132 : vector<8x8xf32> to vector<1x8x8xf32>
      %137 = vector.shape_cast %133 : vector<8x8xf32> to vector<1x8x8xf32>
      %138 = vector.shape_cast %134 : vector<8x8xf32> to vector<1x8x8xf32>
      %139 = tpu.concatenate %135, %136, %137, %138 in 0 : vector<1x8x8xf32>, vector<1x8x8xf32>, vector<1x8x8xf32>, vector<1x8x8xf32> -> vector<4x8x8xf32>
      %140 = arith.truncf %139 : vector<4x8x8xf32> to vector<4x8x8xbf16>
      %c0_67 = arith.constant 0 : index
      %c0_68 = arith.constant 0 : index
      %c0_69 = arith.constant 0 : index
      %c0_70 = arith.constant 0 : index
      %141 = vector.load %arg14[%c0_67, %c0_68, %c0_69, %c0_70] : memref<3x4x8x8xbf16, #tpu.memory_space<vmem>>, vector<1x4x8x8xbf16>
      %142 = vector.shape_cast %141 : vector<1x4x8x8xbf16> to vector<4x8x8xbf16>
      %143 = vector.shape_cast %140 : vector<4x8x8xbf16> to vector<1x4x8x8xbf16>
      tpu.vector_store %arg14[%c0_67, %c0_68, %c0_69, %c0_70], %143 {strides = array<i32>} : memref<3x4x8x8xbf16, #tpu.memory_space<vmem>>, vector<1x4x8x8xbf16>,
      %144 = vector.extract_strided_slice %129 {offsets = [0, 0], sizes = [8, 8], strides = [1, 1]} : vector<8x32xf32> to vector<8x8xf32>
      %145 = vector.extract_strided_slice %129 {offsets = [0, 8], sizes = [8, 8], strides = [1, 1]} : vector<8x32xf32> to vector<8x8xf32>
      %146 = vector.extract_strided_slice %129 {offsets = [0, 16], sizes = [8, 8], strides = [1, 1]} : vector<8x32xf32> to vector<8x8xf32>
      %147 = vector.extract_strided_slice %129 {offsets = [0, 24], sizes = [8, 8], strides = [1, 1]} : vector<8x32xf32> to vector<8x8xf32>
      %148 = vector.shape_cast %144 : vector<8x8xf32> to vector<1x8x8xf32>
      %149 = vector.shape_cast %145 : vector<8x8xf32> to vector<1x8x8xf32>
      %150 = vector.shape_cast %146 : vector<8x8xf32> to vector<1x8x8xf32>
      %151 = vector.shape_cast %147 : vector<8x8xf32> to vector<1x8x8xf32>
      %152 = tpu.concatenate %148, %149, %150, %151 in 0 : vector<1x8x8xf32>, vector<1x8x8xf32>, vector<1x8x8xf32>, vector<1x8x8xf32> -> vector<4x8x8xf32>
      %153 = arith.truncf %152 : vector<4x8x8xf32> to vector<4x8x8xbf16>
      %c1_71 = arith.constant 1 : index
      %c0_72 = arith.constant 0 : index
      %c0_73 = arith.constant 0 : index
      %c0_74 = arith.constant 0 : index
      %154 = vector.load %arg14[%c1_71, %c0_72, %c0_73, %c0_74] : memref<3x4x8x8xbf16, #tpu.memory_space<vmem>>, vector<1x4x8x8xbf16>
      %155 = vector.shape_cast %154 : vector<1x4x8x8xbf16> to vector<4x8x8xbf16>
      %156 = vector.shape_cast %153 : vector<4x8x8xbf16> to vector<1x4x8x8xbf16>
      tpu.vector_store %arg14[%c1_71, %c0_72, %c0_73, %c0_74], %156 {strides = array<i32>} : memref<3x4x8x8xbf16, #tpu.memory_space<vmem>>, vector<1x4x8x8xbf16>,
      %157 = vector.extract_strided_slice %130 {offsets = [0, 0], sizes = [8, 8], strides = [1, 1]} : vector<8x32xf32> to vector<8x8xf32>
      %158 = vector.extract_strided_slice %130 {offsets = [0, 8], sizes = [8, 8], strides = [1, 1]} : vector<8x32xf32> to vector<8x8xf32>
      %159 = vector.extract_strided_slice %130 {offsets = [0, 16], sizes = [8, 8], strides = [1, 1]} : vector<8x32xf32> to vector<8x8xf32>
      %160 = vector.extract_strided_slice %130 {offsets = [0, 24], sizes = [8, 8], strides = [1, 1]} : vector<8x32xf32> to vector<8x8xf32>
      %161 = vector.shape_cast %157 : vector<8x8xf32> to vector<1x8x8xf32>
      %162 = vector.shape_cast %158 : vector<8x8xf32> to vector<1x8x8xf32>
      %163 = vector.shape_cast %159 : vector<8x8xf32> to vector<1x8x8xf32>
      %164 = vector.shape_cast %160 : vector<8x8xf32> to vector<1x8x8xf32>
      %165 = tpu.concatenate %161, %162, %163, %164 in 0 : vector<1x8x8xf32>, vector<1x8x8xf32>, vector<1x8x8xf32>, vector<1x8x8xf32> -> vector<4x8x8xf32>
      %166 = arith.truncf %165 : vector<4x8x8xf32> to vector<4x8x8xbf16>
      %c2_75 = arith.constant 2 : index
      %c0_76 = arith.constant 0 : index
      %c0_77 = arith.constant 0 : index
      %c0_78 = arith.constant 0 : index
      %167 = vector.load %arg14[%c2_75, %c0_76, %c0_77, %c0_78] : memref<3x4x8x8xbf16, #tpu.memory_space<vmem>>, vector<1x4x8x8xbf16>
      %168 = vector.shape_cast %167 : vector<1x4x8x8xbf16> to vector<4x8x8xbf16>
      %169 = vector.shape_cast %166 : vector<4x8x8xbf16> to vector<1x4x8x8xbf16>
      tpu.vector_store %arg14[%c2_75, %c0_76, %c0_77, %c0_78], %169 {strides = array<i32>} : memref<3x4x8x8xbf16, #tpu.memory_space<vmem>>, vector<1x4x8x8xbf16>,
    } else {
    }
    %c8_i32 = arith.constant 8 : i32
    %7 = arith.muli %arg1, %c8_i32 : i32
    %8 = tpu.assume_multiple %7, 8 : i32
    %c0_7 = arith.constant 0 : index
    %9 = arith.index_cast %8 : i32 to index
    %c0_8 = arith.constant 0 : index
    %10 = vector.load %arg2[%c0_7, %9, %c0_8] : memref<1x8x32xf32, #tpu.memory_space<vmem>>, vector<1x8x32xf32>
    %11 = vector.shape_cast %10 : vector<1x8x32xf32> to vector<8x32xf32>
    %c0_9 = arith.constant 0 : index
    %c0_10 = arith.constant 0 : index
    %12 = arith.index_cast %8 : i32 to index
    %c0_11 = arith.constant 0 : index
    %13 = vector.load %arg14[%c0_9, %c0_10, %12, %c0_11] : memref<3x4x8x8xbf16, #tpu.memory_space<vmem>>, vector<1x4x8x8xbf16>
    %14 = vector.shape_cast %13 : vector<1x4x8x8xbf16> to vector<4x8x8xbf16>
    %c1_12 = arith.constant 1 : index
    %c0_13 = arith.constant 0 : index
    %c0_14 = arith.constant 0 : index
    %c0_15 = arith.constant 0 : index
    %15 = vector.load %arg14[%c1_12, %c0_13, %c0_14, %c0_15] : memref<3x4x8x8xbf16, #tpu.memory_space<vmem>>, vector<1x4x8x8xbf16>
    %16 = vector.shape_cast %15 : vector<1x4x8x8xbf16> to vector<4x8x8xbf16>
    %c2 = arith.constant 2 : index
    %c0_16 = arith.constant 0 : index
    %c0_17 = arith.constant 0 : index
    %c0_18 = arith.constant 0 : index
    %17 = vector.load %arg14[%c2, %c0_16, %c0_17, %c0_18] : memref<3x4x8x8xbf16, #tpu.memory_space<vmem>>, vector<1x4x8x8xbf16>
    %18 = vector.shape_cast %17 : vector<1x4x8x8xbf16> to vector<4x8x8xbf16>
    %c0_19 = arith.constant 0 : index
    %c0_20 = arith.constant 0 : index
    %c0_21 = arith.constant 0 : index
    %19 = vector.load %arg3[%c0_19, %c0_20, %c0_21] : memref<1x8x8xi8, #tpu.memory_space<vmem>>, vector<1x8x8xi8>
    %20 = vector.shape_cast %19 : vector<1x8x8xi8> to vector<8x8xi8>
    %21 = arith.extsi %20 : vector<8x8xi8> to vector<8x8xi32>
    %c0_i32_22 = arith.constant 0 : i32
    %22 = vector.broadcast %c0_i32_22 : i32 to vector<8x8xi32>
    %23 = arith.cmpi eq, %21, %22 : vector<8x8xi32>
    %cst = arith.constant -1.000000e+09 : f32
    %cst_23 = arith.constant 0.000000e+00 : f32
    %24 = vector.broadcast %cst : f32 to vector<8x8xf32>
    %25 = vector.broadcast %cst_23 : f32 to vector<8x8xf32>
    %26 = arith.select %23, %24, %25 : vector<8x8xi1>, vector<8x8xf32>
    "tpu.trace_start"() <{level = 10 : i32, message = "hqd,hkd->hqk"}> : () -> ()
    %cst_24 = arith.constant dense<0.000000e+00> : vector<4x8x8xf32>
    %27 = tpu.matmul %14, %16, %cst_24 {dimension_numbers = #tpu.dot_dimension_numbers<[2], [2], [1], [1], [0, 0, 0, 1, 1, 1], [0], [0]>} : vector<4x8x8xbf16>, vector<4x8x8xbf16>, vector<4x8x8xf32> -> vector<4x8x8xf32>
    "tpu.trace_stop"() : () -> ()
    %28 = vector.shape_cast %26 : vector<8x8xf32> to vector<1x8x8xf32>
    %29 = vector.broadcast %28 : vector<1x8x8xf32> to vector<4x8x8xf32>
    %30 = arith.addf %27, %29 : vector<4x8x8xf32>
    %cst_25 = arith.constant dense<0xFF800000> : vector<4x8xf32>
    %31 = vector.multi_reduction <maximumf>, %30, %cst_25 [2] : vector<4x8x8xf32> to vector<4x8xf32>
    %32 = vector.shape_cast %31 : vector<4x8xf32> to vector<4x8x1xf32>
    %33 = vector.broadcast %32 : vector<4x8x1xf32> to vector<4x8x8xf32>
    %34 = arith.subf %30, %33 : vector<4x8x8xf32>
    %35 = math.exp %34 : vector<4x8x8xf32>
    %cst_26 = arith.constant dense<0.000000e+00> : vector<4x8xf32>
    %36 = vector.multi_reduction <add>, %35, %cst_26 [2] : vector<4x8x8xf32> to vector<4x8xf32>
    %37 = vector.shape_cast %36 : vector<4x8xf32> to vector<4x8x1xf32>
    %38 = arith.truncf %35 : vector<4x8x8xf32> to vector<4x8x8xbf16>
    "tpu.trace_start"() <{level = 10 : i32, message = "hqk,hkd->hqd"}> : () -> ()
    %cst_27 = arith.constant dense<0.000000e+00> : vector<4x8x8xf32>
    %39 = tpu.matmul %38, %18, %cst_27 {dimension_numbers = #tpu.dot_dimension_numbers<[2], [1], [1], [2], [0, 0, 0, 1, 1, 2], [0], [0]>} : vector<4x8x8xbf16>, vector<4x8x8xbf16>, vector<4x8x8xf32> -> vector<4x8x8xf32>
    "tpu.trace_stop"() : () -> ()
    %cst_28 = arith.constant 1.000000e+00 : f32
    %40 = vector.broadcast %cst_28 : f32 to vector<4x8x1xf32>
    %41 = arith.divf %40, %37 : vector<4x8x1xf32>
    %42 = vector.broadcast %41 : vector<4x8x1xf32> to vector<4x8x8xf32>
    %43 = arith.mulf %39, %42 : vector<4x8x8xf32>
    %44 = vector.extract_strided_slice %43 {offsets = [0, 0, 0], sizes = [1, 8, 8], strides = [1, 1, 1]} : vector<4x8x8xf32> to vector<1x8x8xf32>
    %45 = vector.shape_cast %44 : vector<1x8x8xf32> to vector<8x8xf32>
    %46 = vector.extract_strided_slice %43 {offsets = [1, 0, 0], sizes = [1, 8, 8], strides = [1, 1, 1]} : vector<4x8x8xf32> to vector<1x8x8xf32>
    %47 = vector.shape_cast %46 : vector<1x8x8xf32> to vector<8x8xf32>
    %48 = vector.extract_strided_slice %43 {offsets = [2, 0, 0], sizes = [1, 8, 8], strides = [1, 1, 1]} : vector<4x8x8xf32> to vector<1x8x8xf32>
    %49 = vector.shape_cast %48 : vector<1x8x8xf32> to vector<8x8xf32>
    %50 = vector.extract_strided_slice %43 {offsets = [3, 0, 0], sizes = [1, 8, 8], strides = [1, 1, 1]} : vector<4x8x8xf32> to vector<1x8x8xf32>
    %51 = vector.shape_cast %50 : vector<1x8x8xf32> to vector<8x8xf32>
    %52 = tpu.concatenate %45, %47, %49, %51 in 1 : vector<8x8xf32>, vector<8x8xf32>, vector<8x8xf32>, vector<8x8xf32> -> vector<8x32xf32>
    %53 = arith.truncf %52 : vector<8x32xf32> to vector<8x32xbf16>
    %c0_29 = arith.constant 0 : index
    %c0_30 = arith.constant 0 : index
    %54 = vector.load %arg6[%c0_29, %c0_30] : memref<32x32xbf16, #tpu.memory_space<vmem>>, vector<32x32xbf16>
    %cst_31 = arith.constant dense<0.000000e+00> : vector<8x32xf32>
    %55 = tpu.matmul %53, %54, %cst_31 {dimension_numbers = #tpu.dot_dimension_numbers<[1], [0], [0], [1], [0, 0, 1, 1], [], []>} : vector<8x32xbf16>, vector<32x32xbf16>, vector<8x32xf32> -> vector<8x32xf32>
    %c0_32 = arith.constant 0 : index
    %c0_33 = arith.constant 0 : index
    %56 = vector.load %arg7[%c0_32, %c0_33] : memref<1x32xf32, #tpu.memory_space<vmem>>, vector<1x32xf32>
    %57 = vector.broadcast %56 : vector<1x32xf32> to vector<8x32xf32>
    %58 = arith.addf %55, %57 : vector<8x32xf32>
    %59 = arith.addf %11, %58 : vector<8x32xf32>
    %cst_34 = arith.constant dense<0.000000e+00> : vector<8xf32>
    %60 = vector.multi_reduction <add>, %59, %cst_34 [1] : vector<8x32xf32> to vector<8xf32>
    %61 = vector.shape_cast %60 : vector<8xf32> to vector<8x1xf32>
    %cst_35 = arith.constant 3.200000e+01 : f32
    %62 = vector.broadcast %cst_35 : f32 to vector<8x1xf32>
    %63 = arith.divf %61, %62 : vector<8x1xf32>
    %64 = vector.broadcast %63 : vector<8x1xf32> to vector<8x32xf32>
    %65 = arith.subf %59, %64 : vector<8x32xf32>
    %66 = arith.mulf %65, %65 : vector<8x32xf32>
    %cst_36 = arith.constant dense<0.000000e+00> : vector<8xf32>
    %67 = vector.multi_reduction <add>, %66, %cst_36 [1] : vector<8x32xf32> to vector<8xf32>
    %68 = vector.shape_cast %67 : vector<8xf32> to vector<8x1xf32>
    %cst_37 = arith.constant 0.0322580636 : f32
    %69 = vector.broadcast %cst_37 : f32 to vector<8x1xf32>
    %70 = arith.mulf %68, %69 : vector<8x1xf32>
    %71 = vector.broadcast %2 : f32 to vector<8x32xf32>
    %72 = arith.mulf %71, %65 : vector<8x32xf32>
    %73 = math.sqrt %70 : vector<8x1xf32>
    %cst_38 = arith.constant 9.99999997E-7 : f32
    %74 = vector.broadcast %cst_38 : f32 to vector<8x1xf32>
    %75 = arith.addf %73, %74 : vector<8x1xf32>
    %76 = vector.broadcast %75 : vector<8x1xf32> to vector<8x32xf32>
    %77 = arith.divf %72, %76 : vector<8x32xf32>
    %78 = vector.broadcast %3 : f32 to vector<8x32xf32>
    %79 = arith.addf %77, %78 : vector<8x32xf32>
    %80 = arith.truncf %79 : vector<8x32xf32> to vector<8x32xbf16>
    %c0_39 = arith.constant 0 : index
    %c0_40 = arith.constant 0 : index
    %81 = vector.load %arg8[%c0_39, %c0_40] : memref<32x64xbf16, #tpu.memory_space<vmem>>, vector<32x64xbf16>
    %cst_41 = arith.constant dense<0.000000e+00> : vector<8x64xf32>
    %82 = tpu.matmul %80, %81, %cst_41 {dimension_numbers = #tpu.dot_dimension_numbers<[1], [0], [0], [1], [0, 0, 1, 1], [], []>} : vector<8x32xbf16>, vector<32x64xbf16>, vector<8x64xf32> -> vector<8x64xf32>
    %c0_42 = arith.constant 0 : index
    %c0_43 = arith.constant 0 : index
    %83 = vector.load %arg9[%c0_42, %c0_43] : memref<1x64xf32, #tpu.memory_space<vmem>>, vector<1x64xf32>
    %84 = vector.broadcast %83 : vector<1x64xf32> to vector<8x64xf32>
    %85 = arith.addf %82, %84 : vector<8x64xf32>
    %cst_44 = arith.constant 0.000000e+00 : f32
    %86 = vector.broadcast %cst_44 : f32 to vector<8x64xf32>
    %87 = arith.maximumf %85, %86 : vector<8x64xf32>
    %88 = arith.truncf %87 : vector<8x64xf32> to vector<8x64xbf16>
    %c0_45 = arith.constant 0 : index
    %c0_46 = arith.constant 0 : index
    %89 = vector.load %arg10[%c0_45, %c0_46] : memref<64x32xbf16, #tpu.memory_space<vmem>>, vector<64x32xbf16>
    %cst_47 = arith.constant dense<0.000000e+00> : vector<8x32xf32>
    %90 = tpu.matmul %88, %89, %cst_47 {dimension_numbers = #tpu.dot_dimension_numbers<[1], [0], [0], [1], [0, 0, 1, 1], [], []>} : vector<8x64xbf16>, vector<64x32xbf16>, vector<8x32xf32> -> vector<8x32xf32>
    %c0_48 = arith.constant 0 : index
    %c0_49 = arith.constant 0 : index
    %91 = vector.load %arg11[%c0_48, %c0_49] : memref<1x32xf32, #tpu.memory_space<vmem>>, vector<1x32xf32>
    %92 = vector.broadcast %91 : vector<1x32xf32> to vector<8x32xf32>
    %93 = arith.addf %90, %92 : vector<8x32xf32>
    %94 = arith.addf %59, %93 : vector<8x32xf32>
    %c0_50 = arith.constant 0 : index
    %c0_51 = arith.constant 0 : index
    %c0_52 = arith.constant 0 : index
    %95 = vector.load %arg13[%c0_50, %c0_51, %c0_52] : memref<1x8x32xf32, #tpu.memory_space<vmem>>, vector<1x8x32xf32>
    %96 = vector.shape_cast %95 : vector<1x8x32xf32> to vector<8x32xf32>
    %97 = vector.shape_cast %94 : vector<8x32xf32> to vector<1x8x32xf32>
    tpu.vector_store %arg13[%c0_50, %c0_51, %c0_52], %97 {strides = array<i32>} : memref<1x8x32xf32, #tpu.memory_space<vmem>>, vector<1x8x32xf32>,
    return
  }
  func.func @transform_0(%arg0: i32, %arg1: i32) -> (i32, i32, i32) {
    %c0_i32 = arith.constant 0 : i32
    %c0_i32_0 = arith.constant 0 : i32
    %c0_i32_1 = arith.constant 0 : i32
    return %arg0, %c0_i32, %c0_i32_0 : i32, i32, i32
  }
  func.func @transform_1(%arg0: i32, %arg1: i32) -> (i32, i32, i32) {
    %c0_i32 = arith.constant 0 : i32
    %c0_i32_0 = arith.constant 0 : i32
    return %arg0, %arg1, %c0_i32 : i32, i32, i32
  }
  func.func @transform_2(%arg0: i32, %arg1: i32) -> (i32, i32) {
    %c0_i32 = arith.constant 0 : i32
    %c0_i32_0 = arith.constant 0 : i32
    %c0_i32_1 = arith.constant 0 : i32
    return %c0_i32, %c0_i32_0 : i32, i32
  }
  func.func @transform_3(%arg0: i32, %arg1: i32) -> (i32, i32) {
    %c0_i32 = arith.constant 0 : i32
    %c0_i32_0 = arith.constant 0 : i32
    %c0_i32_1 = arith.constant 0 : i32
    return %c0_i32, %c0_i32_0 : i32, i32
  }
  func.func @transform_4(%arg0: i32, %arg1: i32) -> (i32, i32) {
    %c0_i32 = arith.constant 0 : i32
    %c0_i32_0 = arith.constant 0 : i32
    %c0_i32_1 = arith.constant 0 : i32
    return %c0_i32, %c0_i32_0 : i32, i32
  }
  func.func @transform_5(%arg0: i32, %arg1: i32) -> (i32, i32) {
    %c0_i32 = arith.constant 0 : i32
    %c0_i32_0 = arith.constant 0 : i32
    %c0_i32_1 = arith.constant 0 : i32
    return %c0_i32, %c0_i32_0 : i32, i32
  }
  func.func @transform_6(%arg0: i32, %arg1: i32) -> (i32, i32) {
    %c0_i32 = arith.constant 0 : i32
    %c0_i32_0 = arith.constant 0 : i32
    %c0_i32_1 = arith.constant 0 : i32
    return %c0_i32, %c0_i32_0 : i32, i32
  }
  func.func @transform_7(%arg0: i32, %arg1: i32) -> (i32, i32) {
    %c0_i32 = arith.constant 0 : i32
    %c0_i32_0 = arith.constant 0 : i32
    %c0_i32_1 = arith.constant 0 : i32
    return %c0_i32, %c0_i32_0 : i32, i32
  }
  func.func @transform_8(%arg0: i32, %arg1: i32) -> (i32, i32) {
    %c0_i32 = arith.constant 0 : i32
    %c0_i32_0 = arith.constant 0 : i32
    %c0_i32_1 = arith.constant 0 : i32
    return %c0_i32, %c0_i32_0 : i32, i32
  }
  func.func @transform_9(%arg0: i32, %arg1: i32) -> (i32, i32) {
    %c0_i32 = arith.constant 0 : i32
    %c0_i32_0 = arith.constant 0 : i32
    %c0_i32_1 = arith.constant 0 : i32
    return %c0_i32, %c0_i32_0 : i32, i32
  }
  func.func @transform_10(%arg0: i32, %arg1: i32) -> (i32, i32) {
    %c0_i32 = arith.constant 0 : i32
    %c0_i32_0 = arith.constant 0 : i32
    %c0_i32_1 = arith.constant 0 : i32
    return %c0_i32, %c0_i32_0 : i32, i32
  }
  func.func @transform_11(%arg0: i32, %arg1: i32) -> (i32, i32, i32) {
    %c0_i32 = arith.constant 0 : i32
    %c0_i32_0 = arith.constant 0 : i32
    return %arg0, %arg1, %c0_i32 : i32, i32, i32
  }
}

</mosaic_0001>

<llo_original>
// kernel: tpu_custom_call.1
$region0: #{tpu_custom_call.1}
  #allocation0 [shape = 'u32[]', space=smem, size = 0x4, offset = 0x4, fixed_abs, tag = 'smem constant byte address 0x4 - core index']
  #allocation1 [shape = 'u32[144,128]{1,0:T(1,128)}', space=vmem, size = 0x12000, scoped, tag = 'internal scratch']
  #allocation2 [shape = 'bf16[3,4,8,8]{3,2,1,0:T(8,128)(2,1)}', space=vmem, size = 0x6000, scoped, tag = 'scratch operand']
  %s0 = inlined_call_operand.vmem [shape: f32[2,8,32], index: 0, kind: input, shape index: {}]
  %s1 = inlined_call_operand.hbm [shape: s8[2,8,8], index: 1, kind: input, shape index: {}]
  %s2 = inlined_call_operand.vmem [shape: bf16[32,96], index: 2, kind: input, shape index: {}]
  %s3 = inlined_call_operand.vmem [shape: f32[1,96], index: 3, kind: input, shape index: {}]
  %s4 = inlined_call_operand.vmem [shape: bf16[32,32], index: 4, kind: input, shape index: {}]
  %s5 = inlined_call_operand.vmem [shape: f32[1,32], index: 5, kind: input, shape index: {}]
  %s6 = inlined_call_operand.hbm [shape: bf16[32,64], index: 6, kind: input, shape index: {}]
  %s7 = inlined_call_operand.vmem [shape: f32[1,64], index: 7, kind: input, shape index: {}]
  %s8 = inlined_call_operand.vmem [shape: bf16[64,32], index: 8, kind: input, shape index: {}]
  %s9 = inlined_call_operand.vmem [shape: f32[1,32], index: 9, kind: input, shape index: {}]
  %s10 = inlined_call_operand.vmem [shape: f32[2,2], index: 10, kind: input, shape index: {}]
  %s11 = inlined_call_operand.hbm [shape: f32[2,8,32], index: 11, kind: output, shape index: {}]
  %s12 = sld [smem:[#allocation0]]
  $region93: #{tpu_custom_call.1} parent=0
    _
  %s14 = ssub.s32 1, %s12
  %s15 = scalar_select 0, %s14, %s12
  $region1: #{tpu_custom_call.1} parent=0
    #allocation3 [shape = 'u8[2048]{0}', space=vmem, size = 0x800, scoped, tag = 'input window, operand 1']
    #allocation4 [shape = 's32[2]{0}', space=sflag, size = 0x8, scoped, tag = 'scoped memory for tpu_custom_call.1']
    #allocation5 [shape = 's32[2]{0}', space=sflag, size = 0x8, scoped, tag = 'scoped memory for tpu_custom_call.1']
    #allocation6 [shape = 's32[2]{0}', space=sflag, size = 0x8, scoped, tag = 'scoped memory for tpu_custom_call.1']
    #allocation7 [shape = 'u8[8192]{0}', space=vmem, size = 0x2000, scoped, tag = 'input window, operand 6, single buffered']
    #allocation8 [shape = 's32[1]{0}', space=sflag, size = 0x4, scoped, tag = 'scoped memory for tpu_custom_call.1']
    #allocation9 [shape = 'u8[1024]{0}', space=smem, size = 0x400, scoped, tag = 'input window, operand 10, single buffered']
    #allocation10 [shape = 'u8[8192]{0}', space=vmem, size = 0x2000, scoped, tag = 'output window, operand 0']
    %16 = vsyncpa [#allocation4], 0
    %s17 = scalar_lea.sflag [#allocation4], 1
    %18 = vsyncpa %s17, 0
    %19 = vsyncpa [#allocation8], 0
    %20 = vsyncpa [#allocation6], 0
    %21 = vsyncpa [#allocation5], 0
    %s22 = scalar_lea.sflag [#allocation5], 1
    %23 = vsyncpa %s22, 0
    loop: start=0, step=1, limit=4
    $region2: #{tpu_custom_call.1} parent=1 // loop_pre_header
      _
    $region3: #{tpu_custom_call.1} parent=1 // loop_header
      %s25 = sphi 0, %s29
      %p26 = scmp.ge.s32.totalorder %s25, 4
      %s32 = sphi 0, %s44
      %s33 = sphi 0, %s40
      %s34 = sphi 0, %s32
      %s35 = sphi 0, %s33
      %s36 = sphi 0, %s34
      %s37 = sphi 0, %s35
      %s47 = sphi 0, %s49
      %s50 = sphi 0, %s47
      %s51 = sphi 0, %s50
      %s67 = sphi 0, %s51
      %s75 = sphi 0, %s77
      %s78 = sphi 0, %s75
      %s79 = sphi 0, %s78
      %s95 = sphi 0, %s79
      %s99 = sphi 0, %s99
      %s101 = sphi 0, %s99
      %s102 = sphi 0, %s101
      %s116 = sphi 0, %s102
      %s120 = sphi 0, %s120
      %s122 = sphi 0, %s120
      %s123 = sphi 0, %s122
      %s137 = sphi 0, %s123
      %s141 = sphi 0, %s141
      %s143 = sphi 0, %s141
      %s144 = sphi 0, %s143
      %s158 = sphi 0, %s144
      %s162 = sphi 0, %s162
      %s164 = sphi 0, %s162
      %s165 = sphi 0, %s164
      %s179 = sphi 0, %s165
      %s183 = sphi 0, %s183
      %s185 = sphi 0, %s183
      %s186 = sphi 0, %s185
      %s200 = sphi 0, %s186
      %s204 = sphi 0, %s204
      %s206 = sphi 0, %s204
      %s207 = sphi 0, %s206
      %s221 = sphi 0, %s207
      %s225 = sphi 0, %s225
      %s227 = sphi 0, %s225
      %s228 = sphi 0, %s227
      %s242 = sphi 0, %s228
      %s246 = sphi 0, %s246
      %s248 = sphi 0, %s246
      %s249 = sphi 0, %s248
      %s263 = sphi 0, %s249
      %s267 = sphi 0, %s267
      %s269 = sphi 0, %s267
      %s270 = sphi 0, %s269
      %s284 = sphi 0, %s270
      %s292 = sphi 0, %s294
      %s295 = sphi 0, %s292
      %s296 = sphi 0, %s295
      %s312 = sphi 0, %s296
    $region4: #{tpu_custom_call.1} parent=1 // loop_header_branch
      %28 = sbr.rel (%p26) target = $region8
    $region5: #{tpu_custom_call.1} parent=1 // loop_body
      %s30 = ssub.s32 %s25, 1
      %s31 = ssub.s32 %s25, 2
      %s38 = sadd.s32 1, %s33
      %p39 = scmp.ge.s32.totalorder %s38, 1
      %s40 = scalar_select %p39, 0, %s38
      %s41 = sadd.s32 1, %s32
      %s42 = scalar_select %p39, %s41, %s32
      %p43 = scmp.ge.s32.totalorder %s42, 2
      %s44 = scalar_select %p43, 0, %s42
      %s45 = ssub.s32 %s32, %s44
      %p46 = scmp.eq.s32.totalorder %s45, 0
      %s48 = sadd.s32 %s47, 1
      %s49 = scalar_select %p46, %s47, %s48
      %p52 = pneg %p46
      %p53 = scmp.eq.s32.totalorder %s25, 1
      %p54 = por %p52, %p53
      %p55 = scmp.ne.s32.totalorder %s47, %s50
      %p56 = scmp.eq.s32.totalorder %s25, 0
      %p57 = por %p55, %p56
      %p58 = scmp.ne.s32.totalorder %s47, %s50
      %p59 = scmp.eq.s32.totalorder %s30, 1
      %p60 = por %p58, %p59
      %p61 = scmp.ne.s32.totalorder %s50, %s51
      %p62 = scmp.eq.s32.totalorder %s30, 0
      %p63 = por %p61, %p62
      %p64 = scmp.ne.s32.totalorder %s50, %s51
      %p65 = scmp.eq.s32.totalorder %s31, 1
      %p66 = por %p64, %p65
      %p68 = scmp.ne.s32.totalorder %s51, %s67
      %p69 = scmp.eq.s32.totalorder %s31, 0
      %p70 = por %p68, %p69
      %s71 = ssub.s32 %s32, %s44
      %s72 = ssub.s32 %s33, %s40
      %s73 = sor.u32 %s71, %s72
      %p74 = scmp.eq.s32.totalorder %s73, 0
      %s76 = sadd.s32 %s75, 1
      %s77 = scalar_select %p74, %s75, %s76
      %p80 = pneg %p74
      %p81 = scmp.eq.s32.totalorder %s25, 1
      %p82 = por %p80, %p81
      %p83 = scmp.ne.s32.totalorder %s75, %s78
      %p84 = scmp.eq.s32.totalorder %s25, 0
      %p85 = por %p83, %p84
      %p86 = scmp.ne.s32.totalorder %s75, %s78
      %p87 = scmp.eq.s32.totalorder %s30, 1
      %p88 = por %p86, %p87
      %p89 = scmp.ne.s32.totalorder %s78, %s79
      %p90 = scmp.eq.s32.totalorder %s30, 0
      %p91 = por %p89, %p90
      %p92 = scmp.ne.s32.totalorder %s78, %s79
      %p93 = scmp.eq.s32.totalorder %s31, 1
      %p94 = por %p92, %p93
      %p96 = scmp.ne.s32.totalorder %s79, %s95
      %p97 = scmp.eq.s32.totalorder %s31, 0
      %p98 = por %p96, %p97
      %s100 = sadd.s32 %s99, 1
      %p103 = scmp.eq.s32.totalorder %s25, 1
      %p104 = scmp.ne.s32.totalorder %s99, %s101
      %p105 = scmp.eq.s32.totalorder %s25, 0
      %p106 = por %p104, %p105
      %p107 = scmp.ne.s32.totalorder %s99, %s101
      %p108 = scmp.eq.s32.totalorder %s30, 1
      %p109 = por %p107, %p108
      %p110 = scmp.ne.s32.totalorder %s101, %s102
      %p111 = scmp.eq.s32.totalorder %s30, 0
      %p112 = por %p110, %p111
      %p113 = scmp.ne.s32.totalorder %s101, %s102
      %p114 = scmp.eq.s32.totalorder %s31, 1
      %p115 = por %p113, %p114
      %p117 = scmp.ne.s32.totalorder %s102, %s116
      %p118 = scmp.eq.s32.totalorder %s31, 0
      %p119 = por %p117, %p118
      %s121 = sadd.s32 %s120, 1
      %p124 = scmp.eq.s32.totalorder %s25, 1
      %p125 = scmp.ne.s32.totalorder %s120, %s122
      %p126 = scmp.eq.s32.totalorder %s25, 0
      %p127 = por %p125, %p126
      %p128 = scmp.ne.s32.totalorder %s120, %s122
      %p129 = scmp.eq.s32.totalorder %s30, 1
      %p130 = por %p128, %p129
      %p131 = scmp.ne.s32.totalorder %s122, %s123
      %p132 = scmp.eq.s32.totalorder %s30, 0
      %p133 = por %p131, %p132
      %p134 = scmp.ne.s32.totalorder %s122, %s123
      %p135 = scmp.eq.s32.totalorder %s31, 1
      %p136 = por %p134, %p135
      %p138 = scmp.ne.s32.totalorder %s123, %s137
      %p139 = scmp.eq.s32.totalorder %s31, 0
      %p140 = por %p138, %p139
      %s142 = sadd.s32 %s141, 1
      %p145 = scmp.eq.s32.totalorder %s25, 1
      %p146 = scmp.ne.s32.totalorder %s141, %s143
      %p147 = scmp.eq.s32.totalorder %s25, 0
      %p148 = por %p146, %p147
      %p149 = scmp.ne.s32.totalorder %s141, %s143
      %p150 = scmp.eq.s32.totalorder %s30, 1
      %p151 = por %p149, %p150
      %p152 = scmp.ne.s32.totalorder %s143, %s144
      %p153 = scmp.eq.s32.totalorder %s30, 0
      %p154 = por %p152, %p153
      %p155 = scmp.ne.s32.totalorder %s143, %s144
      %p156 = scmp.eq.s32.totalorder %s31, 1
      %p157 = por %p155, %p156
      %p159 = scmp.ne.s32.totalorder %s144, %s158
      %p160 = scmp.eq.s32.totalorder %s31, 0
      %p161 = por %p159, %p160
      %s163 = sadd.s32 %s162, 1
      %p166 = scmp.eq.s32.totalorder %s25, 1
      %p167 = scmp.ne.s32.totalorder %s162, %s164
      %p168 = scmp.eq.s32.totalorder %s25, 0
      %p169 = por %p167, %p168
      %p170 = scmp.ne.s32.totalorder %s162, %s164
      %p171 = scmp.eq.s32.totalorder %s30, 1
      %p172 = por %p170, %p171
      %p173 = scmp.ne.s32.totalorder %s164, %s165
      %p174 = scmp.eq.s32.totalorder %s30, 0
      %p175 = por %p173, %p174
      %p176 = scmp.ne.s32.totalorder %s164, %s165
      %p177 = scmp.eq.s32.totalorder %s31, 1
      %p178 = por %p176, %p177
      %p180 = scmp.ne.s32.totalorder %s165, %s179
      %p181 = scmp.eq.s32.totalorder %s31, 0
      %p182 = por %p180, %p181
      %s184 = sadd.s32 %s183, 1
      %p187 = scmp.eq.s32.totalorder %s25, 1
      %p188 = scmp.ne.s32.totalorder %s183, %s185
      %p189 = scmp.eq.s32.totalorder %s25, 0
      %p190 = por %p188, %p189
      %p191 = scmp.ne.s32.totalorder %s183, %s185
      %p192 = scmp.eq.s32.totalorder %s30, 1
      %p193 = por %p191, %p192
      %p194 = scmp.ne.s32.totalorder %s185, %s186
      %p195 = scmp.eq.s32.totalorder %s30, 0
      %p196 = por %p194, %p195
      %p197 = scmp.ne.s32.totalorder %s185, %s186
      %p198 = scmp.eq.s32.totalorder %s31, 1
      %p199 = por %p197, %p198
      %p201 = scmp.ne.s32.totalorder %s186, %s200
      %p202 = scmp.eq.s32.totalorder %s31, 0
      %p203 = por %p201, %p202
      %s205 = sadd.s32 %s204, 1
      %p208 = scmp.eq.s32.totalorder %s25, 1
      %p209 = scmp.ne.s32.totalorder %s204, %s206
      %p210 = scmp.eq.s32.totalorder %s25, 0
      %p211 = por %p209, %p210
      %p212 = scmp.ne.s32.totalorder %s204, %s206
      %p213 = scmp.eq.s32.totalorder %s30, 1
      %p214 = por %p212, %p213
      %p215 = scmp.ne.s32.totalorder %s206, %s207
      %p216 = scmp.eq.s32.totalorder %s30, 0
      %p217 = por %p215, %p216
      %p218 = scmp.ne.s32.totalorder %s206, %s207
      %p219 = scmp.eq.s32.totalorder %s31, 1
      %p220 = por %p218, %p219
      %p222 = scmp.ne.s32.totalorder %s207, %s221
      %p223 = scmp.eq.s32.totalorder %s31, 0
      %p224 = por %p222, %p223
      %s226 = sadd.s32 %s225, 1
      %p229 = scmp.eq.s32.totalorder %s25, 1
      %p230 = scmp.ne.s32.totalorder %s225, %s227
      %p231 = scmp.eq.s32.totalorder %s25, 0
      %p232 = por %p230, %p231
      %p233 = scmp.ne.s32.totalorder %s225, %s227
      %p234 = scmp.eq.s32.totalorder %s30, 1
      %p235 = por %p233, %p234
      %p236 = scmp.ne.s32.totalorder %s227, %s228
      %p237 = scmp.eq.s32.totalorder %s30, 0
      %p238 = por %p236, %p237
      %p239 = scmp.ne.s32.totalorder %s227, %s228
      %p240 = scmp.eq.s32.totalorder %s31, 1
      %p241 = por %p239, %p240
      %p243 = scmp.ne.s32.totalorder %s228, %s242
      %p244 = scmp.eq.s32.totalorder %s31, 0
      %p245 = por %p243, %p244
      %s247 = sadd.s32 %s246, 1
      %p250 = scmp.eq.s32.totalorder %s25, 1
      %p251 = scmp.ne.s32.totalorder %s246, %s248
      %p252 = scmp.eq.s32.totalorder %s25, 0
      %p253 = por %p251, %p252
      %p254 = scmp.ne.s32.totalorder %s246, %s248
      %p255 = scmp.eq.s32.totalorder %s30, 1
      %p256 = por %p254, %p255
      %p257 = scmp.ne.s32.totalorder %s248, %s249
      %p258 = scmp.eq.s32.totalorder %s30, 0
      %p259 = por %p257, %p258
      %p260 = scmp.ne.s32.totalorder %s248, %s249
      %p261 = scmp.eq.s32.totalorder %s31, 1
      %p262 = por %p260, %p261
      %p264 = scmp.ne.s32.totalorder %s249, %s263
      %p265 = scmp.eq.s32.totalorder %s31, 0
      %p266 = por %p264, %p265
      %s268 = sadd.s32 %s267, 1
      %p271 = scmp.eq.s32.totalorder %s25, 1
      %p272 = scmp.ne.s32.totalorder %s267, %s269
      %p273 = scmp.eq.s32.totalorder %s25, 0
      %p274 = por %p272, %p273
      %p275 = scmp.ne.s32.totalorder %s267, %s269
      %p276 = scmp.eq.s32.totalorder %s30, 1
      %p277 = por %p275, %p276
      %p278 = scmp.ne.s32.totalorder %s269, %s270
      %p279 = scmp.eq.s32.totalorder %s30, 0
      %p280 = por %p278, %p279
      %p281 = scmp.ne.s32.totalorder %s269, %s270
      %p282 = scmp.eq.s32.totalorder %s31, 1
      %p283 = por %p281, %p282
      %p285 = scmp.ne.s32.totalorder %s270, %s284
      %p286 = scmp.eq.s32.totalorder %s31, 0
      %p287 = por %p285, %p286
      %s288 = ssub.s32 %s32, %s44
      %s289 = ssub.s32 %s33, %s40
      %s290 = sor.u32 %s288, %s289
      %p291 = scmp.eq.s32.totalorder %s290, 0
      %s293 = sadd.s32 %s292, 1
      %s294 = scalar_select %p291, %s292, %s293
      %p297 = pneg %p291
      %p298 = scmp.eq.s32.totalorder %s25, 1
      %p299 = por %p297, %p298
      %p300 = scmp.ne.s32.totalorder %s292, %s295
      %p301 = scmp.eq.s32.totalorder %s25, 0
      %p302 = por %p300, %p301
      %p303 = scmp.ne.s32.totalorder %s292, %s295
      %p304 = scmp.eq.s32.totalorder %s30, 1
      %p305 = por %p303, %p304
      %p306 = scmp.ne.s32.totalorder %s295, %s296
      %p307 = scmp.eq.s32.totalorder %s30, 0
      %p308 = por %p306, %p307
      %p309 = scmp.ne.s32.totalorder %s295, %s296
      %p310 = scmp.eq.s32.totalorder %s31, 1
      %p311 = por %p309, %p310
      %p313 = scmp.ne.s32.totalorder %s296, %s312
      %p314 = scmp.eq.s32.totalorder %s31, 0
      %p315 = por %p313, %p314
      %p316 = scmp.le.s32.totalorder 1, %s25
      %p317 = scmp.lt.s32.totalorder %s25, 3
      %p318 = pnand %p316, %p317
      %p319 = pneg %p318
      // Predicated region
      $region9: #{tpu_custom_call.1} parent=5 // pred_check
        _
      $region10: #{tpu_custom_call.1} parent=5 // pred_check_branch
        %321 = sbr.rel (%p318) target = $region12
      $region11: #{tpu_custom_call.1} parent=5 // pred_region
        %s322 = ssub.s32 %s25, 1
        // Predicated region
        $region13: #{tpu_custom_call.1} parent=11 // pred_check
          %p323 = pneg %p112
        $region14: #{tpu_custom_call.1} parent=11 // pred_check_branch
          %325 = sbr.rel (%p323) target = $region16
        $region15: #{tpu_custom_call.1} parent=11 // pred_region
          _
        $region16: #{tpu_custom_call.1} parent=11 // pred_fallthru
          _
        // Predicated region
        $region17: #{tpu_custom_call.1} parent=11 // pred_check
          %p326 = pneg %p133
        $region18: #{tpu_custom_call.1} parent=11 // pred_check_branch
          %328 = sbr.rel (%p326) target = $region20
        $region19: #{tpu_custom_call.1} parent=11 // pred_region
          _
        $region20: #{tpu_custom_call.1} parent=11 // pred_fallthru
          _
        // Predicated region
        $region21: #{tpu_custom_call.1} parent=11 // pred_check
          %p329 = pneg %p154
        $region22: #{tpu_custom_call.1} parent=11 // pred_check_branch
          %331 = sbr.rel (%p329) target = $region24
        $region23: #{tpu_custom_call.1} parent=11 // pred_region
          _
        $region24: #{tpu_custom_call.1} parent=11 // pred_fallthru
          _
        // Predicated region
        $region25: #{tpu_custom_call.1} parent=11 // pred_check
          %p332 = pneg %p175
        $region26: #{tpu_custom_call.1} parent=11 // pred_check_branch
          %334 = sbr.rel (%p332) target = $region28
        $region27: #{tpu_custom_call.1} parent=11 // pred_region
          _
        $region28: #{tpu_custom_call.1} parent=11 // pred_fallthru
          _
        // Predicated region
        $region29: #{tpu_custom_call.1} parent=11 // pred_check
          %p335 = pneg %p196
        $region30: #{tpu_custom_call.1} parent=11 // pred_check_branch
          %337 = sbr.rel (%p335) target = $region32
        $region31: #{tpu_custom_call.1} parent=11 // pred_region
          %s339 = ssub.s32 256, 256
          %340 = vsyncadd [#allocation8], %s339
          %s341 = sshll.u32 [#allocation7], 4
          %s342 = int_to_ptr.vmem [resolvable:$true] %s341
          %347 = dma.hbm_to_vmem [thread:$0]  %s6, 256, %s342, [#allocation8], 64, 64, 4
        $region32: #{tpu_custom_call.1} parent=11 // pred_fallthru
          _
        // Predicated region
        $region33: #{tpu_custom_call.1} parent=11 // pred_check
          %p348 = pneg %p217
        $region34: #{tpu_custom_call.1} parent=11 // pred_check_branch
          %350 = sbr.rel (%p348) target = $region36
        $region35: #{tpu_custom_call.1} parent=11 // pred_region
          _
        $region36: #{tpu_custom_call.1} parent=11 // pred_fallthru
          _
        // Predicated region
        $region37: #{tpu_custom_call.1} parent=11 // pred_check
          %p351 = pneg %p238
        $region38: #{tpu_custom_call.1} parent=11 // pred_check_branch
          %353 = sbr.rel (%p351) target = $region40
        $region39: #{tpu_custom_call.1} parent=11 // pred_region
          _
        $region40: #{tpu_custom_call.1} parent=11 // pred_fallthru
          _
        // Predicated region
        $region41: #{tpu_custom_call.1} parent=11 // pred_check
          %p354 = pneg %p259
        $region42: #{tpu_custom_call.1} parent=11 // pred_check_branch
          %356 = sbr.rel (%p354) target = $region44
        $region43: #{tpu_custom_call.1} parent=11 // pred_region
          _
        $region44: #{tpu_custom_call.1} parent=11 // pred_fallthru
          _
        // Predicated region
        $region45: #{tpu_custom_call.1} parent=11 // pred_check
          %p357 = pneg %p280
        $region46: #{tpu_custom_call.1} parent=11 // pred_check_branch
          %359 = sbr.rel (%p357) target = $region48
        $region47: #{tpu_custom_call.1} parent=11 // pred_region
          %s361 = ssub.s32 32, 32
          %362 = vsyncadd [#allocation6], %s361
          %s364 = sshll.u32 %s10, 4
          %s365 = int_to_ptr.vmem [resolvable:$true] %s364
          %367 = dma.vmem_to_smem %s365, 32, [#allocation9], [#allocation6]
        $region48: #{tpu_custom_call.1} parent=11 // pred_fallthru
          _
      $region12: #{tpu_custom_call.1} parent=5 // pred_fallthru
        _
      %p368 = scmp.lt.s32.totalorder %s25, 2
      // Predicated region
      $region49: #{tpu_custom_call.1} parent=5 // pred_check
        %p369 = pneg %p368
      $region50: #{tpu_custom_call.1} parent=5 // pred_check_branch
        %371 = sbr.rel (%p369) target = $region52
      $region51: #{tpu_custom_call.1} parent=5 // pred_region
        // Predicated region
        $region53: #{tpu_custom_call.1} parent=51 // pred_check
          %p372 = pneg %p57
        $region54: #{tpu_custom_call.1} parent=51 // pred_check_branch
          %374 = sbr.rel (%p372) target = $region56
        $region55: #{tpu_custom_call.1} parent=51 // pred_region
          %p375 = scmp.lt.s32.totalorder %s32, 1
          %s376 = scalar_select %p375, %s32, 1
          %s377 = smul.addr %s376, 8
          %s378 = scalar_lea.vmem %s0, %s377
        $region56: #{tpu_custom_call.1} parent=51 // pred_fallthru
          _
        // Predicated region
        $region57: #{tpu_custom_call.1} parent=51 // pred_check
          %p379 = pneg %p85
        $region58: #{tpu_custom_call.1} parent=51 // pred_check_branch
          %381 = sbr.rel (%p379) target = $region60
        $region59: #{tpu_custom_call.1} parent=51 // pred_region
          %s382 = sand.u32 %s75, 1
          %s383 = scalar_lea.sflag [#allocation4], %s382
          %s384 = sand.u32 %s75, 1
          %s385 = smul.addr %s384, 2
          %s386 = scalar_lea.vmem [#allocation3], %s385
          %s388 = ssub.s32 32, 32
          %389 = vsyncadd %s383, %s388
          %s390 = sadd.s32 %s33, %s32
          %s391 = smul.addr %s390, 32
          %s392 = scalar_lea.hbm %s1, %s391
          %s394 = sshll.u32 %s386, 4
          %s395 = int_to_ptr.vmem [resolvable:$true] %s394
          %397 = dma.hbm_to_vmem [thread:$0]  %s392, 32, %s395, %s383
        $region60: #{tpu_custom_call.1} parent=51 // pred_fallthru
          _
      $region52: #{tpu_custom_call.1} parent=5 // pred_fallthru
        _
      %p398 = scmp.le.s32.totalorder 1, %s25
      %p399 = scmp.lt.s32.totalorder %s25, 3
      %p400 = pnand %p398, %p399
      %p401 = pneg %p400
      // Predicated region
      $region61: #{tpu_custom_call.1} parent=5 // pred_check
        _
      $region62: #{tpu_custom_call.1} parent=5 // pred_check_branch
        %403 = sbr.rel (%p400) target = $region64
      $region63: #{tpu_custom_call.1} parent=5 // pred_region
        %s404 = ssub.s32 %s25, 1
        %s405 = sand.u32 %s78, 1
        %s406 = scalar_lea.sflag [#allocation4], %s405
        %s407 = sand.u32 %s78, 1
        %s408 = smul.addr %s407, 2
        %s409 = scalar_lea.vmem [#allocation3], %s408
        // Predicated region
        $region65: #{tpu_custom_call.1} parent=63 // pred_check
          %p410 = pneg %p91
        $region66: #{tpu_custom_call.1} parent=63 // pred_check_branch
          %412 = sbr.rel (%p410) target = $region68
        $region67: #{tpu_custom_call.1} parent=63 // pred_region
          %413 = dma.done %s406, 32
        $region68: #{tpu_custom_call.1} parent=63 // pred_fallthru
          _
        // Predicated region
        $region69: #{tpu_custom_call.1} parent=63 // pred_check
          %p414 = pneg %p196
        $region70: #{tpu_custom_call.1} parent=63 // pred_check_branch
          %416 = sbr.rel (%p414) target = $region72
        $region71: #{tpu_custom_call.1} parent=63 // pred_region
          %417 = dma.done [#allocation8], 256
        $region72: #{tpu_custom_call.1} parent=63 // pred_fallthru
          _
        // Predicated region
        $region73: #{tpu_custom_call.1} parent=63 // pred_check
          %p418 = pneg %p280
        $region74: #{tpu_custom_call.1} parent=63 // pred_check_branch
          %420 = sbr.rel (%p418) target = $region76
        $region75: #{tpu_custom_call.1} parent=63 // pred_region
          %421 = dma.done [#allocation6], 32
        $region76: #{tpu_custom_call.1} parent=63 // pred_fallthru
          _
        %422 = sfence
        %p423 = scmp.lt.s32.totalorder %s34, 1
        %s424 = scalar_select %p423, %s34, 1
        %s425 = smul.addr %s424, 8
        %s426 = scalar_lea.vmem %s0, %s425
        %p427 = pneg %p63
        %p428 = pneg %p60
        %s429 = sand.u32 %s78, 1
        %s430 = scalar_lea.sflag [#allocation4], %s429
        %s431 = sand.u32 %s78, 1
        %s432 = smul.addr %s431, 2
        %s433 = scalar_lea.vmem [#allocation3], %s432
        %p434 = pneg %p91
        %p435 = pneg %p88
        %p436 = pneg %p112
        %p437 = pneg %p109
        %p438 = pneg %p133
        %p439 = pneg %p130
        %p440 = pneg %p154
        %p441 = pneg %p151
        %p442 = pneg %p175
        %p443 = pneg %p172
        %p444 = pneg %p196
        %p445 = pneg %p193
        %p446 = pneg %p217
        %p447 = pneg %p214
        %p448 = pneg %p238
        %p449 = pneg %p235
        %p450 = pneg %p259
        %p451 = pneg %p256
        %p452 = pneg %p280
        %p453 = pneg %p277
        %p454 = pneg %p308
        %p455 = pneg %p305
        %s456 = sand.u32 %s295, 1
        %s457 = scalar_lea.sflag [#allocation5], %s456
        %s458 = sand.u32 %s295, 1
        %s459 = smul.addr %s458, 8
        %s460 = scalar_lea.vmem [#allocation10], %s459
        %p461 = scmp.lt.s32.totalorder %s34, 1
        %s462 = scalar_select %p461, %s34, 1
        %s463 = smul.addr %s462, 8
        %s464 = scalar_lea.vmem %s0, %s463
        %s466 = sld [smem:[#allocation9]]
        %s467 = sld [smem:[#allocation9 + $0x1]]
        %s468 = sld [smem:[#allocation9 + $0x80]]
        %s469 = sld [smem:[#allocation9 + $0x81]]
        %p470 = scmp.eq.s32.totalorder %s35, 0
        // Predicated region
        $region77: #{tpu_custom_call.1} parent=63 // pred_check
          %p471 = pneg %p470
        $region78: #{tpu_custom_call.1} parent=63 // pred_check_branch
          %473 = sbr.rel (%p471) target = $region80
        $region79: #{tpu_custom_call.1} parent=63 // pred_region
          %v474 = vld [vmem:[%s464] sm:$0xff]
          %vm475 = vcmask 261120
          %v476 = vsel %vm475, %v474, 0.0
          %477 = vadd.xlane.f32.xlu0 %v476
          %v478 = vpop.xlane.xlu0 %477
          %v479 = vrcp.pop 32.0
          %v480 = vmul.f32 %v478, %v479
          %v481 = vsub.f32 %v474, %v480
          %v482 = vmul.f32 %v481, %v481
          %v483 = vsel %vm475, %v482, 0.0
          %484 = vadd.xlane.f32.xlu0 %v483
          %v485 = vpop.xlane.xlu0 %484
          %v486 = vmul.f32 %v485, 0.032258064
          %v487 = vstv %s466
          %v488 = vmul.f32 %v487, %v481
          %v489 = vrsqrt.pop %v486
          %v490 = vmul.f32 %v486, %v489
          %vm491 = vcmp.eq.f32.partialorder %v486, inf
          %v492 = vsel %vm491, %v486, %v490
          %vm493 = vcmp.eq.f32.partialorder %v486, 0.0
          %v494 = vand.u32 %v486, 2147483648
          %v495 = vsel %vm493, %v494, %v492
          %v496 = vadd.f32 %v495, 1e-06
          %v497 = vrcp.pop %v496
          %v498 = vmul.f32 %v488, %v497
          %v499 = vstv %s467
          %v500 = vadd.f32 %v498, %v499
          %v501 = vpack.c.bf16 %v500, %v500
          %v502 = vld [vmem:[%s2] sm:$0xf]
          %v503 = vld [vmem:[%s2 + $0x4] sm:$0xf]
          %v504 = vld [vmem:[%s2 + $0x8] sm:$0xf]
          %v505 = vld [vmem:[%s2 + $0xc] sm:$0xf]
          %v506 = vld [vmem:[%s3] sm:$0x1]
          %v508 = vlaneseq
          %v509 = vshrl.u32 %v508, 7
          %v510 = vsub.s32 0, %v509
          %v511 = vrot.slane %v506, %v510
          %v517 = vunpack.c.l.b16 %v502
          %v518 = vunpack.c.l.b16 %v503
          %v519 = vunpack.c.l.b16 %v504
          %v520 = vunpack.c.l.b16 %v505
          %v521 = vpack.c.b16 %v518, %v517
          %v522 = vpack.c.b16 %v520, %v519
          %v526 = vsel %vm475, %v501, 0
          %528 = vmatprep.subr.bf16.mxu0 0
          %529 = vmatpush1.bf16.msra.mxu0 %v521
          %530 = vmatprep.subr.bf16.mxu0 0
          %531 = vmatpush1.bf16.msra.mxu0 %v522
          %532 = vmatprep.subr.bf16.mxu0 0
          %533 = vmatpush1.bf16.msra.mxu0 0
          %534 = vmatprep.subr.bf16.mxu0 0
          %535 = vmatpush1.bf16.msra.mxu0 0
          %536 = vmatprep.subr.bf16.mxu0 0
          %537 = vmatpush1.bf16.msra.mxu0 0
          %538 = vmatprep.subr.bf16.mxu0 0
          %539 = vmatpush1.bf16.msra.mxu0 0
          %540 = vmatprep.subr.bf16.mxu0 0
          %541 = vmatpush1.bf16.msra.mxu0 0
          %542 = vmatprep.subr.bf16.mxu0 0
          %543 = vmatpush1.bf16.msra.mxu0 0
          %544 = vmatprep.subr.bf16.mxu0 0
          %545 = vmatpush1.bf16.msra.mxu0 0
          %546 = vmatprep.subr.bf16.mxu0 0
          %547 = vmatpush1.bf16.msra.mxu0 0
          %548 = vmatprep.subr.bf16.mxu0 0
          %549 = vmatpush1.bf16.msra.mxu0 0
          %550 = vmatprep.subr.bf16.mxu0 0
          %551 = vmatpush1.bf16.msra.mxu0 0
          %552 = vmatprep.subr.bf16.mxu0 0
          %553 = vmatpush1.bf16.msra.mxu0 0
          %554 = vmatprep.subr.bf16.mxu0 0
          %555 = vmatpush1.bf16.msra.mxu0 0
          %556 = vmatprep.subr.bf16.mxu0 0
          %557 = vmatpush1.bf16.msra.mxu0 0
          %558 = vmatprep.subr.bf16.mxu0 0
          %559 = vmatpush1.bf16.msra.mxu0 0
          %560 = vmatprep.mubr.bf16.mxu0 0
          %561 = vmatmul.mubr.bf16.gmra.mrb[0].mxu0 %v526
          %v562 = vpop.f32.mrb[0].mxu0
          %v563 = vadd.f32 %v511, %v562
          %v564 = vpop.f32.mrb[0].mxu0
          %v565 = vpop.f32.mrb[0].mxu0
          %v566 = vpop.f32.mrb[0].mxu0
          %567 = vdwg.mxu0
          %v568 = vmul.f32 %v563, 0.35355338
          %570 = vrot.lane.b32.xlu0 %v568, 120
          %v571 = vpop.permute.xlu0 %570
          %573 = vrot.lane.b32.xlu0 %v568, 112
          %v574 = vpop.permute.xlu0 %573
          %576 = vrot.lane.b32.xlu0 %v568, 104
          %v577 = vpop.permute.xlu0 %576
          %v579 = vpack.c.bf16 %v568, %v568
          %v580 = vpack.c.bf16 %v571, %v571
          %v581 = vpack.c.bf16 %v574, %v574
          %v582 = vpack.c.bf16 %v577, %v577
          %vm583 = vcmask 60416
          %584 = vst.msk [vmem:[#allocation2] sm:$0xf] %vm583, %v579
          %585 = vst.msk [vmem:[#allocation2 + $0x4] sm:$0xf] %vm583, %v580
          %586 = vst.msk [vmem:[#allocation2 + $0x8] sm:$0xf] %vm583, %v581
          %587 = vst.msk [vmem:[#allocation2 + $0xc] sm:$0xf] %vm583, %v582
          %589 = vrot.lane.b32.xlu0 %v563, 120
          %v590 = vpop.permute.xlu0 %589
          %592 = vrot.lane.b32.xlu0 %v563, 112
          %v593 = vpop.permute.xlu0 %592
          %595 = vrot.lane.b32.xlu0 %v563, 104
          %v596 = vpop.permute.xlu0 %595
          %v598 = vpack.c.bf16 %v563, %v563
          %v599 = vpack.c.bf16 %v590, %v590
          %v600 = vpack.c.bf16 %v593, %v593
          %v601 = vpack.c.bf16 %v596, %v596
          %v606 = vunpack.c.l.b16 %v598
          %v607 = vunpack.c.l.b16 %v599
          %v608 = vunpack.c.l.b16 %v600
          %v609 = vunpack.c.l.b16 %v601
          %v610 = vpack.c.b16 %v606, %v606
          %v611 = vpack.c.b16 %v607, %v607
          %v612 = vpack.c.b16 %v608, %v608
          %v613 = vpack.c.b16 %v609, %v609
          %614 = vrot.lane.b32.xlu0 %v610, 96
          %v615 = vpop.permute.xlu0 %614
          %616 = vrot.lane.b32.xlu0 %v611, 96
          %v617 = vpop.permute.xlu0 %616
          %618 = vrot.lane.b32.xlu0 %v612, 96
          %v619 = vpop.permute.xlu0 %618
          %620 = vrot.lane.b32.xlu0 %v613, 96
          %v621 = vpop.permute.xlu0 %620
          %s626 = scalar_lea.vmem [#allocation2], 16
          %627 = vst.msk [vmem:[%s626] sm:$0xf] %vm583, %v615
          %628 = vst.msk [vmem:[%s626 + $0x4] sm:$0xf] %vm583, %v617
          %629 = vst.msk [vmem:[%s626 + $0x8] sm:$0xf] %vm583, %v619
          %630 = vst.msk [vmem:[%s626 + $0xc] sm:$0xf] %vm583, %v621
          %631 = vrot.lane.b32.xlu0 %v610, 64
          %v632 = vpop.permute.xlu0 %631
          %633 = vrot.lane.b32.xlu0 %v611, 64
          %v634 = vpop.permute.xlu0 %633
          %635 = vrot.lane.b32.xlu0 %v612, 64
          %v636 = vpop.permute.xlu0 %635
          %637 = vrot.lane.b32.xlu0 %v613, 64
          %v638 = vpop.permute.xlu0 %637
          %s643 = scalar_lea.vmem [#allocation2], 32
          %644 = vst.msk [vmem:[%s643] sm:$0xf] %vm583, %v632
          %645 = vst.msk [vmem:[%s643 + $0x4] sm:$0xf] %vm583, %v634
          %646 = vst.msk [vmem:[%s643 + $0x8] sm:$0xf] %vm583, %v636
          %647 = vst.msk [vmem:[%s643 + $0xc] sm:$0xf] %vm583, %v638
        $region80: #{tpu_custom_call.1} parent=63 // pred_fallthru
          _
        %s648 = smul.u32 %s35, 8
        %s649 = scalar_lea.vmem %s464, %s648
        %v650 = vld [vmem:[%s649] sm:$0xff]
        %s651 = sshra.s32 %s648, 3
        %s652 = sand.u32 %s648, 7
        %s653 = smul.addr %s651, 4
        %s654 = scalar_lea.vmem [#allocation2], %s653
        %v655 = vld [vmem:[%s654] sm:$0xf]
        %v656 = vld [vmem:[%s654 + $0x4] sm:$0xf]
        %v657 = vld [vmem:[%s654 + $0x8] sm:$0xf]
        %v658 = vld [vmem:[%s654 + $0xc] sm:$0xf]
        %s659 = scalar_lea.vmem [#allocation2], 16
        %v660 = vld [vmem:[%s659] sm:$0xf]
        %v661 = vld [vmem:[%s659 + $0x4] sm:$0xf]
        %v662 = vld [vmem:[%s659 + $0x8] sm:$0xf]
        %v663 = vld [vmem:[%s659 + $0xc] sm:$0xf]
        %s664 = scalar_lea.vmem [#allocation2], 32
        %v665 = vld [vmem:[%s664] sm:$0xf]
        %v666 = vld [vmem:[%s664 + $0x4] sm:$0xf]
        %v667 = vld [vmem:[%s664 + $0x8] sm:$0xf]
        %v668 = vld [vmem:[%s664 + $0xc] sm:$0xf]
        %v669 = vld [vmem:[%s409] sm:$0x3]
        %v670 = vunpack.c.0.s8 %v669
        %vm671 = vcmp.eq.s32.totalorder %v670, 0
        %v672 = vsel %vm671, -1e+09, 0.0
        %vm673 = vcmask 64512
        %v675 = vsel %vm673, %v655, 0
        %v678 = vsel %vm673, %v660, 0
        %680 = vmatprep.subr.bf16.mxu0 0
        %681 = vmatpush1.bf16.xpose.msra.mxu0 %v678
        %682 = vmatprep.subr.bf16.mxu0 0
        %683 = vmatpush1.bf16.xpose.msra.mxu0 0
        %684 = vmatprep.subr.bf16.mxu0 0
        %685 = vmatpush1.bf16.xpose.msra.mxu0 0
        %686 = vmatprep.subr.bf16.mxu0 0
        %687 = vmatpush1.bf16.xpose.msra.mxu0 0
        %688 = vmatprep.subr.bf16.mxu0 0
        %689 = vmatpush1.bf16.xpose.msra.mxu0 0
        %690 = vmatprep.subr.bf16.mxu0 0
        %691 = vmatpush1.bf16.xpose.msra.mxu0 0
        %692 = vmatprep.subr.bf16.mxu0 0
        %693 = vmatpush1.bf16.xpose.msra.mxu0 0
        %694 = vmatprep.subr.bf16.mxu0 0
        %695 = vmatpush1.bf16.xpose.msra.mxu0 0
        %696 = vmatprep.subr.bf16.mxu0 0
        %697 = vmatpush1.bf16.xpose.msra.mxu0 0
        %698 = vmatprep.subr.bf16.mxu0 0
        %699 = vmatpush1.bf16.xpose.msra.mxu0 0
        %700 = vmatprep.subr.bf16.mxu0 0
        %701 = vmatpush1.bf16.xpose.msra.mxu0 0
        %702 = vmatprep.subr.bf16.mxu0 0
        %703 = vmatpush1.bf16.xpose.msra.mxu0 0
        %704 = vmatprep.subr.bf16.mxu0 0
        %705 = vmatpush1.bf16.xpose.msra.mxu0 0
        %706 = vmatprep.subr.bf16.mxu0 0
        %707 = vmatpush1.bf16.xpose.msra.mxu0 0
        %708 = vmatprep.subr.bf16.mxu0 0
        %709 = vmatpush1.bf16.xpose.msra.mxu0 0
        %710 = vmatprep.subr.bf16.mxu0 0
        %711 = vmatpush1.bf16.xpose.msra.mxu0 0
        %712 = vmatprep.mubr.bf16.mxu0 0
        %713 = vmatmul.mubr.bf16.gmra.mrb[0].mxu0 %v675
        %v714 = vpop.f32.mrb[0].mxu0
        %v715 = vadd.f32 %v672, %v714
        %v716 = vpop.f32.mrb[0].mxu0
        %v717 = vpop.f32.mrb[0].mxu0
        %v718 = vpop.f32.mrb[0].mxu0
        %719 = vdwg.mxu0
        %v721 = vsel %vm673, %v656, 0
        %v724 = vsel %vm673, %v661, 0
        %726 = vmatprep.subr.bf16.mxu0 0
        %727 = vmatpush1.bf16.xpose.msra.mxu0 %v724
        %728 = vmatprep.subr.bf16.mxu0 0
        %729 = vmatpush1.bf16.xpose.msra.mxu0 0
        %730 = vmatprep.subr.bf16.mxu0 0
        %731 = vmatpush1.bf16.xpose.msra.mxu0 0
        %732 = vmatprep.subr.bf16.mxu0 0
        %733 = vmatpush1.bf16.xpose.msra.mxu0 0
        %734 = vmatprep.subr.bf16.mxu0 0
        %735 = vmatpush1.bf16.xpose.msra.mxu0 0
        %736 = vmatprep.subr.bf16.mxu0 0
        %737 = vmatpush1.bf16.xpose.msra.mxu0 0
        %738 = vmatprep.subr.bf16.mxu0 0
        %739 = vmatpush1.bf16.xpose.msra.mxu0 0
        %740 = vmatprep.subr.bf16.mxu0 0
        %741 = vmatpush1.bf16.xpose.msra.mxu0 0
        %742 = vmatprep.subr.bf16.mxu0 0
        %743 = vmatpush1.bf16.xpose.msra.mxu0 0
        %744 = vmatprep.subr.bf16.mxu0 0
        %745 = vmatpush1.bf16.xpose.msra.mxu0 0
        %746 = vmatprep.subr.bf16.mxu0 0
        %747 = vmatpush1.bf16.xpose.msra.mxu0 0
        %748 = vmatprep.subr.bf16.mxu0 0
        %749 = vmatpush1.bf16.xpose.msra.mxu0 0
        %750 = vmatprep.subr.bf16.mxu0 0
        %751 = vmatpush1.bf16.xpose.msra.mxu0 0
        %752 = vmatprep.subr.bf16.mxu0 0
        %753 = vmatpush1.bf16.xpose.msra.mxu0 0
        %754 = vmatprep.subr.bf16.mxu0 0
        %755 = vmatpush1.bf16.xpose.msra.mxu0 0
        %756 = vmatprep.subr.bf16.mxu0 0
        %757 = vmatpush1.bf16.xpose.msra.mxu0 0
        %758 = vmatprep.mubr.bf16.mxu0 0
        %759 = vmatmul.mubr.bf16.gmra.mrb[0].mxu0 %v721
        %v760 = vpop.f32.mrb[0].mxu0
        %v761 = vadd.f32 %v672, %v760
        %v762 = vpop.f32.mrb[0].mxu0
        %v763 = vpop.f32.mrb[0].mxu0
        %v764 = vpop.f32.mrb[0].mxu0
        %765 = vdwg.mxu0
        %v767 = vsel %vm673, %v657, 0
        %v770 = vsel %vm673, %v662, 0
        %772 = vmatprep.subr.bf16.mxu0 0
        %773 = vmatpush1.bf16.xpose.msra.mxu0 %v770
        %774 = vmatprep.subr.bf16.mxu0 0
        %775 = vmatpush1.bf16.xpose.msra.mxu0 0
        %776 = vmatprep.subr.bf16.mxu0 0
        %777 = vmatpush1.bf16.xpose.msra.mxu0 0
        %778 = vmatprep.subr.bf16.mxu0 0
        %779 = vmatpush1.bf16.xpose.msra.mxu0 0
        %780 = vmatprep.subr.bf16.mxu0 0
        %781 = vmatpush1.bf16.xpose.msra.mxu0 0
        %782 = vmatprep.subr.bf16.mxu0 0
        %783 = vmatpush1.bf16.xpose.msra.mxu0 0
        %784 = vmatprep.subr.bf16.mxu0 0
        %785 = vmatpush1.bf16.xpose.msra.mxu0 0
        %786 = vmatprep.subr.bf16.mxu0 0
        %787 = vmatpush1.bf16.xpose.msra.mxu0 0
        %788 = vmatprep.subr.bf16.mxu0 0
        %789 = vmatpush1.bf16.xpose.msra.mxu0 0
        %790 = vmatprep.subr.bf16.mxu0 0
        %791 = vmatpush1.bf16.xpose.msra.mxu0 0
        %792 = vmatprep.subr.bf16.mxu0 0
        %793 = vmatpush1.bf16.xpose.msra.mxu0 0
        %794 = vmatprep.subr.bf16.mxu0 0
        %795 = vmatpush1.bf16.xpose.msra.mxu0 0
        %796 = vmatprep.subr.bf16.mxu0 0
        %797 = vmatpush1.bf16.xpose.msra.mxu0 0
        %798 = vmatprep.subr.bf16.mxu0 0
        %799 = vmatpush1.bf16.xpose.msra.mxu0 0
        %800 = vmatprep.subr.bf16.mxu0 0
        %801 = vmatpush1.bf16.xpose.msra.mxu0 0
        %802 = vmatprep.subr.bf16.mxu0 0
        %803 = vmatpush1.bf16.xpose.msra.mxu0 0
        %804 = vmatprep.mubr.bf16.mxu0 0
        %805 = vmatmul.mubr.bf16.gmra.mrb[0].mxu0 %v767
        %v806 = vpop.f32.mrb[0].mxu0
        %v807 = vadd.f32 %v672, %v806
        %v808 = vpop.f32.mrb[0].mxu0
        %v809 = vpop.f32.mrb[0].mxu0
        %v810 = vpop.f32.mrb[0].mxu0
        %811 = vdwg.mxu0
        %v813 = vsel %vm673, %v658, 0
        %v816 = vsel %vm673, %v663, 0
        %818 = vmatprep.subr.bf16.mxu0 0
        %819 = vmatpush1.bf16.xpose.msra.mxu0 %v816
        %820 = vmatprep.subr.bf16.mxu0 0
        %821 = vmatpush1.bf16.xpose.msra.mxu0 0
        %822 = vmatprep.subr.bf16.mxu0 0
        %823 = vmatpush1.bf16.xpose.msra.mxu0 0
        %824 = vmatprep.subr.bf16.mxu0 0
        %825 = vmatpush1.bf16.xpose.msra.mxu0 0
        %826 = vmatprep.subr.bf16.mxu0 0
        %827 = vmatpush1.bf16.xpose.msra.mxu0 0
        %828 = vmatprep.subr.bf16.mxu0 0
        %829 = vmatpush1.bf16.xpose.msra.mxu0 0
        %830 = vmatprep.subr.bf16.mxu0 0
        %831 = vmatpush1.bf16.xpose.msra.mxu0 0
        %832 = vmatprep.subr.bf16.mxu0 0
        %833 = vmatpush1.bf16.xpose.msra.mxu0 0
        %834 = vmatprep.subr.bf16.mxu0 0
        %835 = vmatpush1.bf16.xpose.msra.mxu0 0
        %836 = vmatprep.subr.bf16.mxu0 0
        %837 = vmatpush1.bf16.xpose.msra.mxu0 0
        %838 = vmatprep.subr.bf16.mxu0 0
        %839 = vmatpush1.bf16.xpose.msra.mxu0 0
        %840 = vmatprep.subr.bf16.mxu0 0
        %841 = vmatpush1.bf16.xpose.msra.mxu0 0
        %842 = vmatprep.subr.bf16.mxu0 0
        %843 = vmatpush1.bf16.xpose.msra.mxu0 0
        %844 = vmatprep.subr.bf16.mxu0 0
        %845 = vmatpush1.bf16.xpose.msra.mxu0 0
        %846 = vmatprep.subr.bf16.mxu0 0
        %847 = vmatpush1.bf16.xpose.msra.mxu0 0
        %848 = vmatprep.subr.bf16.mxu0 0
        %849 = vmatpush1.bf16.xpose.msra.mxu0 0
        %850 = vmatprep.mubr.bf16.mxu0 0
        %851 = vmatmul.mubr.bf16.gmra.mrb[0].mxu0 %v813
        %v852 = vpop.f32.mrb[0].mxu0
        %v853 = vadd.f32 %v672, %v852
        %v854 = vpop.f32.mrb[0].mxu0
        %v855 = vpop.f32.mrb[0].mxu0
        %v856 = vpop.f32.mrb[0].mxu0
        %857 = vdwg.mxu0
        %v858 = vsel %vm673, %v715, -inf
        %859 = vmax.xlane.f32.xlu0 %v858
        %v860 = vpop.xlane.xlu0 %859
        %v861 = vsel %vm673, %v761, -inf
        %862 = vmax.xlane.f32.xlu0 %v861
        %v863 = vpop.xlane.xlu0 %862
        %v864 = vsel %vm673, %v807, -inf
        %865 = vmax.xlane.f32.xlu0 %v864
        %v866 = vpop.xlane.xlu0 %865
        %v867 = vsel %vm673, %v853, -inf
        %868 = vmax.xlane.f32.xlu0 %v867
        %v869 = vpop.xlane.xlu0 %868
        %v870 = vsub.f32 %v715, %v860
        %v871 = vsub.f32 %v761, %v863
        %v872 = vsub.f32 %v807, %v866
        %v873 = vsub.f32 %v853, %v869
        %v874 = vmul.f32 %v870, 1.442695
        %v875 = vpow.pop %v874
        %v876 = vmul.f32 %v871, 1.442695
        %v877 = vpow.pop %v876
        %v878 = vmul.f32 %v872, 1.442695
        %v879 = vpow.pop %v878
        %v880 = vmul.f32 %v873, 1.442695
        %v881 = vpow.pop %v880
        %v882 = vsel %vm673, %v875, 0.0
        %883 = vadd.xlane.f32.xlu0 %v882
        %v884 = vpop.xlane.xlu0 %883
        %v885 = vsel %vm673, %v877, 0.0
        %886 = vadd.xlane.f32.xlu0 %v885
        %v887 = vpop.xlane.xlu0 %886
        %v888 = vsel %vm673, %v879, 0.0
        %889 = vadd.xlane.f32.xlu0 %v888
        %v890 = vpop.xlane.xlu0 %889
        %v891 = vsel %vm673, %v881, 0.0
        %892 = vadd.xlane.f32.xlu0 %v891
        %v893 = vpop.xlane.xlu0 %892
        %v894 = vpack.c.bf16 %v875, %v875
        %v895 = vpack.c.bf16 %v877, %v877
        %v896 = vpack.c.bf16 %v879, %v879
        %v897 = vpack.c.bf16 %v881, %v881
        %v899 = vsel %vm673, %v894, 0
        %vm901 = vcmask 1043456
        %v903 = vsel %vm901, %v665, 0
        %905 = vmatprep.subr.bf16.mxu0 0
        %906 = vmatpush1.bf16.msra.mxu0 %v903
        %907 = vmatprep.subr.bf16.mxu0 0
        %908 = vmatpush1.bf16.msra.mxu0 0
        %909 = vmatprep.subr.bf16.mxu0 0
        %910 = vmatpush1.bf16.msra.mxu0 0
        %911 = vmatprep.subr.bf16.mxu0 0
        %912 = vmatpush1.bf16.msra.mxu0 0
        %913 = vmatprep.subr.bf16.mxu0 0
        %914 = vmatpush1.bf16.msra.mxu0 0
        %915 = vmatprep.subr.bf16.mxu0 0
        %916 = vmatpush1.bf16.msra.mxu0 0
        %917 = vmatprep.subr.bf16.mxu0 0
        %918 = vmatpush1.bf16.msra.mxu0 0
        %919 = vmatprep.subr.bf16.mxu0 0
        %920 = vmatpush1.bf16.msra.mxu0 0
        %921 = vmatprep.subr.bf16.mxu0 0
        %922 = vmatpush1.bf16.msra.mxu0 0
        %923 = vmatprep.subr.bf16.mxu0 0
        %924 = vmatpush1.bf16.msra.mxu0 0
        %925 = vmatprep.subr.bf16.mxu0 0
        %926 = vmatpush1.bf16.msra.mxu0 0
        %927 = vmatprep.subr.bf16.mxu0 0
        %928 = vmatpush1.bf16.msra.mxu0 0
        %929 = vmatprep.subr.bf16.mxu0 0
        %930 = vmatpush1.bf16.msra.mxu0 0
        %931 = vmatprep.subr.bf16.mxu0 0
        %932 = vmatpush1.bf16.msra.mxu0 0
        %933 = vmatprep.subr.bf16.mxu0 0
        %934 = vmatpush1.bf16.msra.mxu0 0
        %935 = vmatprep.subr.bf16.mxu0 0
        %936 = vmatpush1.bf16.msra.mxu0 0
        %937 = vmatprep.mubr.bf16.mxu0 0
        %938 = vmatmul.mubr.bf16.gmra.mrb[0].mxu0 %v899
        %v939 = vpop.f32.mrb[0].mxu0
        %v940 = vadd.f32 0.0, %v939
        %v941 = vpop.f32.mrb[0].mxu0
        %v942 = vpop.f32.mrb[0].mxu0
        %v943 = vpop.f32.mrb[0].mxu0
        %944 = vdwg.mxu0
        %v946 = vsel %vm673, %v895, 0
        %v949 = vsel %vm901, %v666, 0
        %951 = vmatprep.subr.bf16.mxu0 0
        %952 = vmatpush1.bf16.msra.mxu0 %v949
        %953 = vmatprep.subr.bf16.mxu0 0
        %954 = vmatpush1.bf16.msra.mxu0 0
        %955 = vmatprep.subr.bf16.mxu0 0
        %956 = vmatpush1.bf16.msra.mxu0 0
        %957 = vmatprep.subr.bf16.mxu0 0
        %958 = vmatpush1.bf16.msra.mxu0 0
        %959 = vmatprep.subr.bf16.mxu0 0
        %960 = vmatpush1.bf16.msra.mxu0 0
        %961 = vmatprep.subr.bf16.mxu0 0
        %962 = vmatpush1.bf16.msra.mxu0 0
        %963 = vmatprep.subr.bf16.mxu0 0
        %964 = vmatpush1.bf16.msra.mxu0 0
        %965 = vmatprep.subr.bf16.mxu0 0
        %966 = vmatpush1.bf16.msra.mxu0 0
        %967 = vmatprep.subr.bf16.mxu0 0
        %968 = vmatpush1.bf16.msra.mxu0 0
        %969 = vmatprep.subr.bf16.mxu0 0
        %970 = vmatpush1.bf16.msra.mxu0 0
        %971 = vmatprep.subr.bf16.mxu0 0
        %972 = vmatpush1.bf16.msra.mxu0 0
        %973 = vmatprep.subr.bf16.mxu0 0
        %974 = vmatpush1.bf16.msra.mxu0 0
        %975 = vmatprep.subr.bf16.mxu0 0
        %976 = vmatpush1.bf16.msra.mxu0 0
        %977 = vmatprep.subr.bf16.mxu0 0
        %978 = vmatpush1.bf16.msra.mxu0 0
        %979 = vmatprep.subr.bf16.mxu0 0
        %980 = vmatpush1.bf16.msra.mxu0 0
        %981 = vmatprep.subr.bf16.mxu0 0
        %982 = vmatpush1.bf16.msra.mxu0 0
        %983 = vmatprep.mubr.bf16.mxu0 0
        %984 = vmatmul.mubr.bf16.gmra.mrb[0].mxu0 %v946
        %v985 = vpop.f32.mrb[0].mxu0
        %v986 = vadd.f32 0.0, %v985
        %v987 = vpop.f32.mrb[0].mxu0
        %v988 = vpop.f32.mrb[0].mxu0
        %v989 = vpop.f32.mrb[0].mxu0
        %990 = vdwg.mxu0
        %v992 = vsel %vm673, %v896, 0
        %v995 = vsel %vm901, %v667, 0
        %997 = vmatprep.subr.bf16.mxu0 0
        %998 = vmatpush1.bf16.msra.mxu0 %v995
        %999 = vmatprep.subr.bf16.mxu0 0
        %1000 = vmatpush1.bf16.msra.mxu0 0
        %1001 = vmatprep.subr.bf16.mxu0 0
        %1002 = vmatpush1.bf16.msra.mxu0 0
        %1003 = vmatprep.subr.bf16.mxu0 0
        %1004 = vmatpush1.bf16.msra.mxu0 0
        %1005 = vmatprep.subr.bf16.mxu0 0
        %1006 = vmatpush1.bf16.msra.mxu0 0
        %1007 = vmatprep.subr.bf16.mxu0 0
        %1008 = vmatpush1.bf16.msra.mxu0 0
        %1009 = vmatprep.subr.bf16.mxu0 0
        %1010 = vmatpush1.bf16.msra.mxu0 0
        %1011 = vmatprep.subr.bf16.mxu0 0
        %1012 = vmatpush1.bf16.msra.mxu0 0
        %1013 = vmatprep.subr.bf16.mxu0 0
        %1014 = vmatpush1.bf16.msra.mxu0 0
        %1015 = vmatprep.subr.bf16.mxu0 0
        %1016 = vmatpush1.bf16.msra.mxu0 0
        %1017 = vmatprep.subr.bf16.mxu0 0
        %1018 = vmatpush1.bf16.msra.mxu0 0
        %1019 = vmatprep.subr.bf16.mxu0 0
        %1020 = vmatpush1.bf16.msra.mxu0 0
        %1021 = vmatprep.subr.bf16.mxu0 0
        %1022 = vmatpush1.bf16.msra.mxu0 0
        %1023 = vmatprep.subr.bf16.mxu0 0
        %1024 = vmatpush1.bf16.msra.mxu0 0
        %1025 = vmatprep.subr.bf16.mxu0 0
        %1026 = vmatpush1.bf16.msra.mxu0 0
        %1027 = vmatprep.subr.bf16.mxu0 0
        %1028 = vmatpush1.bf16.msra.mxu0 0
        %1029 = vmatprep.mubr.bf16.mxu0 0
        %1030 = vmatmul.mubr.bf16.gmra.mrb[0].mxu0 %v992
        %v1031 = vpop.f32.mrb[0].mxu0
        %v1032 = vadd.f32 0.0, %v1031
        %v1033 = vpop.f32.mrb[0].mxu0
        %v1034 = vpop.f32.mrb[0].mxu0
        %v1035 = vpop.f32.mrb[0].mxu0
        %1036 = vdwg.mxu0
        %v1038 = vsel %vm673, %v897, 0
        %v1041 = vsel %vm901, %v668, 0
        %1043 = vmatprep.subr.bf16.mxu0 0
        %1044 = vmatpush1.bf16.msra.mxu0 %v1041
        %1045 = vmatprep.subr.bf16.mxu0 0
        %1046 = vmatpush1.bf16.msra.mxu0 0
        %1047 = vmatprep.subr.bf16.mxu0 0
        %1048 = vmatpush1.bf16.msra.mxu0 0
        %1049 = vmatprep.subr.bf16.mxu0 0
        %1050 = vmatpush1.bf16.msra.mxu0 0
        %1051 = vmatprep.subr.bf16.mxu0 0
        %1052 = vmatpush1.bf16.msra.mxu0 0
        %1053 = vmatprep.subr.bf16.mxu0 0
        %1054 = vmatpush1.bf16.msra.mxu0 0
        %1055 = vmatprep.subr.bf16.mxu0 0
        %1056 = vmatpush1.bf16.msra.mxu0 0
        %1057 = vmatprep.subr.bf16.mxu0 0
        %1058 = vmatpush1.bf16.msra.mxu0 0
        %1059 = vmatprep.subr.bf16.mxu0 0
        %1060 = vmatpush1.bf16.msra.mxu0 0
        %1061 = vmatprep.subr.bf16.mxu0 0
        %1062 = vmatpush1.bf16.msra.mxu0 0
        %1063 = vmatprep.subr.bf16.mxu0 0
        %1064 = vmatpush1.bf16.msra.mxu0 0
        %1065 = vmatprep.subr.bf16.mxu0 0
        %1066 = vmatpush1.bf16.msra.mxu0 0
        %1067 = vmatprep.subr.bf16.mxu0 0
        %1068 = vmatpush1.bf16.msra.mxu0 0
        %1069 = vmatprep.subr.bf16.mxu0 0
        %1070 = vmatpush1.bf16.msra.mxu0 0
        %1071 = vmatprep.subr.bf16.mxu0 0
        %1072 = vmatpush1.bf16.msra.mxu0 0
        %1073 = vmatprep.subr.bf16.mxu0 0
        %1074 = vmatpush1.bf16.msra.mxu0 0
        %1075 = vmatprep.mubr.bf16.mxu0 0
        %1076 = vmatmul.mubr.bf16.gmra.mrb[0].mxu0 %v1038
        %v1077 = vpop.f32.mrb[0].mxu0
        %v1078 = vadd.f32 0.0, %v1077
        %v1079 = vpop.f32.mrb[0].mxu0
        %v1080 = vpop.f32.mrb[0].mxu0
        %v1081 = vpop.f32.mrb[0].mxu0
        %1082 = vdwg.mxu0
        %v1083 = vrcp.pop %v884
        %v1084 = vmul.f32 1.0, %v1083
        %v1085 = vrcp.pop %v887
        %v1086 = vmul.f32 1.0, %v1085
        %v1087 = vrcp.pop %v890
        %v1088 = vmul.f32 1.0, %v1087
        %v1089 = vrcp.pop %v893
        %v1090 = vmul.f32 1.0, %v1089
        %v1091 = vmul.f32 %v940, %v1084
        %v1092 = vmul.f32 %v986, %v1086
        %v1093 = vmul.f32 %v1032, %v1088
        %v1094 = vmul.f32 %v1078, %v1090
        %1096 = vrot.lane.b32.xlu0 %v1092, 8
        %v1097 = vpop.permute.xlu0 %1096
        %1100 = vrot.lane.b32.xlu0 %v1093, 16
        %v1101 = vpop.permute.xlu0 %1100
        %1104 = vrot.lane.b32.xlu0 %v1094, 24
        %v1105 = vpop.permute.xlu0 %1104
        %v1107 = vsel %vm673, %v1091, %v1097
        %vm1108 = vcmask 130048
        %v1109 = vsel %vm1108, %v1107, %v1101
        %vm1110 = vcmask 195584
        %v1111 = vsel %vm1110, %v1109, %v1105
        %v1112 = vpack.c.bf16 %v1111, %v1111
        %v1113 = vld [vmem:[%s4] sm:$0xf]
        %v1114 = vld [vmem:[%s4 + $0x4] sm:$0xf]
        %v1115 = vld [vmem:[%s4 + $0x8] sm:$0xf]
        %v1116 = vld [vmem:[%s4 + $0xc] sm:$0xf]
        %v1117 = vld [vmem:[%s5] sm:$0x1]
        %v1119 = vlaneseq
        %v1120 = vshrl.u32 %v1119, 7
        %v1121 = vsub.s32 0, %v1120
        %v1122 = vrot.slane %v1117, %v1121
        %v1128 = vunpack.c.l.b16 %v1113
        %v1129 = vunpack.c.l.b16 %v1114
        %v1130 = vunpack.c.l.b16 %v1115
        %v1131 = vunpack.c.l.b16 %v1116
        %v1132 = vpack.c.b16 %v1129, %v1128
        %v1133 = vpack.c.b16 %v1131, %v1130
        %vm1136 = vcmask 261120
        %v1138 = vsel %vm1136, %v1112, 0
        %1140 = vmatprep.subr.bf16.mxu0 0
        %1141 = vmatpush1.bf16.msra.mxu0 %v1132
        %1142 = vmatprep.subr.bf16.mxu0 0
        %1143 = vmatpush1.bf16.msra.mxu0 %v1133
        %1144 = vmatprep.subr.bf16.mxu0 0
        %1145 = vmatpush1.bf16.msra.mxu0 0
        %1146 = vmatprep.subr.bf16.mxu0 0
        %1147 = vmatpush1.bf16.msra.mxu0 0
        %1148 = vmatprep.subr.bf16.mxu0 0
        %1149 = vmatpush1.bf16.msra.mxu0 0
        %1150 = vmatprep.subr.bf16.mxu0 0
        %1151 = vmatpush1.bf16.msra.mxu0 0
        %1152 = vmatprep.subr.bf16.mxu0 0
        %1153 = vmatpush1.bf16.msra.mxu0 0
        %1154 = vmatprep.subr.bf16.mxu0 0
        %1155 = vmatpush1.bf16.msra.mxu0 0
        %1156 = vmatprep.subr.bf16.mxu0 0
        %1157 = vmatpush1.bf16.msra.mxu0 0
        %1158 = vmatprep.subr.bf16.mxu0 0
        %1159 = vmatpush1.bf16.msra.mxu0 0
        %1160 = vmatprep.subr.bf16.mxu0 0
        %1161 = vmatpush1.bf16.msra.mxu0 0
        %1162 = vmatprep.subr.bf16.mxu0 0
        %1163 = vmatpush1.bf16.msra.mxu0 0
        %1164 = vmatprep.subr.bf16.mxu0 0
        %1165 = vmatpush1.bf16.msra.mxu0 0
        %1166 = vmatprep.subr.bf16.mxu0 0
        %1167 = vmatpush1.bf16.msra.mxu0 0
        %1168 = vmatprep.subr.bf16.mxu0 0
        %1169 = vmatpush1.bf16.msra.mxu0 0
        %1170 = vmatprep.subr.bf16.mxu0 0
        %1171 = vmatpush1.bf16.msra.mxu0 0
        %1172 = vmatprep.mubr.bf16.mxu0 0
        %1173 = vmatmul.mubr.bf16.gmra.mrb[0].mxu0 %v1138
        %v1174 = vpop.f32.mrb[0].mxu0
        %v1175 = vadd.f32 %v1122, %v1174
        %v1176 = vpop.f32.mrb[0].mxu0
        %v1177 = vpop.f32.mrb[0].mxu0
        %v1178 = vpop.f32.mrb[0].mxu0
        %1179 = vdwg.mxu0
        %v1180 = vadd.f32 %v650, %v1175
        %v1181 = vsel %vm1136, %v1180, 0.0
        %1182 = vadd.xlane.f32.xlu0 %v1181
        %v1183 = vpop.xlane.xlu0 %1182
        %v1184 = vrcp.pop 32.0
        %v1185 = vmul.f32 %v1183, %v1184
        %v1186 = vsub.f32 %v1180, %v1185
        %v1187 = vmul.f32 %v1186, %v1186
        %v1188 = vsel %vm1136, %v1187, 0.0
        %1189 = vadd.xlane.f32.xlu0 %v1188
        %v1190 = vpop.xlane.xlu0 %1189
        %v1191 = vmul.f32 %v1190, 0.032258064
        %v1192 = vstv %s468
        %v1193 = vmul.f32 %v1192, %v1186
        %v1194 = vrsqrt.pop %v1191
        %v1195 = vmul.f32 %v1191, %v1194
        %vm1196 = vcmp.eq.f32.partialorder %v1191, inf
        %v1197 = vsel %vm1196, %v1191, %v1195
        %vm1198 = vcmp.eq.f32.partialorder %v1191, 0.0
        %v1199 = vand.u32 %v1191, 2147483648
        %v1200 = vsel %vm1198, %v1199, %v1197
        %v1201 = vadd.f32 %v1200, 1e-06
        %v1202 = vrcp.pop %v1201
        %v1203 = vmul.f32 %v1193, %v1202
        %v1204 = vstv %s469
        %v1205 = vadd.f32 %v1203, %v1204
        %v1206 = vpack.c.bf16 %v1205, %v1205
        %v1207 = vld [vmem:[#allocation7] sm:$0xf]
        %v1208 = vld [vmem:[#allocation7 + $0x4] sm:$0xf]
        %v1209 = vld [vmem:[#allocation7 + $0x8] sm:$0xf]
        %v1210 = vld [vmem:[#allocation7 + $0xc] sm:$0xf]
        %v1211 = vld [vmem:[%s7] sm:$0x1]
        %v1213 = vlaneseq
        %v1214 = vshrl.u32 %v1213, 7
        %v1215 = vsub.s32 0, %v1214
        %v1216 = vrot.slane %v1211, %v1215
        %v1222 = vunpack.c.l.b16 %v1207
        %v1223 = vunpack.c.l.b16 %v1208
        %v1224 = vunpack.c.l.b16 %v1209
        %v1225 = vunpack.c.l.b16 %v1210
        %v1226 = vpack.c.b16 %v1223, %v1222
        %v1227 = vpack.c.b16 %v1225, %v1224
        %v1231 = vsel %vm1136, %v1206, 0
        %1233 = vmatprep.subr.bf16.mxu0 0
        %1234 = vmatpush1.bf16.msra.mxu0 %v1226
        %1235 = vmatprep.subr.bf16.mxu0 0
        %1236 = vmatpush1.bf16.msra.mxu0 %v1227
        %1237 = vmatprep.subr.bf16.mxu0 0
        %1238 = vmatpush1.bf16.msra.mxu0 0
        %1239 = vmatprep.subr.bf16.mxu0 0
        %1240 = vmatpush1.bf16.msra.mxu0 0
        %1241 = vmatprep.subr.bf16.mxu0 0
        %1242 = vmatpush1.bf16.msra.mxu0 0
        %1243 = vmatprep.subr.bf16.mxu0 0
        %1244 = vmatpush1.bf16.msra.mxu0 0
        %1245 = vmatprep.subr.bf16.mxu0 0
        %1246 = vmatpush1.bf16.msra.mxu0 0
        %1247 = vmatprep.subr.bf16.mxu0 0
        %1248 = vmatpush1.bf16.msra.mxu0 0
        %1249 = vmatprep.subr.bf16.mxu0 0
        %1250 = vmatpush1.bf16.msra.mxu0 0
        %1251 = vmatprep.subr.bf16.mxu0 0
        %1252 = vmatpush1.bf16.msra.mxu0 0
        %1253 = vmatprep.subr.bf16.mxu0 0
        %1254 = vmatpush1.bf16.msra.mxu0 0
        %1255 = vmatprep.subr.bf16.mxu0 0
        %1256 = vmatpush1.bf16.msra.mxu0 0
        %1257 = vmatprep.subr.bf16.mxu0 0
        %1258 = vmatpush1.bf16.msra.mxu0 0
        %1259 = vmatprep.subr.bf16.mxu0 0
        %1260 = vmatpush1.bf16.msra.mxu0 0
        %1261 = vmatprep.subr.bf16.mxu0 0
        %1262 = vmatpush1.bf16.msra.mxu0 0
        %1263 = vmatprep.subr.bf16.mxu0 0
        %1264 = vmatpush1.bf16.msra.mxu0 0
        %1265 = vmatprep.mubr.bf16.mxu0 0
        %1266 = vmatmul.mubr.bf16.gmra.mrb[0].mxu0 %v1231
        %v1267 = vpop.f32.mrb[0].mxu0
        %v1268 = vadd.f32 %v1216, %v1267
        %v1269 = vpop.f32.mrb[0].mxu0
        %v1270 = vpop.f32.mrb[0].mxu0
        %v1271 = vpop.f32.mrb[0].mxu0
        %1272 = vdwg.mxu0
        %v1273 = vmax.f32 %v1268, 0.0
        %v1274 = vpack.c.bf16 %v1273, %v1273
        %v1275 = vld [vmem:[%s8] sm:$0xf]
        %v1276 = vld [vmem:[%s8 + $0x4] sm:$0xf]
        %v1277 = vld [vmem:[%s8 + $0x8] sm:$0xf]
        %v1278 = vld [vmem:[%s8 + $0xc] sm:$0xf]
        %v1279 = vld [vmem:[%s8 + $0x10] sm:$0xf]
        %v1280 = vld [vmem:[%s8 + $0x14] sm:$0xf]
        %v1281 = vld [vmem:[%s8 + $0x18] sm:$0xf]
        %v1282 = vld [vmem:[%s8 + $0x1c] sm:$0xf]
        %v1283 = vld [vmem:[%s9] sm:$0x1]
        %v1285 = vlaneseq
        %v1286 = vshrl.u32 %v1285, 7
        %v1287 = vsub.s32 0, %v1286
        %v1288 = vrot.slane %v1283, %v1287
        %v1298 = vunpack.c.l.b16 %v1275
        %v1299 = vunpack.c.l.b16 %v1276
        %v1300 = vunpack.c.l.b16 %v1277
        %v1301 = vunpack.c.l.b16 %v1278
        %v1302 = vunpack.c.l.b16 %v1279
        %v1303 = vunpack.c.l.b16 %v1280
        %v1304 = vunpack.c.l.b16 %v1281
        %v1305 = vunpack.c.l.b16 %v1282
        %v1306 = vpack.c.b16 %v1299, %v1298
        %v1307 = vpack.c.b16 %v1301, %v1300
        %v1308 = vpack.c.b16 %v1303, %v1302
        %v1309 = vpack.c.b16 %v1305, %v1304
        %vm1314 = vcmask 523264
        %v1316 = vsel %vm1314, %v1274, 0
        %1318 = vmatprep.subr.bf16.mxu0 0
        %1319 = vmatpush1.bf16.msra.mxu0 %v1306
        %1320 = vmatprep.subr.bf16.mxu0 0
        %1321 = vmatpush1.bf16.msra.mxu0 %v1307
        %1322 = vmatprep.subr.bf16.mxu0 0
        %1323 = vmatpush1.bf16.msra.mxu0 %v1308
        %1324 = vmatprep.subr.bf16.mxu0 0
        %1325 = vmatpush1.bf16.msra.mxu0 %v1309
        %1326 = vmatprep.subr.bf16.mxu0 0
        %1327 = vmatpush1.bf16.msra.mxu0 0
        %1328 = vmatprep.subr.bf16.mxu0 0
        %1329 = vmatpush1.bf16.msra.mxu0 0
        %1330 = vmatprep.subr.bf16.mxu0 0
        %1331 = vmatpush1.bf16.msra.mxu0 0
        %1332 = vmatprep.subr.bf16.mxu0 0
        %1333 = vmatpush1.bf16.msra.mxu0 0
        %1334 = vmatprep.subr.bf16.mxu0 0
        %1335 = vmatpush1.bf16.msra.mxu0 0
        %1336 = vmatprep.subr.bf16.mxu0 0
        %1337 = vmatpush1.bf16.msra.mxu0 0
        %1338 = vmatprep.subr.bf16.mxu0 0
        %1339 = vmatpush1.bf16.msra.mxu0 0
        %1340 = vmatprep.subr.bf16.mxu0 0
        %1341 = vmatpush1.bf16.msra.mxu0 0
        %1342 = vmatprep.subr.bf16.mxu0 0
        %1343 = vmatpush1.bf16.msra.mxu0 0
        %1344 = vmatprep.subr.bf16.mxu0 0
        %1345 = vmatpush1.bf16.msra.mxu0 0
        %1346 = vmatprep.subr.bf16.mxu0 0
        %1347 = vmatpush1.bf16.msra.mxu0 0
        %1348 = vmatprep.subr.bf16.mxu0 0
        %1349 = vmatpush1.bf16.msra.mxu0 0
        %1350 = vmatprep.mubr.bf16.mxu0 0
        %1351 = vmatmul.mubr.bf16.gmra.mrb[0].mxu0 %v1316
        %v1352 = vpop.f32.mrb[0].mxu0
        %v1353 = vadd.f32 %v1288, %v1352
        %v1354 = vpop.f32.mrb[0].mxu0
        %v1355 = vpop.f32.mrb[0].mxu0
        %v1356 = vpop.f32.mrb[0].mxu0
        %1357 = vdwg.mxu0
        %v1358 = vadd.f32 %v1180, %v1353
        %1359 = vst.msk [vmem:[%s460] sm:$0xff] %vm1136, %v1358
        %s1360 = sand.u32 %s295, 1
        %s1361 = scalar_lea.sflag [#allocation5], %s1360
        %s1362 = sand.u32 %s295, 1
        %s1363 = smul.addr %s1362, 8
        %s1364 = scalar_lea.vmem [#allocation10], %s1363
        // Predicated region
        $region81: #{tpu_custom_call.1} parent=63 // pred_check
          %p1365 = pneg %p305
        $region82: #{tpu_custom_call.1} parent=63 // pred_check_branch
          %1367 = sbr.rel (%p1365) target = $region84
        $region83: #{tpu_custom_call.1} parent=63 // pred_region
          %s1369 = ssub.s32 128, 128
          %1370 = vsyncadd %s1361, %s1369
          %s1371 = sadd.s32 %s35, %s34
          %s1372 = smul.addr %s1371, 128
          %s1373 = scalar_lea.hbm %s11, %s1372
          %s1375 = sshll.u32 %s1364, 4
          %s1376 = int_to_ptr.vmem [resolvable:$true] %s1375
          %1378 = dma.vmem_to_hbm [thread:$0]  %s1376, 128, %s1373, %s1361
        $region84: #{tpu_custom_call.1} parent=63 // pred_fallthru
          _
      $region64: #{tpu_custom_call.1} parent=5 // pred_fallthru
        _
      %p1379 = scmp.le.s32.totalorder 2, %s25
      // Predicated region
      $region85: #{tpu_custom_call.1} parent=5 // pred_check
        %p1380 = pneg %p1379
      $region86: #{tpu_custom_call.1} parent=5 // pred_check_branch
        %1382 = sbr.rel (%p1380) target = $region88
      $region87: #{tpu_custom_call.1} parent=5 // pred_region
        %s1383 = ssub.s32 %s25, 2
        // Predicated region
        $region89: #{tpu_custom_call.1} parent=87 // pred_check
          %p1384 = pneg %p311
        $region90: #{tpu_custom_call.1} parent=87 // pred_check_branch
          %1386 = sbr.rel (%p1384) target = $region92
        $region91: #{tpu_custom_call.1} parent=87 // pred_region
          %s1387 = sand.u32 %s296, 1
          %s1388 = scalar_lea.sflag [#allocation5], %s1387
          %s1389 = sand.u32 %s296, 1
          %s1390 = smul.addr %s1389, 8
          %s1391 = scalar_lea.vmem [#allocation10], %s1390
          %1392 = dma.done %s1388, 128
        $region92: #{tpu_custom_call.1} parent=87 // pred_fallthru
          _
      $region88: #{tpu_custom_call.1} parent=5 // pred_fallthru
        _
    $region6: #{tpu_custom_call.1} parent=1 // loop_footer
      %s29 = sadd.s32 1, %s25
    $region7: #{tpu_custom_call.1} parent=1 // loop_footer_branch
      %24 = sbr.rel target = $region3
    $region8: #{tpu_custom_call.1} parent=1 // loop_exit
      _
    %1393 = vsyncpa [#allocation4], 1
    %s1394 = scalar_lea.sflag [#allocation4], 1
    %1395 = vsyncpa %s1394, 1
    %1396 = vsyncpa [#allocation8], 1
    %1397 = vsyncpa [#allocation5], 1
    %s1398 = scalar_lea.sflag [#allocation5], 1
    %1399 = vsyncpa %s1398, 1
    %1400 = vsyncpa [#allocation6], 1
    %s1401 = scalar_lea.sflag [#allocation6], 1
    %1402 = vsyncpa %s1401, 1

// kernel: tpu_custom_call.1
$region0: #{tpu_custom_call.1}
  #allocation0 [shape = 'u32[]', space=smem, size = 0x4, offset = 0x4, fixed_abs, tag = 'smem constant byte address 0x4 - core index']
  #allocation1 [shape = 'u32[144,128]{1,0:T(1,128)}', space=vmem, size = 0x12000, scoped, tag = 'internal scratch']
  #allocation2 [shape = 'bf16[3,4,8,8]{3,2,1,0:T(8,128)(2,1)}', space=vmem, size = 0x6000, scoped, tag = 'scratch operand']
  %s0 = inlined_call_operand.vmem [shape: f32[2,8,32], index: 0, kind: input, shape index: {}]
  %s1 = inlined_call_operand.hbm [shape: s8[2,8,8], index: 1, kind: input, shape index: {}]
  %s2 = inlined_call_operand.vmem [shape: bf16[32,96], index: 2, kind: input, shape index: {}]
  %s3 = inlined_call_operand.vmem [shape: f32[1,96], index: 3, kind: input, shape index: {}]
  %s4 = inlined_call_operand.vmem [shape: bf16[32,32], index: 4, kind: input, shape index: {}]
  %s5 = inlined_call_operand.vmem [shape: f32[1,32], index: 5, kind: input, shape index: {}]
  %s6 = inlined_call_operand.hbm [shape: bf16[32,64], index: 6, kind: input, shape index: {}]
  %s7 = inlined_call_operand.vmem [shape: f32[1,64], index: 7, kind: input, shape index: {}]
  %s8 = inlined_call_operand.vmem [shape: bf16[64,32], index: 8, kind: input, shape index: {}]
  %s9 = inlined_call_operand.vmem [shape: f32[1,32], index: 9, kind: input, shape index: {}]
  %s10 = inlined_call_operand.vmem [shape: f32[2,2], index: 10, kind: input, shape index: {}]
  %s11 = inlined_call_operand.hbm [shape: f32[2,8,32], index: 11, kind: output, shape index: {}]
  %s12 = sld [smem:[#allocation0]]
  $region93: #{tpu_custom_call.1} parent=0
    _
  %s14 = ssub.s32 1, %s12
  %s15 = scalar_select 0, %s14, %s12
  $region1: #{tpu_custom_call.1} parent=0
    #allocation3 [shape = 'u8[2048]{0}', space=vmem, size = 0x800, scoped, tag = 'input window, operand 1']
    #allocation4 [shape = 's32[2]{0}', space=sflag, size = 0x8, scoped, tag = 'scoped memory for tpu_custom_call.1']
    #allocation5 [shape = 's32[2]{0}', space=sflag, size = 0x8, scoped, tag = 'scoped memory for tpu_custom_call.1']
    #allocation6 [shape = 's32[2]{0}', space=sflag, size = 0x8, scoped, tag = 'scoped memory for tpu_custom_call.1']
    #allocation7 [shape = 'u8[8192]{0}', space=vmem, size = 0x2000, scoped, tag = 'input window, operand 6, single buffered']
    #allocation8 [shape = 's32[1]{0}', space=sflag, size = 0x4, scoped, tag = 'scoped memory for tpu_custom_call.1']
    #allocation9 [shape = 'u8[1024]{0}', space=smem, size = 0x400, scoped, tag = 'input window, operand 10, single buffered']
    #allocation10 [shape = 'u8[8192]{0}', space=vmem, size = 0x2000, scoped, tag = 'output window, operand 0']
    %16 = vsyncpa [#allocation4], 0
    %s17 = scalar_lea.sflag [#allocation4], 1
    %18 = vsyncpa %s17, 0
    %19 = vsyncpa [#allocation8], 0
    %20 = vsyncpa [#allocation6], 0
    %21 = vsyncpa [#allocation5], 0
    %s22 = scalar_lea.sflag [#allocation5], 1
    %23 = vsyncpa %s22, 0
    loop: start=0, step=1, limit=4
    $region2: #{tpu_custom_call.1} parent=1 // loop_pre_header
      _
    $region3: #{tpu_custom_call.1} parent=1 // loop_header
      %s25 = sphi 0, %s29
      %p26 = scmp.ge.s32.totalorder %s25, 4
      %s32 = sphi 0, %s44
      %s33 = sphi 0, %s40
      %s34 = sphi 0, %s32
      %s35 = sphi 0, %s33
      %s36 = sphi 0, %s34
      %s37 = sphi 0, %s35
      %s47 = sphi 0, %s49
      %s50 = sphi 0, %s47
      %s51 = sphi 0, %s50
      %s67 = sphi 0, %s51
      %s75 = sphi 0, %s77
      %s78 = sphi 0, %s75
      %s79 = sphi 0, %s78
      %s95 = sphi 0, %s79
      %s99 = sphi 0, %s99
      %s101 = sphi 0, %s99
      %s102 = sphi 0, %s101
      %s116 = sphi 0, %s102
      %s120 = sphi 0, %s120
      %s122 = sphi 0, %s120
      %s123 = sphi 0, %s122
      %s137 = sphi 0, %s123
      %s141 = sphi 0, %s141
      %s143 = sphi 0, %s141
      %s144 = sphi 0, %s143
      %s158 = sphi 0, %s144
      %s162 = sphi 0, %s162
      %s164 = sphi 0, %s162
      %s165 = sphi 0, %s164
      %s179 = sphi 0, %s165
      %s183 = sphi 0, %s183
      %s185 = sphi 0, %s183
      %s186 = sphi 0, %s185
      %s200 = sphi 0, %s186
      %s204 = sphi 0, %s204
      %s206 = sphi 0, %s204
      %s207 = sphi 0, %s206
      %s221 = sphi 0, %s207
      %s225 = sphi 0, %s225
      %s227 = sphi 0, %s225
      %s228 = sphi 0, %s227
      %s242 = sphi 0, %s228
      %s246 = sphi 0, %s246
      %s248 = sphi 0, %s246
      %s249 = sphi 0, %s248
      %s263 = sphi 0, %s249
      %s267 = sphi 0, %s267
      %s269 = sphi 0, %s267
      %s270 = sphi 0, %s269
      %s284 = sphi 0, %s270
      %s292 = sphi 0, %s294
      %s295 = sphi 0, %s292
      %s296 = sphi 0, %s295
      %s312 = sphi 0, %s296
    $region4: #{tpu_custom_call.1} parent=1 // loop_header_branch
      %28 = sbr.rel (%p26) target = $region8
    $region5: #{tpu_custom_call.1} parent=1 // loop_body
      %s30 = ssub.s32 %s25, 1
      %s31 = ssub.s32 %s25, 2
      %s38 = sadd.s32 1, %s33
      %p39 = scmp.ge.s32.totalorder %s38, 1
      %s40 = scalar_select %p39, 0, %s38
      %s41 = sadd.s32 1, %s32
      %s42 = scalar_select %p39, %s41, %s32
      %p43 = scmp.ge.s32.totalorder %s42, 2
      %s44 = scalar_select %p43, 0, %s42
      %s45 = ssub.s32 %s32, %s44
      %p46 = scmp.eq.s32.totalorder %s45, 0
      %s48 = sadd.s32 %s47, 1
      %s49 = scalar_select %p46, %s47, %s48
      %p52 = pneg %p46
      %p53 = scmp.eq.s32.totalorder %s25, 1
      %p54 = por %p52, %p53
      %p55 = scmp.ne.s32.totalorder %s47, %s50
      %p56 = scmp.eq.s32.totalorder %s25, 0
      %p57 = por %p55, %p56
      %p58 = scmp.ne.s32.totalorder %s47, %s50
      %p59 = scmp.eq.s32.totalorder %s30, 1
      %p60 = por %p58, %p59
      %p61 = scmp.ne.s32.totalorder %s50, %s51
      %p62 = scmp.eq.s32.totalorder %s30, 0
      %p63 = por %p61, %p62
      %p64 = scmp.ne.s32.totalorder %s50, %s51
      %p65 = scmp.eq.s32.totalorder %s31, 1
      %p66 = por %p64, %p65
      %p68 = scmp.ne.s32.totalorder %s51, %s67
      %p69 = scmp.eq.s32.totalorder %s31, 0
      %p70 = por %p68, %p69
      %s71 = ssub.s32 %s32, %s44
      %s72 = ssub.s32 %s33, %s40
      %s73 = sor.u32 %s71, %s72
      %p74 = scmp.eq.s32.totalorder %s73, 0
      %s76 = sadd.s32 %s75, 1
      %s77 = scalar_select %p74, %s75, %s76
      %p80 = pneg %p74
      %p81 = scmp.eq.s32.totalorder %s25, 1
      %p82 = por %p80, %p81
      %p83 = scmp.ne.s32.totalorder %s75, %s78
      %p84 = scmp.eq.s32.totalorder %s25, 0
      %p85 = por %p83, %p84
      %p86 = scmp.ne.s32.totalorder %s75, %s78
      %p87 = scmp.eq.s32.totalorder %s30, 1
      %p88 = por %p86, %p87
      %p89 = scmp.ne.s32.totalorder %s78, %s79
      %p90 = scmp.eq.s32.totalorder %s30, 0
      %p91 = por %p89, %p90
      %p92 = scmp.ne.s32.totalorder %s78, %s79
      %p93 = scmp.eq.s32.totalorder %s31, 1
      %p94 = por %p92, %p93
      %p96 = scmp.ne.s32.totalorder %s79, %s95
      %p97 = scmp.eq.s32.totalorder %s31, 0
      %p98 = por %p96, %p97
      %s100 = sadd.s32 %s99, 1
      %p103 = scmp.eq.s32.totalorder %s25, 1
      %p104 = scmp.ne.s32.totalorder %s99, %s101
      %p105 = scmp.eq.s32.totalorder %s25, 0
      %p106 = por %p104, %p105
      %p107 = scmp.ne.s32.totalorder %s99, %s101
      %p108 = scmp.eq.s32.totalorder %s30, 1
      %p109 = por %p107, %p108
      %p110 = scmp.ne.s32.totalorder %s101, %s102
      %p111 = scmp.eq.s32.totalorder %s30, 0
      %p112 = por %p110, %p111
      %p113 = scmp.ne.s32.totalorder %s101, %s102
      %p114 = scmp.eq.s32.totalorder %s31, 1
      %p115 = por %p113, %p114
      %p117 = scmp.ne.s32.totalorder %s102, %s116
      %p118 = scmp.eq.s32.totalorder %s31, 0
      %p119 = por %p117, %p118
      %s121 = sadd.s32 %s120, 1
      %p124 = scmp.eq.s32.totalorder %s25, 1
      %p125 = scmp.ne.s32.totalorder %s120, %s122
      %p126 = scmp.eq.s32.totalorder %s25, 0
      %p127 = por %p125, %p126
      %p128 = scmp.ne.s32.totalorder %s120, %s122
      %p129 = scmp.eq.s32.totalorder %s30, 1
      %p130 = por %p128, %p129
      %p131 = scmp.ne.s32.totalorder %s122, %s123
      %p132 = scmp.eq.s32.totalorder %s30, 0
      %p133 = por %p131, %p132
      %p134 = scmp.ne.s32.totalorder %s122, %s123
      %p135 = scmp.eq.s32.totalorder %s31, 1
      %p136 = por %p134, %p135
      %p138 = scmp.ne.s32.totalorder %s123, %s137
      %p139 = scmp.eq.s32.totalorder %s31, 0
      %p140 = por %p138, %p139
      %s142 = sadd.s32 %s141, 1
      %p145 = scmp.eq.s32.totalorder %s25, 1
      %p146 = scmp.ne.s32.totalorder %s141, %s143
      %p147 = scmp.eq.s32.totalorder %s25, 0
      %p148 = por %p146, %p147
      %p149 = scmp.ne.s32.totalorder %s141, %s143
      %p150 = scmp.eq.s32.totalorder %s30, 1
      %p151 = por %p149, %p150
      %p152 = scmp.ne.s32.totalorder %s143, %s144
      %p153 = scmp.eq.s32.totalorder %s30, 0
      %p154 = por %p152, %p153
      %p155 = scmp.ne.s32.totalorder %s143, %s144
      %p156 = scmp.eq.s32.totalorder %s31, 1
      %p157 = por %p155, %p156
      %p159 = scmp.ne.s32.totalorder %s144, %s158
      %p160 = scmp.eq.s32.totalorder %s31, 0
      %p161 = por %p159, %p160
      %s163 = sadd.s32 %s162, 1
      %p166 = scmp.eq.s32.totalorder %s25, 1
      %p167 = scmp.ne.s32.totalorder %s162, %s164
      %p168 = scmp.eq.s32.totalorder %s25, 0
      %p169 = por %p167, %p168
      %p170 = scmp.ne.s32.totalorder %s162, %s164
      %p171 = scmp.eq.s32.totalorder %s30, 1
      %p172 = por %p170, %p171
      %p173 = scmp.ne.s32.totalorder %s164, %s165
      %p174 = scmp.eq.s32.totalorder %s30, 0
      %p175 = por %p173, %p174
      %p176 = scmp.ne.s32.totalorder %s164, %s165
      %p177 = scmp.eq.s32.totalorder %s31, 1
      %p178 = por %p176, %p177
      %p180 = scmp.ne.s32.totalorder %s165, %s179
      %p181 = scmp.eq.s32.totalorder %s31, 0
      %p182 = por %p180, %p181
      %s184 = sadd.s32 %s183, 1
      %p187 = scmp.eq.s32.totalorder %s25, 1
      %p188 = scmp.ne.s32.totalorder %s183, %s185
      %p189 = scmp.eq.s32.totalorder %s25, 0
      %p190 = por %p188, %p189
      %p191 = scmp.ne.s32.totalorder %s183, %s185
      %p192 = scmp.eq.s32.totalorder %s30, 1
      %p193 = por %p191, %p192
      %p194 = scmp.ne.s32.totalorder %s185, %s186
      %p195 = scmp.eq.s32.totalorder %s30, 0
      %p196 = por %p194, %p195
      %p197 = scmp.ne.s32.totalorder %s185, %s186
      %p198 = scmp.eq.s32.totalorder %s31, 1
      %p199 = por %p197, %p198
      %p201 = scmp.ne.s32.totalorder %s186, %s200
      %p202 = scmp.eq.s32.totalorder %s31, 0
      %p203 = por %p201, %p202
      %s205 = sadd.s32 %s204, 1
      %p208 = scmp.eq.s32.totalorder %s25, 1
      %p209 = scmp.ne.s32.totalorder %s204, %s206
      %p210 = scmp.eq.s32.totalorder %s25, 0
      %p211 = por %p209, %p210
      %p212 = scmp.ne.s32.totalorder %s204, %s206
      %p213 = scmp.eq.s32.totalorder %s30, 1
      %p214 = por %p212, %p213
      %p215 = scmp.ne.s32.totalorder %s206, %s207
      %p216 = scmp.eq.s32.totalorder %s30, 0
      %p217 = por %p215, %p216
      %p218 = scmp.ne.s32.totalorder %s206, %s207
      %p219 = scmp.eq.s32.totalorder %s31, 1
      %p220 = por %p218, %p219
      %p222 = scmp.ne.s32.totalorder %s207, %s221
      %p223 = scmp.eq.s32.totalorder %s31, 0
      %p224 = por %p222, %p223
      %s226 = sadd.s32 %s225, 1
      %p229 = scmp.eq.s32.totalorder %s25, 1
      %p230 = scmp.ne.s32.totalorder %s225, %s227
      %p231 = scmp.eq.s32.totalorder %s25, 0
      %p232 = por %p230, %p231
      %p233 = scmp.ne.s32.totalorder %s225, %s227
      %p234 = scmp.eq.s32.totalorder %s30, 1
      %p235 = por %p233, %p234
      %p236 = scmp.ne.s32.totalorder %s227, %s228
      %p237 = scmp.eq.s32.totalorder %s30, 0
      %p238 = por %p236, %p237
      %p239 = scmp.ne.s32.totalorder %s227, %s228
      %p240 = scmp.eq.s32.totalorder %s31, 1
      %p241 = por %p239, %p240
      %p243 = scmp.ne.s32.totalorder %s228, %s242
      %p244 = scmp.eq.s32.totalorder %s31, 0
      %p245 = por %p243, %p244
      %s247 = sadd.s32 %s246, 1
      %p250 = scmp.eq.s32.totalorder %s25, 1
      %p251 = scmp.ne.s32.totalorder %s246, %s248
      %p252 = scmp.eq.s32.totalorder %s25, 0
      %p253 = por %p251, %p252
      %p254 = scmp.ne.s32.totalorder %s246, %s248
      %p255 = scmp.eq.s32.totalorder %s30, 1
      %p256 = por %p254, %p255
      %p257 = scmp.ne.s32.totalorder %s248, %s249
      %p258 = scmp.eq.s32.totalorder %s30, 0
      %p259 = por %p257, %p258
      %p260 = scmp.ne.s32.totalorder %s248, %s249
      %p261 = scmp.eq.s32.totalorder %s31, 1
      %p262 = por %p260, %p261
      %p264 = scmp.ne.s32.totalorder %s249, %s263
      %p265 = scmp.eq.s32.totalorder %s31, 0
      %p266 = por %p264, %p265
      %s268 = sadd.s32 %s267, 1
      %p271 = scmp.eq.s32.totalorder %s25, 1
      %p272 = scmp.ne.s32.totalorder %s267, %s269
      %p273 = scmp.eq.s32.totalorder %s25, 0
      %p274 = por %p272, %p273
      %p275 = scmp.ne.s32.totalorder %s267, %s269
      %p276 = scmp.eq.s32.totalorder %s30, 1
      %p277 = por %p275, %p276
      %p278 = scmp.ne.s32.totalorder %s269, %s270
      %p279 = scmp.eq.s32.totalorder %s30, 0
      %p280 = por %p278, %p279
      %p281 = scmp.ne.s32.totalorder %s269, %s270
      %p282 = scmp.eq.s32.totalorder %s31, 1
      %p283 = por %p281, %p282
      %p285 = scmp.ne.s32.totalorder %s270, %s284
      %p286 = scmp.eq.s32.totalorder %s31, 0
      %p287 = por %p285, %p286
      %s288 = ssub.s32 %s32, %s44
      %s289 = ssub.s32 %s33, %s40
      %s290 = sor.u32 %s288, %s289
      %p291 = scmp.eq.s32.totalorder %s290, 0
      %s293 = sadd.s32 %s292, 1
      %s294 = scalar_select %p291, %s292, %s293
      %p297 = pneg %p291
      %p298 = scmp.eq.s32.totalorder %s25, 1
      %p299 = por %p297, %p298
      %p300 = scmp.ne.s32.totalorder %s292, %s295
      %p301 = scmp.eq.s32.totalorder %s25, 0
      %p302 = por %p300, %p301
      %p303 = scmp.ne.s32.totalorder %s292, %s295
      %p304 = scmp.eq.s32.totalorder %s30, 1
      %p305 = por %p303, %p304
      %p306 = scmp.ne.s32.totalorder %s295, %s296
      %p307 = scmp.eq.s32.totalorder %s30, 0
      %p308 = por %p306, %p307
      %p309 = scmp.ne.s32.totalorder %s295, %s296
      %p310 = scmp.eq.s32.totalorder %s31, 1
      %p311 = por %p309, %p310
      %p313 = scmp.ne.s32.totalorder %s296, %s312
      %p314 = scmp.eq.s32.totalorder %s31, 0
      %p315 = por %p313, %p314
      %p316 = scmp.le.s32.totalorder 1, %s25
      %p317 = scmp.lt.s32.totalorder %s25, 3
      %p318 = pnand %p316, %p317
      %p319 = pneg %p318
      // Predicated region
      $region9: #{tpu_custom_call.1} parent=5 // pred_check
        _
      $region10: #{tpu_custom_call.1} parent=5 // pred_check_branch
        %321 = sbr.rel (%p318) target = $region12
      $region11: #{tpu_custom_call.1} parent=5 // pred_region
        %s322 = ssub.s32 %s25, 1
        // Predicated region
        $region13: #{tpu_custom_call.1} parent=11 // pred_check
          %p323 = pneg %p112
        $region14: #{tpu_custom_call.1} parent=11 // pred_check_branch
          %325 = sbr.rel (%p323) target = $region16
        $region15: #{tpu_custom_call.1} parent=11 // pred_region
          _
        $region16: #{tpu_custom_call.1} parent=11 // pred_fallthru
          _
        // Predicated region
        $region17: #{tpu_custom_call.1} parent=11 // pred_check
          %p326 = pneg %p133
        $region18: #{tpu_custom_call.1} parent=11 // pred_check_branch
          %328 = sbr.rel (%p326) target = $region20
        $region19: #{tpu_custom_call.1} parent=11 // pred_region
          _
        $region20: #{tpu_custom_call.1} parent=11 // pred_fallthru
          _
        // Predicated region
        $region21: #{tpu_custom_call.1} parent=11 // pred_check
          %p329 = pneg %p154
        $region22: #{tpu_custom_call.1} parent=11 // pred_check_branch
          %331 = sbr.rel (%p329) target = $region24
        $region23: #{tpu_custom_call.1} parent=11 // pred_region
          _
        $region24: #{tpu_custom_call.1} parent=11 // pred_fallthru
          _
        // Predicated region
        $region25: #{tpu_custom_call.1} parent=11 // pred_check
          %p332 = pneg %p175
        $region26: #{tpu_custom_call.1} parent=11 // pred_check_branch
          %334 = sbr.rel (%p332) target = $region28
        $region27: #{tpu_custom_call.1} parent=11 // pred_region
          _
        $region28: #{tpu_custom_call.1} parent=11 // pred_fallthru
          _
        // Predicated region
        $region29: #{tpu_custom_call.1} parent=11 // pred_check
          %p335 = pneg %p196
        $region30: #{tpu_custom_call.1} parent=11 // pred_check_branch
          %337 = sbr.rel (%p335) target = $region32
        $region31: #{tpu_custom_call.1} parent=11 // pred_region
          %s339 = ssub.s32 256, 256
          %340 = vsyncadd [#allocation8], %s339
          %s341 = sshll.u32 [#allocation7], 4
          %s342 = int_to_ptr.vmem [resolvable:$true] %s341
          %347 = dma.hbm_to_vmem [thread:$0]  %s6, 256, %s342, [#allocation8], 64, 64, 4
        $region32: #{tpu_custom_call.1} parent=11 // pred_fallthru
          _
        // Predicated region
        $region33: #{tpu_custom_call.1} parent=11 // pred_check
          %p348 = pneg %p217
        $region34: #{tpu_custom_call.1} parent=11 // pred_check_branch
          %350 = sbr.rel (%p348) target = $region36
        $region35: #{tpu_custom_call.1} parent=11 // pred_region
          _
        $region36: #{tpu_custom_call.1} parent=11 // pred_fallthru
          _
        // Predicated region
        $region37: #{tpu_custom_call.1} parent=11 // pred_check
          %p351 = pneg %p238
        $region38: #{tpu_custom_call.1} parent=11 // pred_check_branch
          %353 = sbr.rel (%p351) target = $region40
        $region39: #{tpu_custom_call.1} parent=11 // pred_region
          _
        $region40: #{tpu_custom_call.1} parent=11 // pred_fallthru
          _
        // Predicated region
        $region41: #{tpu_custom_call.1} parent=11 // pred_check
          %p354 = pneg %p259
        $region42: #{tpu_custom_call.1} parent=11 // pred_check_branch
          %356 = sbr.rel (%p354) target = $region44
        $region43: #{tpu_custom_call.1} parent=11 // pred_region
          _
        $region44: #{tpu_custom_call.1} parent=11 // pred_fallthru
          _
        // Predicated region
        $region45: #{tpu_custom_call.1} parent=11 // pred_check
          %p357 = pneg %p280
        $region46: #{tpu_custom_call.1} parent=11 // pred_check_branch
          %359 = sbr.rel (%p357) target = $region48
        $region47: #{tpu_custom_call.1} parent=11 // pred_region
          %s361 = ssub.s32 32, 32
          %362 = vsyncadd [#allocation6], %s361
          %s364 = sshll.u32 %s10, 4
          %s365 = int_to_ptr.vmem [resolvable:$true] %s364
          %367 = dma.vmem_to_smem %s365, 32, [#allocation9], [#allocation6]
        $region48: #{tpu_custom_call.1} parent=11 // pred_fallthru
          _
      $region12: #{tpu_custom_call.1} parent=5 // pred_fallthru
        _
      %p368 = scmp.lt.s32.totalorder %s25, 2
      // Predicated region
      $region49: #{tpu_custom_call.1} parent=5 // pred_check
        %p369 = pneg %p368
      $region50: #{tpu_custom_call.1} parent=5 // pred_check_branch
        %371 = sbr.rel (%p369) target = $region52
      $region51: #{tpu_custom_call.1} parent=5 // pred_region
        // Predicated region
        $region53: #{tpu_custom_call.1} parent=51 // pred_check
          %p372 = pneg %p57
        $region54: #{tpu_custom_call.1} parent=51 // pred_check_branch
          %374 = sbr.rel (%p372) target = $region56
        $region55: #{tpu_custom_call.1} parent=51 // pred_region
          %p375 = scmp.lt.s32.totalorder %s32, 1
          %s376 = scalar_select %p375, %s32, 1
          %s377 = smul.addr %s376, 8
          %s378 = scalar_lea.vmem %s0, %s377
        $region56: #{tpu_custom_call.1} parent=51 // pred_fallthru
          _
        // Predicated region
        $region57: #{tpu_custom_call.1} parent=51 // pred_check
          %p379 = pneg %p85
        $region58: #{tpu_custom_call.1} parent=51 // pred_check_branch
          %381 = sbr.rel (%p379) target = $region60
        $region59: #{tpu_custom_call.1} parent=51 // pred_region
          %s382 = sand.u32 %s75, 1
          %s383 = scalar_lea.sflag [#allocation4], %s382
          %s384 = sand.u32 %s75, 1
          %s385 = smul.addr %s384, 2
          %s386 = scalar_lea.vmem [#allocation3], %s385
          %s388 = ssub.s32 32, 32
          %389 = vsyncadd %s383, %s388
          %s390 = sadd.s32 %s33, %s32
          %s391 = smul.addr %s390, 32
          %s392 = scalar_lea.hbm %s1, %s391
          %s394 = sshll.u32 %s386, 4
          %s395 = int_to_ptr.vmem [resolvable:$true] %s394
          %397 = dma.hbm_to_vmem [thread:$0]  %s392, 32, %s395, %s383
        $region60: #{tpu_custom_call.1} parent=51 // pred_fallthru
          _
      $region52: #{tpu_custom_call.1} parent=5 // pred_fallthru
        _
      %p398 = scmp.le.s32.totalorder 1, %s25
      %p399 = scmp.lt.s32.totalorder %s25, 3
      %p400 = pnand %p398, %p399
      %p401 = pneg %p400
      // Predicated region
      $region61: #{tpu_custom_call.1} parent=5 // pred_check
        _
      $region62: #{tpu_custom_call.1} parent=5 // pred_check_branch
        %403 = sbr.rel (%p400) target = $region64
      $region63: #{tpu_custom_call.1} parent=5 // pred_region
        %s404 = ssub.s32 %s25, 1
        %s405 = sand.u32 %s78, 1
        %s406 = scalar_lea.sflag [#allocation4], %s405
        %s407 = sand.u32 %s78, 1
        %s408 = smul.addr %s407, 2
        %s409 = scalar_lea.vmem [#allocation3], %s408
        // Predicated region
        $region65: #{tpu_custom_call.1} parent=63 // pred_check
          %p410 = pneg %p91
        $region66: #{tpu_custom_call.1} parent=63 // pred_check_branch
          %412 = sbr.rel (%p410) target = $region68
        $region67: #{tpu_custom_call.1} parent=63 // pred_region
          %413 = dma.done %s406, 32
        $region68: #{tpu_custom_call.1} parent=63 // pred_fallthru
          _
        // Predicated region
        $region69: #{tpu_custom_call.1} parent=63 // pred_check
          %p414 = pneg %p196
        $region70: #{tpu_custom_call.1} parent=63 // pred_check_branch
          %416 = sbr.rel (%p414) target = $region72
        $region71: #{tpu_custom_call.1} parent=63 // pred_region
          %417 = dma.done [#allocation8], 256
        $region72: #{tpu_custom_call.1} parent=63 // pred_fallthru
          _
        // Predicated region
        $region73: #{tpu_custom_call.1} parent=63 // pred_check
          %p418 = pneg %p280
        $region74: #{tpu_custom_call.1} parent=63 // pred_check_branch
          %420 = sbr.rel (%p418) target = $region76
        $region75: #{tpu_custom_call.1} parent=63 // pred_region
          %421 = dma.done [#allocation6], 32
        $region76: #{tpu_custom_call.1} parent=63 // pred_fallthru
          _
        %422 = sfence
        %p423 = scmp.lt.s32.totalorder %s34, 1
        %s424 = scalar_select %p423, %s34, 1
        %s425 = smul.addr %s424, 8
        %s426 = scalar_lea.vmem %s0, %s425
        %p427 = pneg %p63
        %p428 = pneg %p60
        %s429 = sand.u32 %s78, 1
        %s430 = scalar_lea.sflag [#allocation4], %s429
        %s431 = sand.u32 %s78, 1
        %s432 = smul.addr %s431, 2
        %s433 = scalar_lea.vmem [#allocation3], %s432
        %p434 = pneg %p91
        %p435 = pneg %p88
        %p436 = pneg %p112
        %p437 = pneg %p109
        %p438 = pneg %p133
        %p439 = pneg %p130
        %p440 = pneg %p154
        %p441 = pneg %p151
        %p442 = pneg %p175
        %p443 = pneg %p172
        %p444 = pneg %p196
        %p445 = pneg %p193
        %p446 = pneg %p217
        %p447 = pneg %p214
        %p448 = pneg %p238
        %p449 = pneg %p235
        %p450 = pneg %p259
        %p451 = pneg %p256
        %p452 = pneg %p280
        %p453 = pneg %p277
        %p454 = pneg %p308
        %p455 = pneg %p305
        %s456 = sand.u32 %s295, 1
        %s457 = scalar_lea.sflag [#allocation5], %s456
        %s458 = sand.u32 %s295, 1
        %s459 = smul.addr %s458, 8
        %s460 = scalar_lea.vmem [#allocation10], %s459
        %p461 = scmp.lt.s32.totalorder %s34, 1
        %s462 = scalar_select %p461, %s34, 1
        %s463 = smul.addr %s462, 8
        %s464 = scalar_lea.vmem %s0, %s463
        %s466 = sld [smem:[#allocation9]]
        %s467 = sld [smem:[#allocation9 + $0x1]]
        %s468 = sld [smem:[#allocation9 + $0x80]]
        %s469 = sld [smem:[#allocation9 + $0x81]]
        %p470 = scmp.eq.s32.totalorder %s35, 0
        // Predicated region
        $region77: #{tpu_custom_call.1} parent=63 // pred_check
          %p471 = pneg %p470
        $region78: #{tpu_custom_call.1} parent=63 // pred_check_branch
          %473 = sbr.rel (%p471) target = $region80
        $region79: #{tpu_custom_call.1} parent=63 // pred_region
          %v474 = vld [vmem:[%s464] sm:$0xff]
          %vm475 = vcmask 261120
          %v476 = vsel %vm475, %v474, 0.0
          %477 = vadd.xlane.f32.xlu0 %v476
          %v478 = vpop.xlane.xlu0 %477
          %v479 = vrcp.pop 32.0
          %v480 = vmul.f32 %v478, %v479
          %v481 = vsub.f32 %v474, %v480
          %v482 = vmul.f32 %v481, %v481
          %v483 = vsel %vm475, %v482, 0.0
          %484 = vadd.xlane.f32.xlu0 %v483
          %v485 = vpop.xlane.xlu0 %484
          %v486 = vmul.f32 %v485, 0.032258064
          %v487 = vstv %s466
          %v488 = vmul.f32 %v487, %v481
          %v489 = vrsqrt.pop %v486
          %v490 = vmul.f32 %v486, %v489
          %vm491 = vcmp.eq.f32.partialorder %v486, inf
          %v492 = vsel %vm491, %v486, %v490
          %vm493 = vcmp.eq.f32.partialorder %v486, 0.0
          %v494 = vand.u32 %v486, 2147483648
          %v495 = vsel %vm493, %v494, %v492
          %v496 = vadd.f32 %v495, 1e-06
          %v497 = vrcp.pop %v496
          %v498 = vmul.f32 %v488, %v497
          %v499 = vstv %s467
          %v500 = vadd.f32 %v498, %v499
          %v501 = vpack.c.bf16 %v500, %v500
          %v502 = vld [vmem:[%s2] sm:$0xf]
          %v503 = vld [vmem:[%s2 + $0x4] sm:$0xf]
          %v504 = vld [vmem:[%s2 + $0x8] sm:$0xf]
          %v505 = vld [vmem:[%s2 + $0xc] sm:$0xf]
          %v506 = vld [vmem:[%s3] sm:$0x1]
          %v508 = vlaneseq
          %v509 = vshrl.u32 %v508, 7
          %v510 = vsub.s32 0, %v509
          %v511 = vrot.slane %v506, %v510
          %v517 = vunpack.c.l.b16 %v502
          %v518 = vunpack.c.l.b16 %v503
          %v519 = vunpack.c.l.b16 %v504
          %v520 = vunpack.c.l.b16 %v505
          %v521 = vpack.c.b16 %v518, %v517
          %v522 = vpack.c.b16 %v520, %v519
          %v526 = vsel %vm475, %v501, 0
          %528 = vmatprep.subr.bf16.mxu0 0
          %529 = vmatpush1.bf16.msra.mxu0 %v521
          %530 = vmatprep.subr.bf16.mxu0 0
          %531 = vmatpush1.bf16.msra.mxu0 %v522
          %532 = vmatprep.subr.bf16.mxu0 0
          %533 = vmatpush1.bf16.msra.mxu0 0
          %534 = vmatprep.subr.bf16.mxu0 0
          %535 = vmatpush1.bf16.msra.mxu0 0
          %536 = vmatprep.subr.bf16.mxu0 0
          %537 = vmatpush1.bf16.msra.mxu0 0
          %538 = vmatprep.subr.bf16.mxu0 0
          %539 = vmatpush1.bf16.msra.mxu0 0
          %540 = vmatprep.subr.bf16.mxu0 0
          %541 = vmatpush1.bf16.msra.mxu0 0
          %542 = vmatprep.subr.bf16.mxu0 0
          %543 = vmatpush1.bf16.msra.mxu0 0
          %544 = vmatprep.subr.bf16.mxu0 0
          %545 = vmatpush1.bf16.msra.mxu0 0
          %546 = vmatprep.subr.bf16.mxu0 0
          %547 = vmatpush1.bf16.msra.mxu0 0
          %548 = vmatprep.subr.bf16.mxu0 0
          %549 = vmatpush1.bf16.msra.mxu0 0
          %550 = vmatprep.subr.bf16.mxu0 0
          %551 = vmatpush1.bf16.msra.mxu0 0
          %552 = vmatprep.subr.bf16.mxu0 0
          %553 = vmatpush1.bf16.msra.mxu0 0
          %554 = vmatprep.subr.bf16.mxu0 0
          %555 = vmatpush1.bf16.msra.mxu0 0
          %556 = vmatprep.subr.bf16.mxu0 0
          %557 = vmatpush1.bf16.msra.mxu0 0
          %558 = vmatprep.subr.bf16.mxu0 0
          %559 = vmatpush1.bf16.msra.mxu0 0
          %560 = vmatprep.mubr.bf16.mxu0 0
          %561 = vmatmul.mubr.bf16.gmra.mrb[0].mxu0 %v526
          %v562 = vpop.f32.mrb[0].mxu0
          %v563 = vadd.f32 %v511, %v562
          %v564 = vpop.f32.mrb[0].mxu0
          %v565 = vpop.f32.mrb[0].mxu0
          %v566 = vpop.f32.mrb[0].mxu0
          %567 = vdwg.mxu0
          %v568 = vmul.f32 %v563, 0.35355338
          %570 = vrot.lane.b32.xlu0 %v568, 120
          %v571 = vpop.permute.xlu0 %570
          %573 = vrot.lane.b32.xlu0 %v568, 112
          %v574 = vpop.permute.xlu0 %573
          %576 = vrot.lane.b32.xlu0 %v568, 104
          %v577 = vpop.permute.xlu0 %576
          %v579 = vpack.c.bf16 %v568, %v568
          %v580 = vpack.c.bf16 %v571, %v571
          %v581 = vpack.c.bf16 %v574, %v574
          %v582 = vpack.c.bf16 %v577, %v577
          %vm583 = vcmask 60416
          %584 = vst.msk [vmem:[#allocation2] sm:$0xf] %vm583, %v579
          %585 = vst.msk [vmem:[#allocation2 + $0x4] sm:$0xf] %vm583, %v580
          %586 = vst.msk [vmem:[#allocation2 + $0x8] sm:$0xf] %vm583, %v581
          %587 = vst.msk [vmem:[#allocation2 + $0xc] sm:$0xf] %vm583, %v582
          %589 = vrot.lane.b32.xlu0 %v563, 120
          %v590 = vpop.permute.xlu0 %589
          %592 = vrot.lane.b32.xlu0 %v563, 112
          %v593 = vpop.permute.xlu0 %592
          %595 = vrot.lane.b32.xlu0 %v563, 104
          %v596 = vpop.permute.xlu0 %595
          %v598 = vpack.c.bf16 %v563, %v563
          %v599 = vpack.c.bf16 %v590, %v590
          %v600 = vpack.c.bf16 %v593, %v593
          %v601 = vpack.c.bf16 %v596, %v596
          %v606 = vunpack.c.l.b16 %v598
          %v607 = vunpack.c.l.b16 %v599
          %v608 = vunpack.c.l.b16 %v600
          %v609 = vunpack.c.l.b16 %v601
          %v610 = vpack.c.b16 %v606, %v606
          %v611 = vpack.c.b16 %v607, %v607
          %v612 = vpack.c.b16 %v608, %v608
          %v613 = vpack.c.b16 %v609, %v609
          %614 = vrot.lane.b32.xlu0 %v610, 96
          %v615 = vpop.permute.xlu0 %614
          %616 = vrot.lane.b32.xlu0 %v611, 96
          %v617 = vpop.permute.xlu0 %616
          %618 = vrot.lane.b32.xlu0 %v612, 96
          %v619 = vpop.permute.xlu0 %618
          %620 = vrot.lane.b32.xlu0 %v613, 96
          %v621 = vpop.permute.xlu0 %620
          %s626 = scalar_lea.vmem [#allocation2], 16
          %627 = vst.msk [vmem:[%s626] sm:$0xf] %vm583, %v615
          %628 = vst.msk [vmem:[%s626 + $0x4] sm:$0xf] %vm583, %v617
          %629 = vst.msk [vmem:[%s626 + $0x8] sm:$0xf] %vm583, %v619
          %630 = vst.msk [vmem:[%s626 + $0xc] sm:$0xf] %vm583, %v621
          %631 = vrot.lane.b32.xlu0 %v610, 64
          %v632 = vpop.permute.xlu0 %631
          %633 = vrot.lane.b32.xlu0 %v611, 64
          %v634 = vpop.permute.xlu0 %633
          %635 = vrot.lane.b32.xlu0 %v612, 64
          %v636 = vpop.permute.xlu0 %635
          %637 = vrot.lane.b32.xlu0 %v613, 64
          %v638 = vpop.permute.xlu0 %637
          %s643 = scalar_lea.vmem [#allocation2], 32
          %644 = vst.msk [vmem:[%s643] sm:$0xf] %vm583, %v632
          %645 = vst.msk [vmem:[%s643 + $0x4] sm:$0xf] %vm583, %v634
          %646 = vst.msk [vmem:[%s643 + $0x8] sm:$0xf] %vm583, %v636
          %647 = vst.msk [vmem:[%s643 + $0xc] sm:$0xf] %vm583, %v638
        $region80: #{tpu_custom_call.1} parent=63 // pred_fallthru
          _
        %s648 = smul.u32 %s35, 8
        %s649 = scalar_lea.vmem %s464, %s648
        %v650 = vld [vmem:[%s649] sm:$0xff]
        %s651 = sshra.s32 %s648, 3
        %s652 = sand.u32 %s648, 7
        %s653 = smul.addr %s651, 4
        %s654 = scalar_lea.vmem [#allocation2], %s653
        %v655 = vld [vmem:[%s654] sm:$0xf]
        %v656 = vld [vmem:[%s654 + $0x4] sm:$0xf]
        %v657 = vld [vmem:[%s654 + $0x8] sm:$0xf]
        %v658 = vld [vmem:[%s654 + $0xc] sm:$0xf]
        %s659 = scalar_lea.vmem [#allocation2], 16
        %v660 = vld [vmem:[%s659] sm:$0xf]
        %v661 = vld [vmem:[%s659 + $0x4] sm:$0xf]
        %v662 = vld [vmem:[%s659 + $0x8] sm:$0xf]
        %v663 = vld [vmem:[%s659 + $0xc] sm:$0xf]
        %s664 = scalar_lea.vmem [#allocation2], 32
        %v665 = vld [vmem:[%s664] sm:$0xf]
        %v666 = vld [vmem:[%s664 + $0x4] sm:$0xf]
        %v667 = vld [vmem:[%s664 + $0x8] sm:$0xf]
        %v668 = vld [vmem:[%s664 + $0xc] sm:$0xf]
        %v669 = vld [vmem:[%s409] sm:$0x3]
        %v670 = vunpack.c.0.s8 %v669
        %vm671 = vcmp.eq.s32.totalorder %v670, 0
        %v672 = vsel %vm671, -1e+09, 0.0
        %vm673 = vcmask 64512
        %v675 = vsel %vm673, %v655, 0
        %v678 = vsel %vm673, %v660, 0
        %680 = vmatprep.subr.bf16.mxu0 0
        %681 = vmatpush1.bf16.xpose.msra.mxu0 %v678
        %682 = vmatprep.subr.bf16.mxu0 0
        %683 = vmatpush1.bf16.xpose.msra.mxu0 0
        %684 = vmatprep.subr.bf16.mxu0 0
        %685 = vmatpush1.bf16.xpose.msra.mxu0 0
        %686 = vmatprep.subr.bf16.mxu0 0
        %687 = vmatpush1.bf16.xpose.msra.mxu0 0
        %688 = vmatprep.subr.bf16.mxu0 0
        %689 = vmatpush1.bf16.xpose.msra.mxu0 0
        %690 = vmatprep.subr.bf16.mxu0 0
        %691 = vmatpush1.bf16.xpose.msra.mxu0 0
        %692 = vmatprep.subr.bf16.mxu0 0
        %693 = vmatpush1.bf16.xpose.msra.mxu0 0
        %694 = vmatprep.subr.bf16.mxu0 0
        %695 = vmatpush1.bf16.xpose.msra.mxu0 0
        %696 = vmatprep.subr.bf16.mxu0 0
        %697 = vmatpush1.bf16.xpose.msra.mxu0 0
        %698 = vmatprep.subr.bf16.mxu0 0
        %699 = vmatpush1.bf16.xpose.msra.mxu0 0
        %700 = vmatprep.subr.bf16.mxu0 0
        %701 = vmatpush1.bf16.xpose.msra.mxu0 0
        %702 = vmatprep.subr.bf16.mxu0 0
        %703 = vmatpush1.bf16.xpose.msra.mxu0 0
        %704 = vmatprep.subr.bf16.mxu0 0
        %705 = vmatpush1.bf16.xpose.msra.mxu0 0
        %706 = vmatprep.subr.bf16.mxu0 0
        %707 = vmatpush1.bf16.xpose.msra.mxu0 0
        %708 = vmatprep.subr.bf16.mxu0 0
        %709 = vmatpush1.bf16.xpose.msra.mxu0 0
        %710 = vmatprep.subr.bf16.mxu0 0
        %711 = vmatpush1.bf16.xpose.msra.mxu0 0
        %712 = vmatprep.mubr.bf16.mxu0 0
        %713 = vmatmul.mubr.bf16.gmra.mrb[0].mxu0 %v675
        %v714 = vpop.f32.mrb[0].mxu0
        %v715 = vadd.f32 %v672, %v714
        %v716 = vpop.f32.mrb[0].mxu0
        %v717 = vpop.f32.mrb[0].mxu0
        %v718 = vpop.f32.mrb[0].mxu0
        %719 = vdwg.mxu0
        %v721 = vsel %vm673, %v656, 0
        %v724 = vsel %vm673, %v661, 0
        %726 = vmatprep.subr.bf16.mxu0 0
        %727 = vmatpush1.bf16.xpose.msra.mxu0 %v724
        %728 = vmatprep.subr.bf16.mxu0 0
        %729 = vmatpush1.bf16.xpose.msra.mxu0 0
        %730 = vmatprep.subr.bf16.mxu0 0
        %731 = vmatpush1.bf16.xpose.msra.mxu0 0
        %732 = vmatprep.subr.bf16.mxu0 0
        %733 = vmatpush1.bf16.xpose.msra.mxu0 0
        %734 = vmatprep.subr.bf16.mxu0 0
        %735 = vmatpush1.bf16.xpose.msra.mxu0 0
        %736 = vmatprep.subr.bf16.mxu0 0
        %737 = vmatpush1.bf16.xpose.msra.mxu0 0
        %738 = vmatprep.subr.bf16.mxu0 0
        %739 = vmatpush1.bf16.xpose.msra.mxu0 0
        %740 = vmatprep.subr.bf16.mxu0 0
        %741 = vmatpush1.bf16.xpose.msra.mxu0 0
        %742 = vmatprep.subr.bf16.mxu0 0
        %743 = vmatpush1.bf16.xpose.msra.mxu0 0
        %744 = vmatprep.subr.bf16.mxu0 0
        %745 = vmatpush1.bf16.xpose.msra.mxu0 0
        %746 = vmatprep.subr.bf16.mxu0 0
        %747 = vmatpush1.bf16.xpose.msra.mxu0 0
        %748 = vmatprep.subr.bf16.mxu0 0
        %749 = vmatpush1.bf16.xpose.msra.mxu0 0
        %750 = vmatprep.subr.bf16.mxu0 0
        %751 = vmatpush1.bf16.xpose.msra.mxu0 0
        %752 = vmatprep.subr.bf16.mxu0 0
        %753 = vmatpush1.bf16.xpose.msra.mxu0 0
        %754 = vmatprep.subr.bf16.mxu0 0
        %755 = vmatpush1.bf16.xpose.msra.mxu0 0
        %756 = vmatprep.subr.bf16.mxu0 0
        %757 = vmatpush1.bf16.xpose.msra.mxu0 0
        %758 = vmatprep.mubr.bf16.mxu0 0
        %759 = vmatmul.mubr.bf16.gmra.mrb[0].mxu0 %v721
        %v760 = vpop.f32.mrb[0].mxu0
        %v761 = vadd.f32 %v672, %v760
        %v762 = vpop.f32.mrb[0].mxu0
        %v763 = vpop.f32.mrb[0].mxu0
        %v764 = vpop.f32.mrb[0].mxu0
        %765 = vdwg.mxu0
        %v767 = vsel %vm673, %v657, 0
        %v770 = vsel %vm673, %v662, 0
        %772 = vmatprep.subr.bf16.mxu0 0
        %773 = vmatpush1.bf16.xpose.msra.mxu0 %v770
        %774 = vmatprep.subr.bf16.mxu0 0
        %775 = vmatpush1.bf16.xpose.msra.mxu0 0
        %776 = vmatprep.subr.bf16.mxu0 0
        %777 = vmatpush1.bf16.xpose.msra.mxu0 0
        %778 = vmatprep.subr.bf16.mxu0 0
        %779 = vmatpush1.bf16.xpose.msra.mxu0 0
        %780 = vmatprep.subr.bf16.mxu0 0
        %781 = vmatpush1.bf16.xpose.msra.mxu0 0
        %782 = vmatprep.subr.bf16.mxu0 0
        %783 = vmatpush1.bf16.xpose.msra.mxu0 0
        %784 = vmatprep.subr.bf16.mxu0 0
        %785 = vmatpush1.bf16.xpose.msra.mxu0 0
        %786 = vmatprep.subr.bf16.mxu0 0
        %787 = vmatpush1.bf16.xpose.msra.mxu0 0
        %788 = vmatprep.subr.bf16.mxu0 0
        %789 = vmatpush1.bf16.xpose.msra.mxu0 0
        %790 = vmatprep.subr.bf16.mxu0 0
        %791 = vmatpush1.bf16.xpose.msra.mxu0 0
        %792 = vmatprep.subr.bf16.mxu0 0
        %793 = vmatpush1.bf16.xpose.msra.mxu0 0
        %794 = vmatprep.subr.bf16.mxu0 0
        %795 = vmatpush1.bf16.xpose.msra.mxu0 0
        %796 = vmatprep.subr.bf16.mxu0 0
        %797 = vmatpush1.bf16.xpose.msra.mxu0 0
        %798 = vmatprep.subr.bf16.mxu0 0
        %799 = vmatpush1.bf16.xpose.msra.mxu0 0
        %800 = vmatprep.subr.bf16.mxu0 0
        %801 = vmatpush1.bf16.xpose.msra.mxu0 0
        %802 = vmatprep.subr.bf16.mxu0 0
        %803 = vmatpush1.bf16.xpose.msra.mxu0 0
        %804 = vmatprep.mubr.bf16.mxu0 0
        %805 = vmatmul.mubr.bf16.gmra.mrb[0].mxu0 %v767
        %v806 = vpop.f32.mrb[0].mxu0
        %v807 = vadd.f32 %v672, %v806
        %v808 = vpop.f32.mrb[0].mxu0
        %v809 = vpop.f32.mrb[0].mxu0
        %v810 = vpop.f32.mrb[0].mxu0
        %811 = vdwg.mxu0
        %v813 = vsel %vm673, %v658, 0
        %v816 = vsel %vm673, %v663, 0
        %818 = vmatprep.subr.bf16.mxu0 0
        %819 = vmatpush1.bf16.xpose.msra.mxu0 %v816
        %820 = vmatprep.subr.bf16.mxu0 0
        %821 = vmatpush1.bf16.xpose.msra.mxu0 0
        %822 = vmatprep.subr.bf16.mxu0 0
        %823 = vmatpush1.bf16.xpose.msra.mxu0 0
        %824 = vmatprep.subr.bf16.mxu0 0
        %825 = vmatpush1.bf16.xpose.msra.mxu0 0
        %826 = vmatprep.subr.bf16.mxu0 0
        %827 = vmatpush1.bf16.xpose.msra.mxu0 0
        %828 = vmatprep.subr.bf16.mxu0 0
        %829 = vmatpush1.bf16.xpose.msra.mxu0 0
        %830 = vmatprep.subr.bf16.mxu0 0
        %831 = vmatpush1.bf16.xpose.msra.mxu0 0
        %832 = vmatprep.subr.bf16.mxu0 0
        %833 = vmatpush1.bf16.xpose.msra.mxu0 0
        %834 = vmatprep.subr.bf16.mxu0 0
        %835 = vmatpush1.bf16.xpose.msra.mxu0 0
        %836 = vmatprep.subr.bf16.mxu0 0
        %837 = vmatpush1.bf16.xpose.msra.mxu0 0
        %838 = vmatprep.subr.bf16.mxu0 0
        %839 = vmatpush1.bf16.xpose.msra.mxu0 0
        %840 = vmatprep.subr.bf16.mxu0 0
        %841 = vmatpush1.bf16.xpose.msra.mxu0 0
        %842 = vmatprep.subr.bf16.mxu0 0
        %843 = vmatpush1.bf16.xpose.msra.mxu0 0
        %844 = vmatprep.subr.bf16.mxu0 0
        %845 = vmatpush1.bf16.xpose.msra.mxu0 0
        %846 = vmatprep.subr.bf16.mxu0 0
        %847 = vmatpush1.bf16.xpose.msra.mxu0 0
        %848 = vmatprep.subr.bf16.mxu0 0
        %849 = vmatpush1.bf16.xpose.msra.mxu0 0
        %850 = vmatprep.mubr.bf16.mxu0 0
        %851 = vmatmul.mubr.bf16.gmra.mrb[0].mxu0 %v813
        %v852 = vpop.f32.mrb[0].mxu0
        %v853 = vadd.f32 %v672, %v852
        %v854 = vpop.f32.mrb[0].mxu0
        %v855 = vpop.f32.mrb[0].mxu0
        %v856 = vpop.f32.mrb[0].mxu0
        %857 = vdwg.mxu0
        %v858 = vsel %vm673, %v715, -inf
        %859 = vmax.xlane.f32.xlu0 %v858
        %v860 = vpop.xlane.xlu0 %859
        %v861 = vsel %vm673, %v761, -inf
        %862 = vmax.xlane.f32.xlu0 %v861
        %v863 = vpop.xlane.xlu0 %862
        %v864 = vsel %vm673, %v807, -inf
        %865 = vmax.xlane.f32.xlu0 %v864
        %v866 = vpop.xlane.xlu0 %865
        %v867 = vsel %vm673, %v853, -inf
        %868 = vmax.xlane.f32.xlu0 %v867
        %v869 = vpop.xlane.xlu0 %868
        %v870 = vsub.f32 %v715, %v860
        %v871 = vsub.f32 %v761, %v863
        %v872 = vsub.f32 %v807, %v866
        %v873 = vsub.f32 %v853, %v869
        %v874 = vmul.f32 %v870, 1.442695
        %v875 = vpow.pop %v874
        %v876 = vmul.f32 %v871, 1.442695
        %v877 = vpow.pop %v876
        %v878 = vmul.f32 %v872, 1.442695
        %v879 = vpow.pop %v878
        %v880 = vmul.f32 %v873, 1.442695
        %v881 = vpow.pop %v880
        %v882 = vsel %vm673, %v875, 0.0
        %883 = vadd.xlane.f32.xlu0 %v882
        %v884 = vpop.xlane.xlu0 %883
        %v885 = vsel %vm673, %v877, 0.0
        %886 = vadd.xlane.f32.xlu0 %v885
        %v887 = vpop.xlane.xlu0 %886
        %v888 = vsel %vm673, %v879, 0.0
        %889 = vadd.xlane.f32.xlu0 %v888
        %v890 = vpop.xlane.xlu0 %889
        %v891 = vsel %vm673, %v881, 0.0
        %892 = vadd.xlane.f32.xlu0 %v891
        %v893 = vpop.xlane.xlu0 %892
        %v894 = vpack.c.bf16 %v875, %v875
        %v895 = vpack.c.bf16 %v877, %v877
        %v896 = vpack.c.bf16 %v879, %v879
        %v897 = vpack.c.bf16 %v881, %v881
        %v899 = vsel %vm673, %v894, 0
        %vm901 = vcmask 1043456
        %v903 = vsel %vm901, %v665, 0
        %905 = vmatprep.subr.bf16.mxu0 0
        %906 = vmatpush1.bf16.msra.mxu0 %v903
        %907 = vmatprep.subr.bf16.mxu0 0
        %908 = vmatpush1.bf16.msra.mxu0 0
        %909 = vmatprep.subr.bf16.mxu0 0
        %910 = vmatpush1.bf16.msra.mxu0 0
        %911 = vmatprep.subr.bf16.mxu0 0
        %912 = vmatpush1.bf16.msra.mxu0 0
        %913 = vmatprep.subr.bf16.mxu0 0
        %914 = vmatpush1.bf16.msra.mxu0 0
        %915 = vmatprep.subr.bf16.mxu0 0
        %916 = vmatpush1.bf16.msra.mxu0 0
        %917 = vmatprep.subr.bf16.mxu0 0
        %918 = vmatpush1.bf16.msra.mxu0 0
        %919 = vmatprep.subr.bf16.mxu0 0
        %920 = vmatpush1.bf16.msra.mxu0 0
        %921 = vmatprep.subr.bf16.mxu0 0
        %922 = vmatpush1.bf16.msra.mxu0 0
        %923 = vmatprep.subr.bf16.mxu0 0
        %924 = vmatpush1.bf16.msra.mxu0 0
        %925 = vmatprep.subr.bf16.mxu0 0
        %926 = vmatpush1.bf16.msra.mxu0 0
        %927 = vmatprep.subr.bf16.mxu0 0
        %928 = vmatpush1.bf16.msra.mxu0 0
        %929 = vmatprep.subr.bf16.mxu0 0
        %930 = vmatpush1.bf16.msra.mxu0 0
        %931 = vmatprep.subr.bf16.mxu0 0
        %932 = vmatpush1.bf16.msra.mxu0 0
        %933 = vmatprep.subr.bf16.mxu0 0
        %934 = vmatpush1.bf16.msra.mxu0 0
        %935 = vmatprep.subr.bf16.mxu0 0
        %936 = vmatpush1.bf16.msra.mxu0 0
        %937 = vmatprep.mubr.bf16.mxu0 0
        %938 = vmatmul.mubr.bf16.gmra.mrb[0].mxu0 %v899
        %v939 = vpop.f32.mrb[0].mxu0
        %v940 = vadd.f32 0.0, %v939
        %v941 = vpop.f32.mrb[0].mxu0
        %v942 = vpop.f32.mrb[0].mxu0
        %v943 = vpop.f32.mrb[0].mxu0
        %944 = vdwg.mxu0
        %v946 = vsel %vm673, %v895, 0
        %v949 = vsel %vm901, %v666, 0
        %951 = vmatprep.subr.bf16.mxu0 0
        %952 = vmatpush1.bf16.msra.mxu0 %v949
        %953 = vmatprep.subr.bf16.mxu0 0
        %954 = vmatpush1.bf16.msra.mxu0 0
        %955 = vmatprep.subr.bf16.mxu0 0
        %956 = vmatpush1.bf16.msra.mxu0 0
        %957 = vmatprep.subr.bf16.mxu0 0
        %958 = vmatpush1.bf16.msra.mxu0 0
        %959 = vmatprep.subr.bf16.mxu0 0
        %960 = vmatpush1.bf16.msra.mxu0 0
        %961 = vmatprep.subr.bf16.mxu0 0
        %962 = vmatpush1.bf16.msra.mxu0 0
        %963 = vmatprep.subr.bf16.mxu0 0
        %964 = vmatpush1.bf16.msra.mxu0 0
        %965 = vmatprep.subr.bf16.mxu0 0
        %966 = vmatpush1.bf16.msra.mxu0 0
        %967 = vmatprep.subr.bf16.mxu0 0
        %968 = vmatpush1.bf16.msra.mxu0 0
        %969 = vmatprep.subr.bf16.mxu0 0
        %970 = vmatpush1.bf16.msra.mxu0 0
        %971 = vmatprep.subr.bf16.mxu0 0
        %972 = vmatpush1.bf16.msra.mxu0 0
        %973 = vmatprep.subr.bf16.mxu0 0
        %974 = vmatpush1.bf16.msra.mxu0 0
        %975 = vmatprep.subr.bf16.mxu0 0
        %976 = vmatpush1.bf16.msra.mxu0 0
        %977 = vmatprep.subr.bf16.mxu0 0
        %978 = vmatpush1.bf16.msra.mxu0 0
        %979 = vmatprep.subr.bf16.mxu0 0
        %980 = vmatpush1.bf16.msra.mxu0 0
        %981 = vmatprep.subr.bf16.mxu0 0
        %982 = vmatpush1.bf16.msra.mxu0 0
        %983 = vmatprep.mubr.bf16.mxu0 0
        %984 = vmatmul.mubr.bf16.gmra.mrb[0].mxu0 %v946
        %v985 = vpop.f32.mrb[0].mxu0
        %v986 = vadd.f32 0.0, %v985
        %v987 = vpop.f32.mrb[0].mxu0
        %v988 = vpop.f32.mrb[0].mxu0
        %v989 = vpop.f32.mrb[0].mxu0
        %990 = vdwg.mxu0
        %v992 = vsel %vm673, %v896, 0
        %v995 = vsel %vm901, %v667, 0
        %997 = vmatprep.subr.bf16.mxu0 0
        %998 = vmatpush1.bf16.msra.mxu0 %v995
        %999 = vmatprep.subr.bf16.mxu0 0
        %1000 = vmatpush1.bf16.msra.mxu0 0
        %1001 = vmatprep.subr.bf16.mxu0 0
        %1002 = vmatpush1.bf16.msra.mxu0 0
        %1003 = vmatprep.subr.bf16.mxu0 0
        %1004 = vmatpush1.bf16.msra.mxu0 0
        %1005 = vmatprep.subr.bf16.mxu0 0
        %1006 = vmatpush1.bf16.msra.mxu0 0
        %1007 = vmatprep.subr.bf16.mxu0 0
        %1008 = vmatpush1.bf16.msra.mxu0 0
        %1009 = vmatprep.subr.bf16.mxu0 0
        %1010 = vmatpush1.bf16.msra.mxu0 0
        %1011 = vmatprep.subr.bf16.mxu0 0
        %1012 = vmatpush1.bf16.msra.mxu0 0
        %1013 = vmatprep.subr.bf16.mxu0 0
        %1014 = vmatpush1.bf16.msra.mxu0 0
        %1015 = vmatprep.subr.bf16.mxu0 0
        %1016 = vmatpush1.bf16.msra.mxu0 0
        %1017 = vmatprep.subr.bf16.mxu0 0
        %1018 = vmatpush1.bf16.msra.mxu0 0
        %1019 = vmatprep.subr.bf16.mxu0 0
        %1020 = vmatpush1.bf16.msra.mxu0 0
        %1021 = vmatprep.subr.bf16.mxu0 0
        %1022 = vmatpush1.bf16.msra.mxu0 0
        %1023 = vmatprep.subr.bf16.mxu0 0
        %1024 = vmatpush1.bf16.msra.mxu0 0
        %1025 = vmatprep.subr.bf16.mxu0 0
        %1026 = vmatpush1.bf16.msra.mxu0 0
        %1027 = vmatprep.subr.bf16.mxu0 0
        %1028 = vmatpush1.bf16.msra.mxu0 0
        %1029 = vmatprep.mubr.bf16.mxu0 0
        %1030 = vmatmul.mubr.bf16.gmra.mrb[0].mxu0 %v992
        %v1031 = vpop.f32.mrb[0].mxu0
        %v1032 = vadd.f32 0.0, %v1031
        %v1033 = vpop.f32.mrb[0].mxu0
        %v1034 = vpop.f32.mrb[0].mxu0
        %v1035 = vpop.f32.mrb[0].mxu0
        %1036 = vdwg.mxu0
        %v1038 = vsel %vm673, %v897, 0
        %v1041 = vsel %vm901, %v668, 0
        %1043 = vmatprep.subr.bf16.mxu0 0
        %1044 = vmatpush1.bf16.msra.mxu0 %v1041
        %1045 = vmatprep.subr.bf16.mxu0 0
        %1046 = vmatpush1.bf16.msra.mxu0 0
        %1047 = vmatprep.subr.bf16.mxu0 0
        %1048 = vmatpush1.bf16.msra.mxu0 0
        %1049 = vmatprep.subr.bf16.mxu0 0
        %1050 = vmatpush1.bf16.msra.mxu0 0
        %1051 = vmatprep.subr.bf16.mxu0 0
        %1052 = vmatpush1.bf16.msra.mxu0 0
        %1053 = vmatprep.subr.bf16.mxu0 0
        %1054 = vmatpush1.bf16.msra.mxu0 0
        %1055 = vmatprep.subr.bf16.mxu0 0
        %1056 = vmatpush1.bf16.msra.mxu0 0
        %1057 = vmatprep.subr.bf16.mxu0 0
        %1058 = vmatpush1.bf16.msra.mxu0 0
        %1059 = vmatprep.subr.bf16.mxu0 0
        %1060 = vmatpush1.bf16.msra.mxu0 0
        %1061 = vmatprep.subr.bf16.mxu0 0
        %1062 = vmatpush1.bf16.msra.mxu0 0
        %1063 = vmatprep.subr.bf16.mxu0 0
        %1064 = vmatpush1.bf16.msra.mxu0 0
        %1065 = vmatprep.subr.bf16.mxu0 0
        %1066 = vmatpush1.bf16.msra.mxu0 0
        %1067 = vmatprep.subr.bf16.mxu0 0
        %1068 = vmatpush1.bf16.msra.mxu0 0
        %1069 = vmatprep.subr.bf16.mxu0 0
        %1070 = vmatpush1.bf16.msra.mxu0 0
        %1071 = vmatprep.subr.bf16.mxu0 0
        %1072 = vmatpush1.bf16.msra.mxu0 0
        %1073 = vmatprep.subr.bf16.mxu0 0
        %1074 = vmatpush1.bf16.msra.mxu0 0
        %1075 = vmatprep.mubr.bf16.mxu0 0
        %1076 = vmatmul.mubr.bf16.gmra.mrb[0].mxu0 %v1038
        %v1077 = vpop.f32.mrb[0].mxu0
        %v1078 = vadd.f32 0.0, %v1077
        %v1079 = vpop.f32.mrb[0].mxu0
        %v1080 = vpop.f32.mrb[0].mxu0
        %v1081 = vpop.f32.mrb[0].mxu0
        %1082 = vdwg.mxu0
        %v1083 = vrcp.pop %v884
        %v1084 = vmul.f32 1.0, %v1083
        %v1085 = vrcp.pop %v887
        %v1086 = vmul.f32 1.0, %v1085
        %v1087 = vrcp.pop %v890
        %v1088 = vmul.f32 1.0, %v1087
        %v1089 = vrcp.pop %v893
        %v1090 = vmul.f32 1.0, %v1089
        %v1091 = vmul.f32 %v940, %v1084
        %v1092 = vmul.f32 %v986, %v1086
        %v1093 = vmul.f32 %v1032, %v1088
        %v1094 = vmul.f32 %v1078, %v1090
        %1096 = vrot.lane.b32.xlu0 %v1092, 8
        %v1097 = vpop.permute.xlu0 %1096
        %1100 = vrot.lane.b32.xlu0 %v1093, 16
        %v1101 = vpop.permute.xlu0 %1100
        %1104 = vrot.lane.b32.xlu0 %v1094, 24
        %v1105 = vpop.permute.xlu0 %1104
        %v1107 = vsel %vm673, %v1091, %v1097
        %vm1108 = vcmask 130048
        %v1109 = vsel %vm1108, %v1107, %v1101
        %vm1110 = vcmask 195584
        %v1111 = vsel %vm1110, %v1109, %v1105
        %v1112 = vpack.c.bf16 %v1111, %v1111
        %v1113 = vld [vmem:[%s4] sm:$0xf]
        %v1114 = vld [vmem:[%s4 + $0x4] sm:$0xf]
        %v1115 = vld [vmem:[%s4 + $0x8] sm:$0xf]
        %v1116 = vld [vmem:[%s4 + $0xc] sm:$0xf]
        %v1117 = vld [vmem:[%s5] sm:$0x1]
        %v1119 = vlaneseq
        %v1120 = vshrl.u32 %v1119, 7
        %v1121 = vsub.s32 0, %v1120
        %v1122 = vrot.slane %v1117, %v1121
        %v1128 = vunpack.c.l.b16 %v1113
        %v1129 = vunpack.c.l.b16 %v1114
        %v1130 = vunpack.c.l.b16 %v1115
        %v1131 = vunpack.c.l.b16 %v1116
        %v1132 = vpack.c.b16 %v1129, %v1128
        %v1133 = vpack.c.b16 %v1131, %v1130
        %vm1136 = vcmask 261120
        %v1138 = vsel %vm1136, %v1112, 0
        %1140 = vmatprep.subr.bf16.mxu0 0
        %1141 = vmatpush1.bf16.msra.mxu0 %v1132
        %1142 = vmatprep.subr.bf16.mxu0 0
        %1143 = vmatpush1.bf16.msra.mxu0 %v1133
        %1144 = vmatprep.subr.bf16.mxu0 0
        %1145 = vmatpush1.bf16.msra.mxu0 0
        %1146 = vmatprep.subr.bf16.mxu0 0
        %1147 = vmatpush1.bf16.msra.mxu0 0
        %1148 = vmatprep.subr.bf16.mxu0 0
        %1149 = vmatpush1.bf16.msra.mxu0 0
        %1150 = vmatprep.subr.bf16.mxu0 0
        %1151 = vmatpush1.bf16.msra.mxu0 0
        %1152 = vmatprep.subr.bf16.mxu0 0
        %1153 = vmatpush1.bf16.msra.mxu0 0
        %1154 = vmatprep.subr.bf16.mxu0 0
        %1155 = vmatpush1.bf16.msra.mxu0 0
        %1156 = vmatprep.subr.bf16.mxu0 0
        %1157 = vmatpush1.bf16.msra.mxu0 0
        %1158 = vmatprep.subr.bf16.mxu0 0
        %1159 = vmatpush1.bf16.msra.mxu0 0
        %1160 = vmatprep.subr.bf16.mxu0 0
        %1161 = vmatpush1.bf16.msra.mxu0 0
        %1162 = vmatprep.subr.bf16.mxu0 0
        %1163 = vmatpush1.bf16.msra.mxu0 0
        %1164 = vmatprep.subr.bf16.mxu0 0
        %1165 = vmatpush1.bf16.msra.mxu0 0
        %1166 = vmatprep.subr.bf16.mxu0 0
        %1167 = vmatpush1.bf16.msra.mxu0 0
        %1168 = vmatprep.subr.bf16.mxu0 0
        %1169 = vmatpush1.bf16.msra.mxu0 0
        %1170 = vmatprep.subr.bf16.mxu0 0
        %1171 = vmatpush1.bf16.msra.mxu0 0
        %1172 = vmatprep.mubr.bf16.mxu0 0
        %1173 = vmatmul.mubr.bf16.gmra.mrb[0].mxu0 %v1138
        %v1174 = vpop.f32.mrb[0].mxu0
        %v1175 = vadd.f32 %v1122, %v1174
        %v1176 = vpop.f32.mrb[0].mxu0
        %v1177 = vpop.f32.mrb[0].mxu0
        %v1178 = vpop.f32.mrb[0].mxu0
        %1179 = vdwg.mxu0
        %v1180 = vadd.f32 %v650, %v1175
        %v1181 = vsel %vm1136, %v1180, 0.0
        %1182 = vadd.xlane.f32.xlu0 %v1181
        %v1183 = vpop.xlane.xlu0 %1182
        %v1184 = vrcp.pop 32.0
        %v1185 = vmul.f32 %v1183, %v1184
        %v1186 = vsub.f32 %v1180, %v1185
        %v1187 = vmul.f32 %v1186, %v1186
        %v1188 = vsel %vm1136, %v1187, 0.0
        %1189 = vadd.xlane.f32.xlu0 %v1188
        %v1190 = vpop.xlane.xlu0 %1189
        %v1191 = vmul.f32 %v1190, 0.032258064
        %v1192 = vstv %s468
        %v1193 = vmul.f32 %v1192, %v1186
        %v1194 = vrsqrt.pop %v1191
        %v1195 = vmul.f32 %v1191, %v1194
        %vm1196 = vcmp.eq.f32.partialorder %v1191, inf
        %v1197 = vsel %vm1196, %v1191, %v1195
        %vm1198 = vcmp.eq.f32.partialorder %v1191, 0.0
        %v1199 = vand.u32 %v1191, 2147483648
        %v1200 = vsel %vm1198, %v1199, %v1197
        %v1201 = vadd.f32 %v1200, 1e-06
        %v1202 = vrcp.pop %v1201
        %v1203 = vmul.f32 %v1193, %v1202
        %v1204 = vstv %s469
        %v1205 = vadd.f32 %v1203, %v1204
        %v1206 = vpack.c.bf16 %v1205, %v1205
        %v1207 = vld [vmem:[#allocation7] sm:$0xf]
        %v1208 = vld [vmem:[#allocation7 + $0x4] sm:$0xf]
        %v1209 = vld [vmem:[#allocation7 + $0x8] sm:$0xf]
        %v1210 = vld [vmem:[#allocation7 + $0xc] sm:$0xf]
        %v1211 = vld [vmem:[%s7] sm:$0x1]
        %v1213 = vlaneseq
        %v1214 = vshrl.u32 %v1213, 7
        %v1215 = vsub.s32 0, %v1214
        %v1216 = vrot.slane %v1211, %v1215
        %v1222 = vunpack.c.l.b16 %v1207
        %v1223 = vunpack.c.l.b16 %v1208
        %v1224 = vunpack.c.l.b16 %v1209
        %v1225 = vunpack.c.l.b16 %v1210
        %v1226 = vpack.c.b16 %v1223, %v1222
        %v1227 = vpack.c.b16 %v1225, %v1224
        %v1231 = vsel %vm1136, %v1206, 0
        %1233 = vmatprep.subr.bf16.mxu0 0
        %1234 = vmatpush1.bf16.msra.mxu0 %v1226
        %1235 = vmatprep.subr.bf16.mxu0 0
        %1236 = vmatpush1.bf16.msra.mxu0 %v1227
        %1237 = vmatprep.subr.bf16.mxu0 0
        %1238 = vmatpush1.bf16.msra.mxu0 0
        %1239 = vmatprep.subr.bf16.mxu0 0
        %1240 = vmatpush1.bf16.msra.mxu0 0
        %1241 = vmatprep.subr.bf16.mxu0 0
        %1242 = vmatpush1.bf16.msra.mxu0 0
        %1243 = vmatprep.subr.bf16.mxu0 0
        %1244 = vmatpush1.bf16.msra.mxu0 0
        %1245 = vmatprep.subr.bf16.mxu0 0
        %1246 = vmatpush1.bf16.msra.mxu0 0
        %1247 = vmatprep.subr.bf16.mxu0 0
        %1248 = vmatpush1.bf16.msra.mxu0 0
        %1249 = vmatprep.subr.bf16.mxu0 0
        %1250 = vmatpush1.bf16.msra.mxu0 0
        %1251 = vmatprep.subr.bf16.mxu0 0
        %1252 = vmatpush1.bf16.msra.mxu0 0
        %1253 = vmatprep.subr.bf16.mxu0 0
        %1254 = vmatpush1.bf16.msra.mxu0 0
        %1255 = vmatprep.subr.bf16.mxu0 0
        %1256 = vmatpush1.bf16.msra.mxu0 0
        %1257 = vmatprep.subr.bf16.mxu0 0
        %1258 = vmatpush1.bf16.msra.mxu0 0
        %1259 = vmatprep.subr.bf16.mxu0 0
        %1260 = vmatpush1.bf16.msra.mxu0 0
        %1261 = vmatprep.subr.bf16.mxu0 0
        %1262 = vmatpush1.bf16.msra.mxu0 0
        %1263 = vmatprep.subr.bf16.mxu0 0
        %1264 = vmatpush1.bf16.msra.mxu0 0
        %1265 = vmatprep.mubr.bf16.mxu0 0
        %1266 = vmatmul.mubr.bf16.gmra.mrb[0].mxu0 %v1231
        %v1267 = vpop.f32.mrb[0].mxu0
        %v1268 = vadd.f32 %v1216, %v1267
        %v1269 = vpop.f32.mrb[0].mxu0
        %v1270 = vpop.f32.mrb[0].mxu0
        %v1271 = vpop.f32.mrb[0].mxu0
        %1272 = vdwg.mxu0
        %v1273 = vmax.f32 %v1268, 0.0
        %v1274 = vpack.c.bf16 %v1273, %v1273
        %v1275 = vld [vmem:[%s8] sm:$0xf]
        %v1276 = vld [vmem:[%s8 + $0x4] sm:$0xf]
        %v1277 = vld [vmem:[%s8 + $0x8] sm:$0xf]
        %v1278 = vld [vmem:[%s8 + $0xc] sm:$0xf]
        %v1279 = vld [vmem:[%s8 + $0x10] sm:$0xf]
        %v1280 = vld [vmem:[%s8 + $0x14] sm:$0xf]
        %v1281 = vld [vmem:[%s8 + $0x18] sm:$0xf]
        %v1282 = vld [vmem:[%s8 + $0x1c] sm:$0xf]
        %v1283 = vld [vmem:[%s9] sm:$0x1]
        %v1285 = vlaneseq
        %v1286 = vshrl.u32 %v1285, 7
        %v1287 = vsub.s32 0, %v1286
        %v1288 = vrot.slane %v1283, %v1287
        %v1298 = vunpack.c.l.b16 %v1275
        %v1299 = vunpack.c.l.b16 %v1276
        %v1300 = vunpack.c.l.b16 %v1277
        %v1301 = vunpack.c.l.b16 %v1278
        %v1302 = vunpack.c.l.b16 %v1279
        %v1303 = vunpack.c.l.b16 %v1280
        %v1304 = vunpack.c.l.b16 %v1281
        %v1305 = vunpack.c.l.b16 %v1282
        %v1306 = vpack.c.b16 %v1299, %v1298
        %v1307 = vpack.c.b16 %v1301, %v1300
        %v1308 = vpack.c.b16 %v1303, %v1302
        %v1309 = vpack.c.b16 %v1305, %v1304
        %vm1314 = vcmask 523264
        %v1316 = vsel %vm1314, %v1274, 0
        %1318 = vmatprep.subr.bf16.mxu0 0
        %1319 = vmatpush1.bf16.msra.mxu0 %v1306
        %1320 = vmatprep.subr.bf16.mxu0 0
        %1321 = vmatpush1.bf16.msra.mxu0 %v1307
        %1322 = vmatprep.subr.bf16.mxu0 0
        %1323 = vmatpush1.bf16.msra.mxu0 %v1308
        %1324 = vmatprep.subr.bf16.mxu0 0
        %1325 = vmatpush1.bf16.msra.mxu0 %v1309
        %1326 = vmatprep.subr.bf16.mxu0 0
        %1327 = vmatpush1.bf16.msra.mxu0 0
        %1328 = vmatprep.subr.bf16.mxu0 0
        %1329 = vmatpush1.bf16.msra.mxu0 0
        %1330 = vmatprep.subr.bf16.mxu0 0
        %1331 = vmatpush1.bf16.msra.mxu0 0
        %1332 = vmatprep.subr.bf16.mxu0 0
        %1333 = vmatpush1.bf16.msra.mxu0 0
        %1334 = vmatprep.subr.bf16.mxu0 0
        %1335 = vmatpush1.bf16.msra.mxu0 0
        %1336 = vmatprep.subr.bf16.mxu0 0
        %1337 = vmatpush1.bf16.msra.mxu0 0
        %1338 = vmatprep.subr.bf16.mxu0 0
        %1339 = vmatpush1.bf16.msra.mxu0 0
        %1340 = vmatprep.subr.bf16.mxu0 0
        %1341 = vmatpush1.bf16.msra.mxu0 0
        %1342 = vmatprep.subr.bf16.mxu0 0
        %1343 = vmatpush1.bf16.msra.mxu0 0
        %1344 = vmatprep.subr.bf16.mxu0 0
        %1345 = vmatpush1.bf16.msra.mxu0 0
        %1346 = vmatprep.subr.bf16.mxu0 0
        %1347 = vmatpush1.bf16.msra.mxu0 0
        %1348 = vmatprep.subr.bf16.mxu0 0
        %1349 = vmatpush1.bf16.msra.mxu0 0
        %1350 = vmatprep.mubr.bf16.mxu0 0
        %1351 = vmatmul.mubr.bf16.gmra.mrb[0].mxu0 %v1316
        %v1352 = vpop.f32.mrb[0].mxu0
        %v1353 = vadd.f32 %v1288, %v1352
        %v1354 = vpop.f32.mrb[0].mxu0
        %v1355 = vpop.f32.mrb[0].mxu0
        %v1356 = vpop.f32.mrb[0].mxu0
        %1357 = vdwg.mxu0
        %v1358 = vadd.f32 %v1180, %v1353
        %1359 = vst.msk [vmem:[%s460] sm:$0xff] %vm1136, %v1358
        %s1360 = sand.u32 %s295, 1
        %s1361 = scalar_lea.sflag [#allocation5], %s1360
        %s1362 = sand.u32 %s295, 1
        %s1363 = smul.addr %s1362, 8
        %s1364 = scalar_lea.vmem [#allocation10], %s1363
        // Predicated region
        $region81: #{tpu_custom_call.1} parent=63 // pred_check
          %p1365 = pneg %p305
        $region82: #{tpu_custom_call.1} parent=63 // pred_check_branch
          %1367 = sbr.rel (%p1365) target = $region84
        $region83: #{tpu_custom_call.1} parent=63 // pred_region
          %s1369 = ssub.s32 128, 128
          %1370 = vsyncadd %s1361, %s1369
          %s1371 = sadd.s32 %s35, %s34
          %s1372 = smul.addr %s1371, 128
          %s1373 = scalar_lea.hbm %s11, %s1372
          %s1375 = sshll.u32 %s1364, 4
          %s1376 = int_to_ptr.vmem [resolvable:$true] %s1375
          %1378 = dma.vmem_to_hbm [thread:$0]  %s1376, 128, %s1373, %s1361
        $region84: #{tpu_custom_call.1} parent=63 // pred_fallthru
          _
      $region64: #{tpu_custom_call.1} parent=5 // pred_fallthru
        _
      %p1379 = scmp.le.s32.totalorder 2, %s25
      // Predicated region
      $region85: #{tpu_custom_call.1} parent=5 // pred_check
        %p1380 = pneg %p1379
      $region86: #{tpu_custom_call.1} parent=5 // pred_check_branch
        %1382 = sbr.rel (%p1380) target = $region88
      $region87: #{tpu_custom_call.1} parent=5 // pred_region
        %s1383 = ssub.s32 %s25, 2
        // Predicated region
        $region89: #{tpu_custom_call.1} parent=87 // pred_check
          %p1384 = pneg %p311
        $region90: #{tpu_custom_call.1} parent=87 // pred_check_branch
          %1386 = sbr.rel (%p1384) target = $region92
        $region91: #{tpu_custom_call.1} parent=87 // pred_region
          %s1387 = sand.u32 %s296, 1
          %s1388 = scalar_lea.sflag [#allocation5], %s1387
          %s1389 = sand.u32 %s296, 1
          %s1390 = smul.addr %s1389, 8
          %s1391 = scalar_lea.vmem [#allocation10], %s1390
          %1392 = dma.done %s1388, 128
        $region92: #{tpu_custom_call.1} parent=87 // pred_fallthru
          _
      $region88: #{tpu_custom_call.1} parent=5 // pred_fallthru
        _
    $region6: #{tpu_custom_call.1} parent=1 // loop_footer
      %s29 = sadd.s32 1, %s25
    $region7: #{tpu_custom_call.1} parent=1 // loop_footer_branch
      %24 = sbr.rel target = $region3
    $region8: #{tpu_custom_call.1} parent=1 // loop_exit
      _
    %1393 = vsyncpa [#allocation4], 1
    %s1394 = scalar_lea.sflag [#allocation4], 1
    %1395 = vsyncpa %s1394, 1
    %1396 = vsyncpa [#allocation8], 1
    %1397 = vsyncpa [#allocation5], 1
    %s1398 = scalar_lea.sflag [#allocation5], 1
    %1399 = vsyncpa %s1398, 1
    %1400 = vsyncpa [#allocation6], 1
    %s1401 = scalar_lea.sflag [#allocation6], 1
    %1402 = vsyncpa %s1401, 1

</llo_original>
